<compile_context>
chip_gen: v7x
topology: tpu7x:2x2x1
jax: 0.10.0
libtpu: 0.0.40
codegen_flags: <defaults>
</compile_context>

<pallas_src>
import jax
import jax.numpy as jnp
from jax import lax
from jax.experimental import pallas as pl
from jax.experimental.pallas import tpu as pltpu

# Model hyper-parameters (match the PyTorch module).
D_MODEL = 10          # input_dim
NUM_HEADS = 2
HEAD_DIM = D_MODEL // NUM_HEADS
FFN_DIM = 64          # hidden_dim (dim_feedforward)
NUM_LAYERS = 3
LN_EPS = 1e-5


def _layer_norm(x, w, b):
    mu = jnp.mean(x, axis=-1, keepdims=True)
    xc = x - mu
    var = jnp.mean(xc * xc, axis=-1, keepdims=True)
    return xc * lax.rsqrt(var + LN_EPS) * w + b


def _softmax_last(x):
    m = jnp.max(x, axis=-1, keepdims=True)
    e = jnp.exp(x - m)
    return e / jnp.sum(e, axis=-1, keepdims=True)


def transformer_kernel(x_ref, w_attn_ref, b_vec_ref, w_ff1_ref, b_ff1_ref,
                       w_ff2_ref, fc_ref, o_ref):
    xN = x_ref[...]                                   # (N, S, E) batch-major f32
    N, S, E = xN.shape
    R = N * S
    x2 = xN.reshape(R, E)                             # (N*S, E), rows contiguous per batch

    # Per-head lane masks, built once and reused by every layer (hoisted broadcast).
    lane = lax.broadcasted_iota(jnp.int32, (1, 1, E), 2)
    head_masks = [
        jnp.logical_and(lane >= h * HEAD_DIM, lane < (h + 1) * HEAD_DIM)
        for h in range(NUM_HEADS)
    ]

    # TODO(synk): dropout (p=0.1) is identity (eval mode); src_key_padding_mask
    #             (the `mask` argument) is not implemented — None path only.
    for l in range(NUM_LAYERS):
        wq = w_attn_ref[4 * l + 0]                    # (E, E), pre-scaled by 1/sqrt(hd)
        wk = w_attn_ref[4 * l + 1]
        wv = w_attn_ref[4 * l + 2]
        wo = w_attn_ref[4 * l + 3]
        bq = b_vec_ref[9 * l + 0]                     # (E,), pre-scaled
        bk = b_vec_ref[9 * l + 1]
        bv = b_vec_ref[9 * l + 2]
        bo = b_vec_ref[9 * l + 3]
        b2 = b_vec_ref[9 * l + 4]
        ln1w = b_vec_ref[9 * l + 5]
        ln1b = b_vec_ref[9 * l + 6]
        ln2w = b_vec_ref[9 * l + 7]
        ln2b = b_vec_ref[9 * l + 8]

        # ---------------- self attention (post-norm) ----------------
        q3 = (jnp.dot(x2, wq, preferred_element_type=jnp.float32) + bq).reshape(N, S, E)
        k3 = (jnp.dot(x2, wk, preferred_element_type=jnp.float32) + bk).reshape(N, S, E)
        v3 = (jnp.dot(x2, wv, preferred_element_type=jnp.float32) + bv).reshape(N, S, E)

        # Heads via lane masks: (Q*mask_h)·K == Q_h·K_h, and the multi-head
        # concat is replaced by summing masked contexts (no lane slicing).
        ctx = jnp.zeros((N, S, E), jnp.float32)
        for m in head_masks:
            qh = jnp.where(m, q3, 0.0)
            vh = jnp.where(m, v3, 0.0)
            s = jnp.einsum('nse,nte->nst', qh, k3,
                           preferred_element_type=jnp.float32)       # (N, S, S)
            p = _softmax_last(s)
            ctx = ctx + jnp.einsum('nst,nte->nse', p, vh,
                                   preferred_element_type=jnp.float32)

        attn2 = jnp.dot(ctx.reshape(R, E), wo,
                        preferred_element_type=jnp.float32) + bo
        x2 = _layer_norm(x2 + attn2, ln1w, ln1b)

        # ---------------- feed forward -------------------------------
        w1 = w_ff1_ref[l]                              # (E, F)
        b1 = b_ff1_ref[l]                              # (F,)
        w2 = w_ff2_ref[l]                              # (F, E)
        h1 = jnp.maximum(jnp.dot(x2, w1, preferred_element_type=jnp.float32) + b1, 0.0)
        ff = jnp.dot(h1, w2, preferred_element_type=jnp.float32) + b2
        x2 = _layer_norm(x2 + ff, ln2w, ln2b)

    # ---- mean over the batch axis + final Linear(E, 1), lane-major output ----
    pooled = jnp.mean(x2.reshape(N, S, E), axis=0)                    # (S, E)
    fc_w2 = fc_ref[0:1, :]                                            # (1, E)
    fc_b = fc_ref[1:2, 0:1]                                           # (1, 1)
    out_row = lax.dot_general(fc_w2, pooled, (((1,), (1,)), ((), ())),
                              preferred_element_type=jnp.float32) + fc_b
    o_ref[...] = out_row                                              # (1, S)


def transformer_model(x, params):
    (in_w, in_b, out_w, out_b, ln1_w, ln1_b, ln2_w, ln2_b,
     ff1_w, ff1_b, ff2_w, ff2_b, fc_w, fc_b) = params
    S, N, E = x.shape
    scale = 1.0 / (HEAD_DIM ** 0.5)

    # ---- host-side repack: fewer operands, transposed/pre-scaled weights ----
    x_t = jnp.transpose(x, (1, 0, 2)).astype(jnp.float32)             # (N, S, E)

    wq_t = jnp.swapaxes(in_w[:, 0:E, :], 1, 2) * scale                # scale folded in
    wk_t = jnp.swapaxes(in_w[:, E:2 * E, :], 1, 2)
    wv_t = jnp.swapaxes(in_w[:, 2 * E:3 * E, :], 1, 2)
    wo_t = jnp.swapaxes(out_w, 1, 2)
    w_attn = jnp.stack([wq_t, wk_t, wv_t, wo_t], axis=1)
    w_attn = w_attn.reshape(NUM_LAYERS * 4, E, E).astype(jnp.float32)  # (12, E, E)

    b_vec = jnp.stack([in_b[:, 0:E] * scale, in_b[:, E:2 * E], in_b[:, 2 * E:3 * E],
                       out_b, ff2_b, ln1_w, ln1_b, ln2_w, ln2_b], axis=1)
    b_vec = b_vec.reshape(NUM_LAYERS * 9, E).astype(jnp.float32)       # (27, E)

    w_ff1 = jnp.swapaxes(ff1_w, 1, 2).astype(jnp.float32)              # (L, E, F)
    b_ff1 = ff1_b.astype(jnp.float32)                                  # (L, F)
    w_ff2 = jnp.swapaxes(ff2_w, 1, 2).astype(jnp.float32)              # (L, F, E)

    fc_row1 = jnp.zeros((1, E), jnp.float32).at[0, 0].set(fc_b.reshape(-1)[0])
    fc_pack = jnp.concatenate([fc_w.reshape(1, E).astype(jnp.float32), fc_row1],
                              axis=0)                                  # (2, E)

    inputs = (x_t, w_attn, b_vec, w_ff1, b_ff1, w_ff2, fc_pack)
    vspec = pl.BlockSpec(memory_space=pltpu.MemorySpace.VMEM)
    out = pl.pallas_call(
        transformer_kernel,
        out_shape=jax.ShapeDtypeStruct((1, S), jnp.float32),
        in_specs=[vspec] * len(inputs),
        out_specs=vspec,
    )(*inputs)
    return out[0]                                                      # (S,)


# ------------------------- pure-JAX reference ------------------------------
def reference_forward(x, params):
    (in_w, in_b, out_w, out_b, ln1_w, ln1_b, ln2_w, ln2_b,
     ff1_w, ff1_b, ff2_w, ff2_b, fc_w, fc_b) = params
    S, N, E = x.shape
    hp = lax.Precision.HIGHEST
    h = x.astype(jnp.float32)
    scale = 1.0 / (HEAD_DIM ** 0.5)
    for l in range(NUM_LAYERS):
        qkv = jnp.einsum('sne,fe->snf', h, in_w[l], precision=hp) + in_b[l]
        q, k, v = jnp.split(qkv, 3, axis=-1)
        q = q.reshape(S, N, NUM_HEADS, HEAD_DIM) * scale
        k = k.reshape(S, N, NUM_HEADS, HEAD_DIM)
        v = v.reshape(S, N, NUM_HEADS, HEAD_DIM)
        sc = jnp.einsum('snhd,tnhd->nhst', q, k, precision=hp)
        p = jax.nn.softmax(sc, axis=-1)
        a = jnp.einsum('nhst,tnhd->snhd', p, v, precision=hp).reshape(S, N, E)
        a = jnp.einsum('sne,fe->snf', a, out_w[l], precision=hp) + out_b[l]
        h = _layer_norm(h + a, ln1_w[l], ln1_b[l])
        f = jax.nn.relu(jnp.einsum('sne,he->snh', h, ff1_w[l], precision=hp) + ff1_b[l])
        f = jnp.einsum('snh,eh->sne', f, ff2_w[l], precision=hp) + ff2_b[l]
        h = _layer_norm(h + f, ln2_w[l], ln2_b[l])
    pooled = h.mean(axis=1)                               # (S, E)
    out = jnp.dot(pooled, fc_w.T, precision=hp) + fc_b[0]  # (S, 1)
    return out[:, 0]


if __name__ == "__main__":
    S, N = 8, 2                                           # seq len, batch

    key = jax.random.PRNGKey(0)
    k = jax.random.split(key, 12)

    def init(kk, shape, scl=0.1):
        return jax.random.uniform(kk, shape, jnp.float32, -1.0, 1.0) * scl

    params = (
        init(k[0], (NUM_LAYERS, 3 * D_MODEL, D_MODEL)),   # in_proj_weight
        init(k[1], (NUM_LAYERS, 3 * D_MODEL)),            # in_proj_bias
        init(k[2], (NUM_LAYERS, D_MODEL, D_MODEL)),       # out_proj.weight
        init(k[3], (NUM_LAYERS, D_MODEL)),                # out_proj.bias
        jnp.ones((NUM_LAYERS, D_MODEL), jnp.float32),     # norm1.weight
        jnp.zeros((NUM_LAYERS, D_MODEL), jnp.float32),    # norm1.bias
        jnp.ones((NUM_LAYERS, D_MODEL), jnp.float32),     # norm2.weight
        jnp.zeros((NUM_LAYERS, D_MODEL), jnp.float32),    # norm2.bias
        init(k[4], (NUM_LAYERS, FFN_DIM, D_MODEL)),       # linear1.weight
        init(k[5], (NUM_LAYERS, FFN_DIM)),                # linear1.bias
        init(k[6], (NUM_LAYERS, D_MODEL, FFN_DIM)),       # linear2.weight
        init(k[7], (NUM_LAYERS, D_MODEL)),                # linear2.bias
        init(k[8], (1, D_MODEL)),                         # fc.weight
        init(k[9], (1, 1)),                               # fc.bias
    )
    x = jax.random.normal(k[10], (S, N, D_MODEL), jnp.float32)

    fwd = jax.jit(transformer_model)
    out = jax.block_until_ready(fwd(x, params))
    ref = reference_forward(x, params)

    assert out.shape == (S,), out.shape
    assert bool(jnp.all(jnp.isfinite(out)))
    assert bool(jnp.allclose(out, ref, atol=1e-3, rtol=1e-3)), (out, ref)
    print("KERNEL_OK")
</pallas_src>

<mosaic_0001>
module attributes {stable_mosaic.version = 11 : i64} {
  func.func @transformer_kernel(%arg0: memref<2x8x10xf32, #tpu.memory_space<vmem>>, %arg1: memref<12x10x10xf32, #tpu.memory_space<vmem>>, %arg2: memref<27x10xf32, #tpu.memory_space<vmem>>, %arg3: memref<3x10x64xf32, #tpu.memory_space<vmem>>, %arg4: memref<3x64xf32, #tpu.memory_space<vmem>>, %arg5: memref<3x64x10xf32, #tpu.memory_space<vmem>>, %arg6: memref<2x10xf32, #tpu.memory_space<vmem>>, %arg7: memref<1x8xf32, #tpu.memory_space<vmem>>) attributes {dimension_semantics = [], scalar_prefetch = 0 : i64, scratch_operands = 0 : i64, tpu.core_type = #tpu.core_type<tc>} {
    %c0 = arith.constant 0 : index
    %c0_0 = arith.constant 0 : index
    %c0_1 = arith.constant 0 : index
    %0 = vector.load %arg0[%c0, %c0_0, %c0_1] : memref<2x8x10xf32, #tpu.memory_space<vmem>>, vector<2x8x10xf32>
    %1 = vector.shape_cast %0 : vector<2x8x10xf32> to vector<16x10xf32>
    %2 = tpu.iota {dimensions = array<i32: 2>} : vector<1x1x10xi32>
    %c0_i32 = arith.constant 0 : i32
    %3 = vector.broadcast %c0_i32 : i32 to vector<1x1x10xi32>
    %4 = arith.cmpi sge, %2, %3 : vector<1x1x10xi32>
    %c5_i32 = arith.constant 5 : i32
    %5 = vector.broadcast %c5_i32 : i32 to vector<1x1x10xi32>
    %6 = arith.cmpi slt, %2, %5 : vector<1x1x10xi32>
    %7 = arith.andi %4, %6 : vector<1x1x10xi1>
    %c5_i32_2 = arith.constant 5 : i32
    %8 = vector.broadcast %c5_i32_2 : i32 to vector<1x1x10xi32>
    %9 = arith.cmpi sge, %2, %8 : vector<1x1x10xi32>
    %c10_i32 = arith.constant 10 : i32
    %10 = vector.broadcast %c10_i32 : i32 to vector<1x1x10xi32>
    %11 = arith.cmpi slt, %2, %10 : vector<1x1x10xi32>
    %12 = arith.andi %9, %11 : vector<1x1x10xi1>
    %c0_3 = arith.constant 0 : index
    %c0_4 = arith.constant 0 : index
    %c0_5 = arith.constant 0 : index
    %13 = vector.load %arg1[%c0_3, %c0_4, %c0_5] : memref<12x10x10xf32, #tpu.memory_space<vmem>>, vector<1x10x10xf32>
    %14 = vector.shape_cast %13 : vector<1x10x10xf32> to vector<10x10xf32>
    %c1 = arith.constant 1 : index
    %c0_6 = arith.constant 0 : index
    %c0_7 = arith.constant 0 : index
    %15 = vector.load %arg1[%c1, %c0_6, %c0_7] : memref<12x10x10xf32, #tpu.memory_space<vmem>>, vector<1x10x10xf32>
    %16 = vector.shape_cast %15 : vector<1x10x10xf32> to vector<10x10xf32>
    %c2 = arith.constant 2 : index
    %c0_8 = arith.constant 0 : index
    %c0_9 = arith.constant 0 : index
    %17 = vector.load %arg1[%c2, %c0_8, %c0_9] : memref<12x10x10xf32, #tpu.memory_space<vmem>>, vector<1x10x10xf32>
    %18 = vector.shape_cast %17 : vector<1x10x10xf32> to vector<10x10xf32>
    %c3 = arith.constant 3 : index
    %c0_10 = arith.constant 0 : index
    %c0_11 = arith.constant 0 : index
    %19 = vector.load %arg1[%c3, %c0_10, %c0_11] : memref<12x10x10xf32, #tpu.memory_space<vmem>>, vector<1x10x10xf32>
    %20 = vector.shape_cast %19 : vector<1x10x10xf32> to vector<10x10xf32>
    %c0_12 = arith.constant 0 : index
    %c0_13 = arith.constant 0 : index
    %21 = vector.load %arg2[%c0_12, %c0_13] : memref<27x10xf32, #tpu.memory_space<vmem>>, vector<1x10xf32>
    %22 = vector.shape_cast %21 : vector<1x10xf32> to vector<10xf32>
    %c1_14 = arith.constant 1 : index
    %c0_15 = arith.constant 0 : index
    %23 = vector.load %arg2[%c1_14, %c0_15] : memref<27x10xf32, #tpu.memory_space<vmem>>, vector<1x10xf32>
    %24 = vector.shape_cast %23 : vector<1x10xf32> to vector<10xf32>
    %c2_16 = arith.constant 2 : index
    %c0_17 = arith.constant 0 : index
    %25 = vector.load %arg2[%c2_16, %c0_17] : memref<27x10xf32, #tpu.memory_space<vmem>>, vector<1x10xf32>
    %26 = vector.shape_cast %25 : vector<1x10xf32> to vector<10xf32>
    %c3_18 = arith.constant 3 : index
    %c0_19 = arith.constant 0 : index
    %27 = vector.load %arg2[%c3_18, %c0_19] : memref<27x10xf32, #tpu.memory_space<vmem>>, vector<1x10xf32>
    %28 = vector.shape_cast %27 : vector<1x10xf32> to vector<10xf32>
    %c4 = arith.constant 4 : index
    %c0_20 = arith.constant 0 : index
    %29 = vector.load %arg2[%c4, %c0_20] : memref<27x10xf32, #tpu.memory_space<vmem>>, vector<1x10xf32>
    %30 = vector.shape_cast %29 : vector<1x10xf32> to vector<10xf32>
    %c5 = arith.constant 5 : index
    %c0_21 = arith.constant 0 : index
    %31 = vector.load %arg2[%c5, %c0_21] : memref<27x10xf32, #tpu.memory_space<vmem>>, vector<1x10xf32>
    %32 = vector.shape_cast %31 : vector<1x10xf32> to vector<10xf32>
    %c6 = arith.constant 6 : index
    %c0_22 = arith.constant 0 : index
    %33 = vector.load %arg2[%c6, %c0_22] : memref<27x10xf32, #tpu.memory_space<vmem>>, vector<1x10xf32>
    %34 = vector.shape_cast %33 : vector<1x10xf32> to vector<10xf32>
    %c7 = arith.constant 7 : index
    %c0_23 = arith.constant 0 : index
    %35 = vector.load %arg2[%c7, %c0_23] : memref<27x10xf32, #tpu.memory_space<vmem>>, vector<1x10xf32>
    %36 = vector.shape_cast %35 : vector<1x10xf32> to vector<10xf32>
    %c8 = arith.constant 8 : index
    %c0_24 = arith.constant 0 : index
    %37 = vector.load %arg2[%c8, %c0_24] : memref<27x10xf32, #tpu.memory_space<vmem>>, vector<1x10xf32>
    %38 = vector.shape_cast %37 : vector<1x10xf32> to vector<10xf32>
    %cst = arith.constant dense<0.000000e+00> : vector<16x10xf32>
    %39 = tpu.matmul %1, %14, %cst {dimension_numbers = #tpu.dot_dimension_numbers<[1], [0], [0], [1], [0, 0, 1, 1], [], []>} : vector<16x10xf32>, vector<10x10xf32>, vector<16x10xf32> -> vector<16x10xf32>
    %40 = vector.shape_cast %22 : vector<10xf32> to vector<1x10xf32>
    %41 = vector.broadcast %40 : vector<1x10xf32> to vector<16x10xf32>
    %42 = arith.addf %39, %41 : vector<16x10xf32>
    %43 = vector.shape_cast %42 : vector<16x10xf32> to vector<2x8x10xf32>
    %cst_25 = arith.constant dense<0.000000e+00> : vector<16x10xf32>
    %44 = tpu.matmul %1, %16, %cst_25 {dimension_numbers = #tpu.dot_dimension_numbers<[1], [0], [0], [1], [0, 0, 1, 1], [], []>} : vector<16x10xf32>, vector<10x10xf32>, vector<16x10xf32> -> vector<16x10xf32>
    %45 = vector.shape_cast %24 : vector<10xf32> to vector<1x10xf32>
    %46 = vector.broadcast %45 : vector<1x10xf32> to vector<16x10xf32>
    %47 = arith.addf %44, %46 : vector<16x10xf32>
    %48 = vector.shape_cast %47 : vector<16x10xf32> to vector<2x8x10xf32>
    %cst_26 = arith.constant dense<0.000000e+00> : vector<16x10xf32>
    %49 = tpu.matmul %1, %18, %cst_26 {dimension_numbers = #tpu.dot_dimension_numbers<[1], [0], [0], [1], [0, 0, 1, 1], [], []>} : vector<16x10xf32>, vector<10x10xf32>, vector<16x10xf32> -> vector<16x10xf32>
    %50 = vector.shape_cast %26 : vector<10xf32> to vector<1x10xf32>
    %51 = vector.broadcast %50 : vector<1x10xf32> to vector<16x10xf32>
    %52 = arith.addf %49, %51 : vector<16x10xf32>
    %53 = vector.shape_cast %52 : vector<16x10xf32> to vector<2x8x10xf32>
    %cst_27 = arith.constant 0.000000e+00 : f32
    %54 = vector.broadcast %cst_27 : f32 to vector<2x8x10xf32>
    %cst_28 = arith.constant 0.000000e+00 : f32
    %55 = vector.shape_cast %7 : vector<1x1x10xi1> to vector<1x1x10xi1>
    %56 = vector.broadcast %55 : vector<1x1x10xi1> to vector<2x8x10xi1>
    %57 = vector.broadcast %cst_28 : f32 to vector<2x8x10xf32>
    %58 = arith.select %56, %43, %57 : vector<2x8x10xi1>, vector<2x8x10xf32>
    %cst_29 = arith.constant 0.000000e+00 : f32
    %59 = vector.shape_cast %7 : vector<1x1x10xi1> to vector<1x1x10xi1>
    %60 = vector.broadcast %59 : vector<1x1x10xi1> to vector<2x8x10xi1>
    %61 = vector.broadcast %cst_29 : f32 to vector<2x8x10xf32>
    %62 = arith.select %60, %53, %61 : vector<2x8x10xi1>, vector<2x8x10xf32>
    "tpu.trace_start"() <{level = 10 : i32, message = "nse,nte->nst"}> : () -> ()
    %cst_30 = arith.constant dense<0.000000e+00> : vector<2x8x8xf32>
    %63 = tpu.matmul %58, %48, %cst_30 {dimension_numbers = #tpu.dot_dimension_numbers<[2], [2], [1], [1], [0, 0, 0, 1, 1, 1], [0], [0]>} : vector<2x8x10xf32>, vector<2x8x10xf32>, vector<2x8x8xf32> -> vector<2x8x8xf32>
    "tpu.trace_stop"() : () -> ()
    %cst_31 = arith.constant dense<0xFF800000> : vector<2x8xf32>
    %64 = vector.multi_reduction <maximumf>, %63, %cst_31 [2] : vector<2x8x8xf32> to vector<2x8xf32>
    %65 = vector.shape_cast %64 : vector<2x8xf32> to vector<2x8x1xf32>
    %66 = vector.broadcast %65 : vector<2x8x1xf32> to vector<2x8x8xf32>
    %67 = arith.subf %63, %66 : vector<2x8x8xf32>
    %68 = math.exp %67 : vector<2x8x8xf32>
    %cst_32 = arith.constant dense<0.000000e+00> : vector<2x8xf32>
    %69 = vector.multi_reduction <add>, %68, %cst_32 [2] : vector<2x8x8xf32> to vector<2x8xf32>
    %70 = vector.shape_cast %69 : vector<2x8xf32> to vector<2x8x1xf32>
    %71 = vector.broadcast %70 : vector<2x8x1xf32> to vector<2x8x8xf32>
    %72 = arith.divf %68, %71 : vector<2x8x8xf32>
    "tpu.trace_start"() <{level = 10 : i32, message = "nst,nte->nse"}> : () -> ()
    %cst_33 = arith.constant dense<0.000000e+00> : vector<2x8x10xf32>
    %73 = tpu.matmul %72, %62, %cst_33 {dimension_numbers = #tpu.dot_dimension_numbers<[2], [1], [1], [2], [0, 0, 0, 1, 1, 2], [0], [0]>} : vector<2x8x8xf32>, vector<2x8x10xf32>, vector<2x8x10xf32> -> vector<2x8x10xf32>
    "tpu.trace_stop"() : () -> ()
    %74 = arith.addf %54, %73 : vector<2x8x10xf32>
    %cst_34 = arith.constant 0.000000e+00 : f32
    %75 = vector.shape_cast %12 : vector<1x1x10xi1> to vector<1x1x10xi1>
    %76 = vector.broadcast %75 : vector<1x1x10xi1> to vector<2x8x10xi1>
    %77 = vector.broadcast %cst_34 : f32 to vector<2x8x10xf32>
    %78 = arith.select %76, %43, %77 : vector<2x8x10xi1>, vector<2x8x10xf32>
    %cst_35 = arith.constant 0.000000e+00 : f32
    %79 = vector.shape_cast %12 : vector<1x1x10xi1> to vector<1x1x10xi1>
    %80 = vector.broadcast %79 : vector<1x1x10xi1> to vector<2x8x10xi1>
    %81 = vector.broadcast %cst_35 : f32 to vector<2x8x10xf32>
    %82 = arith.select %80, %53, %81 : vector<2x8x10xi1>, vector<2x8x10xf32>
    "tpu.trace_start"() <{level = 10 : i32, message = "nse,nte->nst"}> : () -> ()
    %cst_36 = arith.constant dense<0.000000e+00> : vector<2x8x8xf32>
    %83 = tpu.matmul %78, %48, %cst_36 {dimension_numbers = #tpu.dot_dimension_numbers<[2], [2], [1], [1], [0, 0, 0, 1, 1, 1], [0], [0]>} : vector<2x8x10xf32>, vector<2x8x10xf32>, vector<2x8x8xf32> -> vector<2x8x8xf32>
    "tpu.trace_stop"() : () -> ()
    %cst_37 = arith.constant dense<0xFF800000> : vector<2x8xf32>
    %84 = vector.multi_reduction <maximumf>, %83, %cst_37 [2] : vector<2x8x8xf32> to vector<2x8xf32>
    %85 = vector.shape_cast %84 : vector<2x8xf32> to vector<2x8x1xf32>
    %86 = vector.broadcast %85 : vector<2x8x1xf32> to vector<2x8x8xf32>
    %87 = arith.subf %83, %86 : vector<2x8x8xf32>
    %88 = math.exp %87 : vector<2x8x8xf32>
    %cst_38 = arith.constant dense<0.000000e+00> : vector<2x8xf32>
    %89 = vector.multi_reduction <add>, %88, %cst_38 [2] : vector<2x8x8xf32> to vector<2x8xf32>
    %90 = vector.shape_cast %89 : vector<2x8xf32> to vector<2x8x1xf32>
    %91 = vector.broadcast %90 : vector<2x8x1xf32> to vector<2x8x8xf32>
    %92 = arith.divf %88, %91 : vector<2x8x8xf32>
    "tpu.trace_start"() <{level = 10 : i32, message = "nst,nte->nse"}> : () -> ()
    %cst_39 = arith.constant dense<0.000000e+00> : vector<2x8x10xf32>
    %93 = tpu.matmul %92, %82, %cst_39 {dimension_numbers = #tpu.dot_dimension_numbers<[2], [1], [1], [2], [0, 0, 0, 1, 1, 2], [0], [0]>} : vector<2x8x8xf32>, vector<2x8x10xf32>, vector<2x8x10xf32> -> vector<2x8x10xf32>
    "tpu.trace_stop"() : () -> ()
    %94 = arith.addf %74, %93 : vector<2x8x10xf32>
    %95 = vector.shape_cast %94 : vector<2x8x10xf32> to vector<16x10xf32>
    %cst_40 = arith.constant dense<0.000000e+00> : vector<16x10xf32>
    %96 = tpu.matmul %95, %20, %cst_40 {dimension_numbers = #tpu.dot_dimension_numbers<[1], [0], [0], [1], [0, 0, 1, 1], [], []>} : vector<16x10xf32>, vector<10x10xf32>, vector<16x10xf32> -> vector<16x10xf32>
    %97 = vector.shape_cast %28 : vector<10xf32> to vector<1x10xf32>
    %98 = vector.broadcast %97 : vector<1x10xf32> to vector<16x10xf32>
    %99 = arith.addf %96, %98 : vector<16x10xf32>
    %100 = arith.addf %1, %99 : vector<16x10xf32>
    %cst_41 = arith.constant dense<0.000000e+00> : vector<16xf32>
    %101 = vector.multi_reduction <add>, %100, %cst_41 [1] : vector<16x10xf32> to vector<16xf32>
    %102 = vector.shape_cast %101 : vector<16xf32> to vector<16x1xf32>
    %cst_42 = arith.constant 1.000000e+01 : f32
    %103 = vector.broadcast %cst_42 : f32 to vector<16x1xf32>
    %104 = arith.divf %102, %103 : vector<16x1xf32>
    %105 = vector.broadcast %104 : vector<16x1xf32> to vector<16x10xf32>
    %106 = arith.subf %100, %105 : vector<16x10xf32>
    %107 = arith.mulf %106, %106 : vector<16x10xf32>
    %cst_43 = arith.constant dense<0.000000e+00> : vector<16xf32>
    %108 = vector.multi_reduction <add>, %107, %cst_43 [1] : vector<16x10xf32> to vector<16xf32>
    %109 = vector.shape_cast %108 : vector<16xf32> to vector<16x1xf32>
    %cst_44 = arith.constant 1.000000e+01 : f32
    %110 = vector.broadcast %cst_44 : f32 to vector<16x1xf32>
    %111 = arith.divf %109, %110 : vector<16x1xf32>
    %cst_45 = arith.constant 9.99999974E-6 : f32
    %112 = vector.broadcast %cst_45 : f32 to vector<16x1xf32>
    %113 = arith.addf %111, %112 : vector<16x1xf32>
    %114 = math.rsqrt %113 : vector<16x1xf32>
    %115 = vector.broadcast %114 : vector<16x1xf32> to vector<16x10xf32>
    %116 = arith.mulf %106, %115 : vector<16x10xf32>
    %117 = vector.shape_cast %32 : vector<10xf32> to vector<1x10xf32>
    %118 = vector.broadcast %117 : vector<1x10xf32> to vector<16x10xf32>
    %119 = arith.mulf %116, %118 : vector<16x10xf32>
    %120 = vector.shape_cast %34 : vector<10xf32> to vector<1x10xf32>
    %121 = vector.broadcast %120 : vector<1x10xf32> to vector<16x10xf32>
    %122 = arith.addf %119, %121 : vector<16x10xf32>
    %c0_46 = arith.constant 0 : index
    %c0_47 = arith.constant 0 : index
    %c0_48 = arith.constant 0 : index
    %123 = vector.load %arg3[%c0_46, %c0_47, %c0_48] : memref<3x10x64xf32, #tpu.memory_space<vmem>>, vector<1x10x64xf32>
    %124 = vector.shape_cast %123 : vector<1x10x64xf32> to vector<10x64xf32>
    %c0_49 = arith.constant 0 : index
    %c0_50 = arith.constant 0 : index
    %125 = vector.load %arg4[%c0_49, %c0_50] : memref<3x64xf32, #tpu.memory_space<vmem>>, vector<1x64xf32>
    %126 = vector.shape_cast %125 : vector<1x64xf32> to vector<64xf32>
    %c0_51 = arith.constant 0 : index
    %c0_52 = arith.constant 0 : index
    %c0_53 = arith.constant 0 : index
    %127 = vector.load %arg5[%c0_51, %c0_52, %c0_53] : memref<3x64x10xf32, #tpu.memory_space<vmem>>, vector<1x64x10xf32>
    %128 = vector.shape_cast %127 : vector<1x64x10xf32> to vector<64x10xf32>
    %cst_54 = arith.constant dense<0.000000e+00> : vector<16x64xf32>
    %129 = tpu.matmul %122, %124, %cst_54 {dimension_numbers = #tpu.dot_dimension_numbers<[1], [0], [0], [1], [0, 0, 1, 1], [], []>} : vector<16x10xf32>, vector<10x64xf32>, vector<16x64xf32> -> vector<16x64xf32>
    %130 = vector.shape_cast %126 : vector<64xf32> to vector<1x64xf32>
    %131 = vector.broadcast %130 : vector<1x64xf32> to vector<16x64xf32>
    %132 = arith.addf %129, %131 : vector<16x64xf32>
    %cst_55 = arith.constant 0.000000e+00 : f32
    %133 = vector.broadcast %cst_55 : f32 to vector<16x64xf32>
    %134 = arith.maximumf %132, %133 : vector<16x64xf32>
    %cst_56 = arith.constant dense<0.000000e+00> : vector<16x10xf32>
    %135 = tpu.matmul %134, %128, %cst_56 {dimension_numbers = #tpu.dot_dimension_numbers<[1], [0], [0], [1], [0, 0, 1, 1], [], []>} : vector<16x64xf32>, vector<64x10xf32>, vector<16x10xf32> -> vector<16x10xf32>
    %136 = vector.shape_cast %30 : vector<10xf32> to vector<1x10xf32>
    %137 = vector.broadcast %136 : vector<1x10xf32> to vector<16x10xf32>
    %138 = arith.addf %135, %137 : vector<16x10xf32>
    %139 = arith.addf %122, %138 : vector<16x10xf32>
    %cst_57 = arith.constant dense<0.000000e+00> : vector<16xf32>
    %140 = vector.multi_reduction <add>, %139, %cst_57 [1] : vector<16x10xf32> to vector<16xf32>
    %141 = vector.shape_cast %140 : vector<16xf32> to vector<16x1xf32>
    %cst_58 = arith.constant 1.000000e+01 : f32
    %142 = vector.broadcast %cst_58 : f32 to vector<16x1xf32>
    %143 = arith.divf %141, %142 : vector<16x1xf32>
    %144 = vector.broadcast %143 : vector<16x1xf32> to vector<16x10xf32>
    %145 = arith.subf %139, %144 : vector<16x10xf32>
    %146 = arith.mulf %145, %145 : vector<16x10xf32>
    %cst_59 = arith.constant dense<0.000000e+00> : vector<16xf32>
    %147 = vector.multi_reduction <add>, %146, %cst_59 [1] : vector<16x10xf32> to vector<16xf32>
    %148 = vector.shape_cast %147 : vector<16xf32> to vector<16x1xf32>
    %cst_60 = arith.constant 1.000000e+01 : f32
    %149 = vector.broadcast %cst_60 : f32 to vector<16x1xf32>
    %150 = arith.divf %148, %149 : vector<16x1xf32>
    %cst_61 = arith.constant 9.99999974E-6 : f32
    %151 = vector.broadcast %cst_61 : f32 to vector<16x1xf32>
    %152 = arith.addf %150, %151 : vector<16x1xf32>
    %153 = math.rsqrt %152 : vector<16x1xf32>
    %154 = vector.broadcast %153 : vector<16x1xf32> to vector<16x10xf32>
    %155 = arith.mulf %145, %154 : vector<16x10xf32>
    %156 = vector.shape_cast %36 : vector<10xf32> to vector<1x10xf32>
    %157 = vector.broadcast %156 : vector<1x10xf32> to vector<16x10xf32>
    %158 = arith.mulf %155, %157 : vector<16x10xf32>
    %159 = vector.shape_cast %38 : vector<10xf32> to vector<1x10xf32>
    %160 = vector.broadcast %159 : vector<1x10xf32> to vector<16x10xf32>
    %161 = arith.addf %158, %160 : vector<16x10xf32>
    %c4_62 = arith.constant 4 : index
    %c0_63 = arith.constant 0 : index
    %c0_64 = arith.constant 0 : index
    %162 = vector.load %arg1[%c4_62, %c0_63, %c0_64] : memref<12x10x10xf32, #tpu.memory_space<vmem>>, vector<1x10x10xf32>
    %163 = vector.shape_cast %162 : vector<1x10x10xf32> to vector<10x10xf32>
    %c5_65 = arith.constant 5 : index
    %c0_66 = arith.constant 0 : index
    %c0_67 = arith.constant 0 : index
    %164 = vector.load %arg1[%c5_65, %c0_66, %c0_67] : memref<12x10x10xf32, #tpu.memory_space<vmem>>, vector<1x10x10xf32>
    %165 = vector.shape_cast %164 : vector<1x10x10xf32> to vector<10x10xf32>
    %c6_68 = arith.constant 6 : index
    %c0_69 = arith.constant 0 : index
    %c0_70 = arith.constant 0 : index
    %166 = vector.load %arg1[%c6_68, %c0_69, %c0_70] : memref<12x10x10xf32, #tpu.memory_space<vmem>>, vector<1x10x10xf32>
    %167 = vector.shape_cast %166 : vector<1x10x10xf32> to vector<10x10xf32>
    %c7_71 = arith.constant 7 : index
    %c0_72 = arith.constant 0 : index
    %c0_73 = arith.constant 0 : index
    %168 = vector.load %arg1[%c7_71, %c0_72, %c0_73] : memref<12x10x10xf32, #tpu.memory_space<vmem>>, vector<1x10x10xf32>
    %169 = vector.shape_cast %168 : vector<1x10x10xf32> to vector<10x10xf32>
    %c9 = arith.constant 9 : index
    %c0_74 = arith.constant 0 : index
    %170 = vector.load %arg2[%c9, %c0_74] : memref<27x10xf32, #tpu.memory_space<vmem>>, vector<1x10xf32>
    %171 = vector.shape_cast %170 : vector<1x10xf32> to vector<10xf32>
    %c10 = arith.constant 10 : index
    %c0_75 = arith.constant 0 : index
    %172 = vector.load %arg2[%c10, %c0_75] : memref<27x10xf32, #tpu.memory_space<vmem>>, vector<1x10xf32>
    %173 = vector.shape_cast %172 : vector<1x10xf32> to vector<10xf32>
    %c11 = arith.constant 11 : index
    %c0_76 = arith.constant 0 : index
    %174 = vector.load %arg2[%c11, %c0_76] : memref<27x10xf32, #tpu.memory_space<vmem>>, vector<1x10xf32>
    %175 = vector.shape_cast %174 : vector<1x10xf32> to vector<10xf32>
    %c12 = arith.constant 12 : index
    %c0_77 = arith.constant 0 : index
    %176 = vector.load %arg2[%c12, %c0_77] : memref<27x10xf32, #tpu.memory_space<vmem>>, vector<1x10xf32>
    %177 = vector.shape_cast %176 : vector<1x10xf32> to vector<10xf32>
    %c13 = arith.constant 13 : index
    %c0_78 = arith.constant 0 : index
    %178 = vector.load %arg2[%c13, %c0_78] : memref<27x10xf32, #tpu.memory_space<vmem>>, vector<1x10xf32>
    %179 = vector.shape_cast %178 : vector<1x10xf32> to vector<10xf32>
    %c14 = arith.constant 14 : index
    %c0_79 = arith.constant 0 : index
    %180 = vector.load %arg2[%c14, %c0_79] : memref<27x10xf32, #tpu.memory_space<vmem>>, vector<1x10xf32>
    %181 = vector.shape_cast %180 : vector<1x10xf32> to vector<10xf32>
    %c15 = arith.constant 15 : index
    %c0_80 = arith.constant 0 : index
    %182 = vector.load %arg2[%c15, %c0_80] : memref<27x10xf32, #tpu.memory_space<vmem>>, vector<1x10xf32>
    %183 = vector.shape_cast %182 : vector<1x10xf32> to vector<10xf32>
    %c16 = arith.constant 16 : index
    %c0_81 = arith.constant 0 : index
    %184 = vector.load %arg2[%c16, %c0_81] : memref<27x10xf32, #tpu.memory_space<vmem>>, vector<1x10xf32>
    %185 = vector.shape_cast %184 : vector<1x10xf32> to vector<10xf32>
    %c17 = arith.constant 17 : index
    %c0_82 = arith.constant 0 : index
    %186 = vector.load %arg2[%c17, %c0_82] : memref<27x10xf32, #tpu.memory_space<vmem>>, vector<1x10xf32>
    %187 = vector.shape_cast %186 : vector<1x10xf32> to vector<10xf32>
    %cst_83 = arith.constant dense<0.000000e+00> : vector<16x10xf32>
    %188 = tpu.matmul %161, %163, %cst_83 {dimension_numbers = #tpu.dot_dimension_numbers<[1], [0], [0], [1], [0, 0, 1, 1], [], []>} : vector<16x10xf32>, vector<10x10xf32>, vector<16x10xf32> -> vector<16x10xf32>
    %189 = vector.shape_cast %171 : vector<10xf32> to vector<1x10xf32>
    %190 = vector.broadcast %189 : vector<1x10xf32> to vector<16x10xf32>
    %191 = arith.addf %188, %190 : vector<16x10xf32>
    %192 = vector.shape_cast %191 : vector<16x10xf32> to vector<2x8x10xf32>
    %cst_84 = arith.constant dense<0.000000e+00> : vector<16x10xf32>
    %193 = tpu.matmul %161, %165, %cst_84 {dimension_numbers = #tpu.dot_dimension_numbers<[1], [0], [0], [1], [0, 0, 1, 1], [], []>} : vector<16x10xf32>, vector<10x10xf32>, vector<16x10xf32> -> vector<16x10xf32>
    %194 = vector.shape_cast %173 : vector<10xf32> to vector<1x10xf32>
    %195 = vector.broadcast %194 : vector<1x10xf32> to vector<16x10xf32>
    %196 = arith.addf %193, %195 : vector<16x10xf32>
    %197 = vector.shape_cast %196 : vector<16x10xf32> to vector<2x8x10xf32>
    %cst_85 = arith.constant dense<0.000000e+00> : vector<16x10xf32>
    %198 = tpu.matmul %161, %167, %cst_85 {dimension_numbers = #tpu.dot_dimension_numbers<[1], [0], [0], [1], [0, 0, 1, 1], [], []>} : vector<16x10xf32>, vector<10x10xf32>, vector<16x10xf32> -> vector<16x10xf32>
    %199 = vector.shape_cast %175 : vector<10xf32> to vector<1x10xf32>
    %200 = vector.broadcast %199 : vector<1x10xf32> to vector<16x10xf32>
    %201 = arith.addf %198, %200 : vector<16x10xf32>
    %202 = vector.shape_cast %201 : vector<16x10xf32> to vector<2x8x10xf32>
    %cst_86 = arith.constant 0.000000e+00 : f32
    %203 = vector.broadcast %cst_86 : f32 to vector<2x8x10xf32>
    %cst_87 = arith.constant 0.000000e+00 : f32
    %204 = vector.shape_cast %7 : vector<1x1x10xi1> to vector<1x1x10xi1>
    %205 = vector.broadcast %204 : vector<1x1x10xi1> to vector<2x8x10xi1>
    %206 = vector.broadcast %cst_87 : f32 to vector<2x8x10xf32>
    %207 = arith.select %205, %192, %206 : vector<2x8x10xi1>, vector<2x8x10xf32>
    %cst_88 = arith.constant 0.000000e+00 : f32
    %208 = vector.shape_cast %7 : vector<1x1x10xi1> to vector<1x1x10xi1>
    %209 = vector.broadcast %208 : vector<1x1x10xi1> to vector<2x8x10xi1>
    %210 = vector.broadcast %cst_88 : f32 to vector<2x8x10xf32>
    %211 = arith.select %209, %202, %210 : vector<2x8x10xi1>, vector<2x8x10xf32>
    "tpu.trace_start"() <{level = 10 : i32, message = "nse,nte->nst"}> : () -> ()
    %cst_89 = arith.constant dense<0.000000e+00> : vector<2x8x8xf32>
    %212 = tpu.matmul %207, %197, %cst_89 {dimension_numbers = #tpu.dot_dimension_numbers<[2], [2], [1], [1], [0, 0, 0, 1, 1, 1], [0], [0]>} : vector<2x8x10xf32>, vector<2x8x10xf32>, vector<2x8x8xf32> -> vector<2x8x8xf32>
    "tpu.trace_stop"() : () -> ()
    %cst_90 = arith.constant dense<0xFF800000> : vector<2x8xf32>
    %213 = vector.multi_reduction <maximumf>, %212, %cst_90 [2] : vector<2x8x8xf32> to vector<2x8xf32>
    %214 = vector.shape_cast %213 : vector<2x8xf32> to vector<2x8x1xf32>
    %215 = vector.broadcast %214 : vector<2x8x1xf32> to vector<2x8x8xf32>
    %216 = arith.subf %212, %215 : vector<2x8x8xf32>
    %217 = math.exp %216 : vector<2x8x8xf32>
    %cst_91 = arith.constant dense<0.000000e+00> : vector<2x8xf32>
    %218 = vector.multi_reduction <add>, %217, %cst_91 [2] : vector<2x8x8xf32> to vector<2x8xf32>
    %219 = vector.shape_cast %218 : vector<2x8xf32> to vector<2x8x1xf32>
    %220 = vector.broadcast %219 : vector<2x8x1xf32> to vector<2x8x8xf32>
    %221 = arith.divf %217, %220 : vector<2x8x8xf32>
    "tpu.trace_start"() <{level = 10 : i32, message = "nst,nte->nse"}> : () -> ()
    %cst_92 = arith.constant dense<0.000000e+00> : vector<2x8x10xf32>
    %222 = tpu.matmul %221, %211, %cst_92 {dimension_numbers = #tpu.dot_dimension_numbers<[2], [1], [1], [2], [0, 0, 0, 1, 1, 2], [0], [0]>} : vector<2x8x8xf32>, vector<2x8x10xf32>, vector<2x8x10xf32> -> vector<2x8x10xf32>
    "tpu.trace_stop"() : () -> ()
    %223 = arith.addf %203, %222 : vector<2x8x10xf32>
    %cst_93 = arith.constant 0.000000e+00 : f32
    %224 = vector.shape_cast %12 : vector<1x1x10xi1> to vector<1x1x10xi1>
    %225 = vector.broadcast %224 : vector<1x1x10xi1> to vector<2x8x10xi1>
    %226 = vector.broadcast %cst_93 : f32 to vector<2x8x10xf32>
    %227 = arith.select %225, %192, %226 : vector<2x8x10xi1>, vector<2x8x10xf32>
    %cst_94 = arith.constant 0.000000e+00 : f32
    %228 = vector.shape_cast %12 : vector<1x1x10xi1> to vector<1x1x10xi1>
    %229 = vector.broadcast %228 : vector<1x1x10xi1> to vector<2x8x10xi1>
    %230 = vector.broadcast %cst_94 : f32 to vector<2x8x10xf32>
    %231 = arith.select %229, %202, %230 : vector<2x8x10xi1>, vector<2x8x10xf32>
    "tpu.trace_start"() <{level = 10 : i32, message = "nse,nte->nst"}> : () -> ()
    %cst_95 = arith.constant dense<0.000000e+00> : vector<2x8x8xf32>
    %232 = tpu.matmul %227, %197, %cst_95 {dimension_numbers = #tpu.dot_dimension_numbers<[2], [2], [1], [1], [0, 0, 0, 1, 1, 1], [0], [0]>} : vector<2x8x10xf32>, vector<2x8x10xf32>, vector<2x8x8xf32> -> vector<2x8x8xf32>
    "tpu.trace_stop"() : () -> ()
    %cst_96 = arith.constant dense<0xFF800000> : vector<2x8xf32>
    %233 = vector.multi_reduction <maximumf>, %232, %cst_96 [2] : vector<2x8x8xf32> to vector<2x8xf32>
    %234 = vector.shape_cast %233 : vector<2x8xf32> to vector<2x8x1xf32>
    %235 = vector.broadcast %234 : vector<2x8x1xf32> to vector<2x8x8xf32>
    %236 = arith.subf %232, %235 : vector<2x8x8xf32>
    %237 = math.exp %236 : vector<2x8x8xf32>
    %cst_97 = arith.constant dense<0.000000e+00> : vector<2x8xf32>
    %238 = vector.multi_reduction <add>, %237, %cst_97 [2] : vector<2x8x8xf32> to vector<2x8xf32>
    %239 = vector.shape_cast %238 : vector<2x8xf32> to vector<2x8x1xf32>
    %240 = vector.broadcast %239 : vector<2x8x1xf32> to vector<2x8x8xf32>
    %241 = arith.divf %237, %240 : vector<2x8x8xf32>
    "tpu.trace_start"() <{level = 10 : i32, message = "nst,nte->nse"}> : () -> ()
    %cst_98 = arith.constant dense<0.000000e+00> : vector<2x8x10xf32>
    %242 = tpu.matmul %241, %231, %cst_98 {dimension_numbers = #tpu.dot_dimension_numbers<[2], [1], [1], [2], [0, 0, 0, 1, 1, 2], [0], [0]>} : vector<2x8x8xf32>, vector<2x8x10xf32>, vector<2x8x10xf32> -> vector<2x8x10xf32>
    "tpu.trace_stop"() : () -> ()
    %243 = arith.addf %223, %242 : vector<2x8x10xf32>
    %244 = vector.shape_cast %243 : vector<2x8x10xf32> to vector<16x10xf32>
    %cst_99 = arith.constant dense<0.000000e+00> : vector<16x10xf32>
    %245 = tpu.matmul %244, %169, %cst_99 {dimension_numbers = #tpu.dot_dimension_numbers<[1], [0], [0], [1], [0, 0, 1, 1], [], []>} : vector<16x10xf32>, vector<10x10xf32>, vector<16x10xf32> -> vector<16x10xf32>
    %246 = vector.shape_cast %177 : vector<10xf32> to vector<1x10xf32>
    %247 = vector.broadcast %246 : vector<1x10xf32> to vector<16x10xf32>
    %248 = arith.addf %245, %247 : vector<16x10xf32>
    %249 = arith.addf %161, %248 : vector<16x10xf32>
    %cst_100 = arith.constant dense<0.000000e+00> : vector<16xf32>
    %250 = vector.multi_reduction <add>, %249, %cst_100 [1] : vector<16x10xf32> to vector<16xf32>
    %251 = vector.shape_cast %250 : vector<16xf32> to vector<16x1xf32>
    %cst_101 = arith.constant 1.000000e+01 : f32
    %252 = vector.broadcast %cst_101 : f32 to vector<16x1xf32>
    %253 = arith.divf %251, %252 : vector<16x1xf32>
    %254 = vector.broadcast %253 : vector<16x1xf32> to vector<16x10xf32>
    %255 = arith.subf %249, %254 : vector<16x10xf32>
    %256 = arith.mulf %255, %255 : vector<16x10xf32>
    %cst_102 = arith.constant dense<0.000000e+00> : vector<16xf32>
    %257 = vector.multi_reduction <add>, %256, %cst_102 [1] : vector<16x10xf32> to vector<16xf32>
    %258 = vector.shape_cast %257 : vector<16xf32> to vector<16x1xf32>
    %cst_103 = arith.constant 1.000000e+01 : f32
    %259 = vector.broadcast %cst_103 : f32 to vector<16x1xf32>
    %260 = arith.divf %258, %259 : vector<16x1xf32>
    %cst_104 = arith.constant 9.99999974E-6 : f32
    %261 = vector.broadcast %cst_104 : f32 to vector<16x1xf32>
    %262 = arith.addf %260, %261 : vector<16x1xf32>
    %263 = math.rsqrt %262 : vector<16x1xf32>
    %264 = vector.broadcast %263 : vector<16x1xf32> to vector<16x10xf32>
    %265 = arith.mulf %255, %264 : vector<16x10xf32>
    %266 = vector.shape_cast %181 : vector<10xf32> to vector<1x10xf32>
    %267 = vector.broadcast %266 : vector<1x10xf32> to vector<16x10xf32>
    %268 = arith.mulf %265, %267 : vector<16x10xf32>
    %269 = vector.shape_cast %183 : vector<10xf32> to vector<1x10xf32>
    %270 = vector.broadcast %269 : vector<1x10xf32> to vector<16x10xf32>
    %271 = arith.addf %268, %270 : vector<16x10xf32>
    %c1_105 = arith.constant 1 : index
    %c0_106 = arith.constant 0 : index
    %c0_107 = arith.constant 0 : index
    %272 = vector.load %arg3[%c1_105, %c0_106, %c0_107] : memref<3x10x64xf32, #tpu.memory_space<vmem>>, vector<1x10x64xf32>
    %273 = vector.shape_cast %272 : vector<1x10x64xf32> to vector<10x64xf32>
    %c1_108 = arith.constant 1 : index
    %c0_109 = arith.constant 0 : index
    %274 = vector.load %arg4[%c1_108, %c0_109] : memref<3x64xf32, #tpu.memory_space<vmem>>, vector<1x64xf32>
    %275 = vector.shape_cast %274 : vector<1x64xf32> to vector<64xf32>
    %c1_110 = arith.constant 1 : index
    %c0_111 = arith.constant 0 : index
    %c0_112 = arith.constant 0 : index
    %276 = vector.load %arg5[%c1_110, %c0_111, %c0_112] : memref<3x64x10xf32, #tpu.memory_space<vmem>>, vector<1x64x10xf32>
    %277 = vector.shape_cast %276 : vector<1x64x10xf32> to vector<64x10xf32>
    %cst_113 = arith.constant dense<0.000000e+00> : vector<16x64xf32>
    %278 = tpu.matmul %271, %273, %cst_113 {dimension_numbers = #tpu.dot_dimension_numbers<[1], [0], [0], [1], [0, 0, 1, 1], [], []>} : vector<16x10xf32>, vector<10x64xf32>, vector<16x64xf32> -> vector<16x64xf32>
    %279 = vector.shape_cast %275 : vector<64xf32> to vector<1x64xf32>
    %280 = vector.broadcast %279 : vector<1x64xf32> to vector<16x64xf32>
    %281 = arith.addf %278, %280 : vector<16x64xf32>
    %cst_114 = arith.constant 0.000000e+00 : f32
    %282 = vector.broadcast %cst_114 : f32 to vector<16x64xf32>
    %283 = arith.maximumf %281, %282 : vector<16x64xf32>
    %cst_115 = arith.constant dense<0.000000e+00> : vector<16x10xf32>
    %284 = tpu.matmul %283, %277, %cst_115 {dimension_numbers = #tpu.dot_dimension_numbers<[1], [0], [0], [1], [0, 0, 1, 1], [], []>} : vector<16x64xf32>, vector<64x10xf32>, vector<16x10xf32> -> vector<16x10xf32>
    %285 = vector.shape_cast %179 : vector<10xf32> to vector<1x10xf32>
    %286 = vector.broadcast %285 : vector<1x10xf32> to vector<16x10xf32>
    %287 = arith.addf %284, %286 : vector<16x10xf32>
    %288 = arith.addf %271, %287 : vector<16x10xf32>
    %cst_116 = arith.constant dense<0.000000e+00> : vector<16xf32>
    %289 = vector.multi_reduction <add>, %288, %cst_116 [1] : vector<16x10xf32> to vector<16xf32>
    %290 = vector.shape_cast %289 : vector<16xf32> to vector<16x1xf32>
    %cst_117 = arith.constant 1.000000e+01 : f32
    %291 = vector.broadcast %cst_117 : f32 to vector<16x1xf32>
    %292 = arith.divf %290, %291 : vector<16x1xf32>
    %293 = vector.broadcast %292 : vector<16x1xf32> to vector<16x10xf32>
    %294 = arith.subf %288, %293 : vector<16x10xf32>
    %295 = arith.mulf %294, %294 : vector<16x10xf32>
    %cst_118 = arith.constant dense<0.000000e+00> : vector<16xf32>
    %296 = vector.multi_reduction <add>, %295, %cst_118 [1] : vector<16x10xf32> to vector<16xf32>
    %297 = vector.shape_cast %296 : vector<16xf32> to vector<16x1xf32>
    %cst_119 = arith.constant 1.000000e+01 : f32
    %298 = vector.broadcast %cst_119 : f32 to vector<16x1xf32>
    %299 = arith.divf %297, %298 : vector<16x1xf32>
    %cst_120 = arith.constant 9.99999974E-6 : f32
    %300 = vector.broadcast %cst_120 : f32 to vector<16x1xf32>
    %301 = arith.addf %299, %300 : vector<16x1xf32>
    %302 = math.rsqrt %301 : vector<16x1xf32>
    %303 = vector.broadcast %302 : vector<16x1xf32> to vector<16x10xf32>
    %304 = arith.mulf %294, %303 : vector<16x10xf32>
    %305 = vector.shape_cast %185 : vector<10xf32> to vector<1x10xf32>
    %306 = vector.broadcast %305 : vector<1x10xf32> to vector<16x10xf32>
    %307 = arith.mulf %304, %306 : vector<16x10xf32>
    %308 = vector.shape_cast %187 : vector<10xf32> to vector<1x10xf32>
    %309 = vector.broadcast %308 : vector<1x10xf32> to vector<16x10xf32>
    %310 = arith.addf %307, %309 : vector<16x10xf32>
    %c8_121 = arith.constant 8 : index
    %c0_122 = arith.constant 0 : index
    %c0_123 = arith.constant 0 : index
    %311 = vector.load %arg1[%c8_121, %c0_122, %c0_123] : memref<12x10x10xf32, #tpu.memory_space<vmem>>, vector<1x10x10xf32>
    %312 = vector.shape_cast %311 : vector<1x10x10xf32> to vector<10x10xf32>
    %c9_124 = arith.constant 9 : index
    %c0_125 = arith.constant 0 : index
    %c0_126 = arith.constant 0 : index
    %313 = vector.load %arg1[%c9_124, %c0_125, %c0_126] : memref<12x10x10xf32, #tpu.memory_space<vmem>>, vector<1x10x10xf32>
    %314 = vector.shape_cast %313 : vector<1x10x10xf32> to vector<10x10xf32>
    %c10_127 = arith.constant 10 : index
    %c0_128 = arith.constant 0 : index
    %c0_129 = arith.constant 0 : index
    %315 = vector.load %arg1[%c10_127, %c0_128, %c0_129] : memref<12x10x10xf32, #tpu.memory_space<vmem>>, vector<1x10x10xf32>
    %316 = vector.shape_cast %315 : vector<1x10x10xf32> to vector<10x10xf32>
    %c11_130 = arith.constant 11 : index
    %c0_131 = arith.constant 0 : index
    %c0_132 = arith.constant 0 : index
    %317 = vector.load %arg1[%c11_130, %c0_131, %c0_132] : memref<12x10x10xf32, #tpu.memory_space<vmem>>, vector<1x10x10xf32>
    %318 = vector.shape_cast %317 : vector<1x10x10xf32> to vector<10x10xf32>
    %c18 = arith.constant 18 : index
    %c0_133 = arith.constant 0 : index
    %319 = vector.load %arg2[%c18, %c0_133] : memref<27x10xf32, #tpu.memory_space<vmem>>, vector<1x10xf32>
    %320 = vector.shape_cast %319 : vector<1x10xf32> to vector<10xf32>
    %c19 = arith.constant 19 : index
    %c0_134 = arith.constant 0 : index
    %321 = vector.load %arg2[%c19, %c0_134] : memref<27x10xf32, #tpu.memory_space<vmem>>, vector<1x10xf32>
    %322 = vector.shape_cast %321 : vector<1x10xf32> to vector<10xf32>
    %c20 = arith.constant 20 : index
    %c0_135 = arith.constant 0 : index
    %323 = vector.load %arg2[%c20, %c0_135] : memref<27x10xf32, #tpu.memory_space<vmem>>, vector<1x10xf32>
    %324 = vector.shape_cast %323 : vector<1x10xf32> to vector<10xf32>
    %c21 = arith.constant 21 : index
    %c0_136 = arith.constant 0 : index
    %325 = vector.load %arg2[%c21, %c0_136] : memref<27x10xf32, #tpu.memory_space<vmem>>, vector<1x10xf32>
    %326 = vector.shape_cast %325 : vector<1x10xf32> to vector<10xf32>
    %c22 = arith.constant 22 : index
    %c0_137 = arith.constant 0 : index
    %327 = vector.load %arg2[%c22, %c0_137] : memref<27x10xf32, #tpu.memory_space<vmem>>, vector<1x10xf32>
    %328 = vector.shape_cast %327 : vector<1x10xf32> to vector<10xf32>
    %c23 = arith.constant 23 : index
    %c0_138 = arith.constant 0 : index
    %329 = vector.load %arg2[%c23, %c0_138] : memref<27x10xf32, #tpu.memory_space<vmem>>, vector<1x10xf32>
    %330 = vector.shape_cast %329 : vector<1x10xf32> to vector<10xf32>
    %c24 = arith.constant 24 : index
    %c0_139 = arith.constant 0 : index
    %331 = vector.load %arg2[%c24, %c0_139] : memref<27x10xf32, #tpu.memory_space<vmem>>, vector<1x10xf32>
    %332 = vector.shape_cast %331 : vector<1x10xf32> to vector<10xf32>
    %c25 = arith.constant 25 : index
    %c0_140 = arith.constant 0 : index
    %333 = vector.load %arg2[%c25, %c0_140] : memref<27x10xf32, #tpu.memory_space<vmem>>, vector<1x10xf32>
    %334 = vector.shape_cast %333 : vector<1x10xf32> to vector<10xf32>
    %c26 = arith.constant 26 : index
    %c0_141 = arith.constant 0 : index
    %335 = vector.load %arg2[%c26, %c0_141] : memref<27x10xf32, #tpu.memory_space<vmem>>, vector<1x10xf32>
    %336 = vector.shape_cast %335 : vector<1x10xf32> to vector<10xf32>
    %cst_142 = arith.constant dense<0.000000e+00> : vector<16x10xf32>
    %337 = tpu.matmul %310, %312, %cst_142 {dimension_numbers = #tpu.dot_dimension_numbers<[1], [0], [0], [1], [0, 0, 1, 1], [], []>} : vector<16x10xf32>, vector<10x10xf32>, vector<16x10xf32> -> vector<16x10xf32>
    %338 = vector.shape_cast %320 : vector<10xf32> to vector<1x10xf32>
    %339 = vector.broadcast %338 : vector<1x10xf32> to vector<16x10xf32>
    %340 = arith.addf %337, %339 : vector<16x10xf32>
    %341 = vector.shape_cast %340 : vector<16x10xf32> to vector<2x8x10xf32>
    %cst_143 = arith.constant dense<0.000000e+00> : vector<16x10xf32>
    %342 = tpu.matmul %310, %314, %cst_143 {dimension_numbers = #tpu.dot_dimension_numbers<[1], [0], [0], [1], [0, 0, 1, 1], [], []>} : vector<16x10xf32>, vector<10x10xf32>, vector<16x10xf32> -> vector<16x10xf32>
    %343 = vector.shape_cast %322 : vector<10xf32> to vector<1x10xf32>
    %344 = vector.broadcast %343 : vector<1x10xf32> to vector<16x10xf32>
    %345 = arith.addf %342, %344 : vector<16x10xf32>
    %346 = vector.shape_cast %345 : vector<16x10xf32> to vector<2x8x10xf32>
    %cst_144 = arith.constant dense<0.000000e+00> : vector<16x10xf32>
    %347 = tpu.matmul %310, %316, %cst_144 {dimension_numbers = #tpu.dot_dimension_numbers<[1], [0], [0], [1], [0, 0, 1, 1], [], []>} : vector<16x10xf32>, vector<10x10xf32>, vector<16x10xf32> -> vector<16x10xf32>
    %348 = vector.shape_cast %324 : vector<10xf32> to vector<1x10xf32>
    %349 = vector.broadcast %348 : vector<1x10xf32> to vector<16x10xf32>
    %350 = arith.addf %347, %349 : vector<16x10xf32>
    %351 = vector.shape_cast %350 : vector<16x10xf32> to vector<2x8x10xf32>
    %cst_145 = arith.constant 0.000000e+00 : f32
    %352 = vector.broadcast %cst_145 : f32 to vector<2x8x10xf32>
    %cst_146 = arith.constant 0.000000e+00 : f32
    %353 = vector.shape_cast %7 : vector<1x1x10xi1> to vector<1x1x10xi1>
    %354 = vector.broadcast %353 : vector<1x1x10xi1> to vector<2x8x10xi1>
    %355 = vector.broadcast %cst_146 : f32 to vector<2x8x10xf32>
    %356 = arith.select %354, %341, %355 : vector<2x8x10xi1>, vector<2x8x10xf32>
    %cst_147 = arith.constant 0.000000e+00 : f32
    %357 = vector.shape_cast %7 : vector<1x1x10xi1> to vector<1x1x10xi1>
    %358 = vector.broadcast %357 : vector<1x1x10xi1> to vector<2x8x10xi1>
    %359 = vector.broadcast %cst_147 : f32 to vector<2x8x10xf32>
    %360 = arith.select %358, %351, %359 : vector<2x8x10xi1>, vector<2x8x10xf32>
    "tpu.trace_start"() <{level = 10 : i32, message = "nse,nte->nst"}> : () -> ()
    %cst_148 = arith.constant dense<0.000000e+00> : vector<2x8x8xf32>
    %361 = tpu.matmul %356, %346, %cst_148 {dimension_numbers = #tpu.dot_dimension_numbers<[2], [2], [1], [1], [0, 0, 0, 1, 1, 1], [0], [0]>} : vector<2x8x10xf32>, vector<2x8x10xf32>, vector<2x8x8xf32> -> vector<2x8x8xf32>
    "tpu.trace_stop"() : () -> ()
    %cst_149 = arith.constant dense<0xFF800000> : vector<2x8xf32>
    %362 = vector.multi_reduction <maximumf>, %361, %cst_149 [2] : vector<2x8x8xf32> to vector<2x8xf32>
    %363 = vector.shape_cast %362 : vector<2x8xf32> to vector<2x8x1xf32>
    %364 = vector.broadcast %363 : vector<2x8x1xf32> to vector<2x8x8xf32>
    %365 = arith.subf %361, %364 : vector<2x8x8xf32>
    %366 = math.exp %365 : vector<2x8x8xf32>
    %cst_150 = arith.constant dense<0.000000e+00> : vector<2x8xf32>
    %367 = vector.multi_reduction <add>, %366, %cst_150 [2] : vector<2x8x8xf32> to vector<2x8xf32>
    %368 = vector.shape_cast %367 : vector<2x8xf32> to vector<2x8x1xf32>
    %369 = vector.broadcast %368 : vector<2x8x1xf32> to vector<2x8x8xf32>
    %370 = arith.divf %366, %369 : vector<2x8x8xf32>
    "tpu.trace_start"() <{level = 10 : i32, message = "nst,nte->nse"}> : () -> ()
    %cst_151 = arith.constant dense<0.000000e+00> : vector<2x8x10xf32>
    %371 = tpu.matmul %370, %360, %cst_151 {dimension_numbers = #tpu.dot_dimension_numbers<[2], [1], [1], [2], [0, 0, 0, 1, 1, 2], [0], [0]>} : vector<2x8x8xf32>, vector<2x8x10xf32>, vector<2x8x10xf32> -> vector<2x8x10xf32>
    "tpu.trace_stop"() : () -> ()
    %372 = arith.addf %352, %371 : vector<2x8x10xf32>
    %cst_152 = arith.constant 0.000000e+00 : f32
    %373 = vector.shape_cast %12 : vector<1x1x10xi1> to vector<1x1x10xi1>
    %374 = vector.broadcast %373 : vector<1x1x10xi1> to vector<2x8x10xi1>
    %375 = vector.broadcast %cst_152 : f32 to vector<2x8x10xf32>
    %376 = arith.select %374, %341, %375 : vector<2x8x10xi1>, vector<2x8x10xf32>
    %cst_153 = arith.constant 0.000000e+00 : f32
    %377 = vector.shape_cast %12 : vector<1x1x10xi1> to vector<1x1x10xi1>
    %378 = vector.broadcast %377 : vector<1x1x10xi1> to vector<2x8x10xi1>
    %379 = vector.broadcast %cst_153 : f32 to vector<2x8x10xf32>
    %380 = arith.select %378, %351, %379 : vector<2x8x10xi1>, vector<2x8x10xf32>
    "tpu.trace_start"() <{level = 10 : i32, message = "nse,nte->nst"}> : () -> ()
    %cst_154 = arith.constant dense<0.000000e+00> : vector<2x8x8xf32>
    %381 = tpu.matmul %376, %346, %cst_154 {dimension_numbers = #tpu.dot_dimension_numbers<[2], [2], [1], [1], [0, 0, 0, 1, 1, 1], [0], [0]>} : vector<2x8x10xf32>, vector<2x8x10xf32>, vector<2x8x8xf32> -> vector<2x8x8xf32>
    "tpu.trace_stop"() : () -> ()
    %cst_155 = arith.constant dense<0xFF800000> : vector<2x8xf32>
    %382 = vector.multi_reduction <maximumf>, %381, %cst_155 [2] : vector<2x8x8xf32> to vector<2x8xf32>
    %383 = vector.shape_cast %382 : vector<2x8xf32> to vector<2x8x1xf32>
    %384 = vector.broadcast %383 : vector<2x8x1xf32> to vector<2x8x8xf32>
    %385 = arith.subf %381, %384 : vector<2x8x8xf32>
    %386 = math.exp %385 : vector<2x8x8xf32>
    %cst_156 = arith.constant dense<0.000000e+00> : vector<2x8xf32>
    %387 = vector.multi_reduction <add>, %386, %cst_156 [2] : vector<2x8x8xf32> to vector<2x8xf32>
    %388 = vector.shape_cast %387 : vector<2x8xf32> to vector<2x8x1xf32>
    %389 = vector.broadcast %388 : vector<2x8x1xf32> to vector<2x8x8xf32>
    %390 = arith.divf %386, %389 : vector<2x8x8xf32>
    "tpu.trace_start"() <{level = 10 : i32, message = "nst,nte->nse"}> : () -> ()
    %cst_157 = arith.constant dense<0.000000e+00> : vector<2x8x10xf32>
    %391 = tpu.matmul %390, %380, %cst_157 {dimension_numbers = #tpu.dot_dimension_numbers<[2], [1], [1], [2], [0, 0, 0, 1, 1, 2], [0], [0]>} : vector<2x8x8xf32>, vector<2x8x10xf32>, vector<2x8x10xf32> -> vector<2x8x10xf32>
    "tpu.trace_stop"() : () -> ()
    %392 = arith.addf %372, %391 : vector<2x8x10xf32>
    %393 = vector.shape_cast %392 : vector<2x8x10xf32> to vector<16x10xf32>
    %cst_158 = arith.constant dense<0.000000e+00> : vector<16x10xf32>
    %394 = tpu.matmul %393, %318, %cst_158 {dimension_numbers = #tpu.dot_dimension_numbers<[1], [0], [0], [1], [0, 0, 1, 1], [], []>} : vector<16x10xf32>, vector<10x10xf32>, vector<16x10xf32> -> vector<16x10xf32>
    %395 = vector.shape_cast %326 : vector<10xf32> to vector<1x10xf32>
    %396 = vector.broadcast %395 : vector<1x10xf32> to vector<16x10xf32>
    %397 = arith.addf %394, %396 : vector<16x10xf32>
    %398 = arith.addf %310, %397 : vector<16x10xf32>
    %cst_159 = arith.constant dense<0.000000e+00> : vector<16xf32>
    %399 = vector.multi_reduction <add>, %398, %cst_159 [1] : vector<16x10xf32> to vector<16xf32>
    %400 = vector.shape_cast %399 : vector<16xf32> to vector<16x1xf32>
    %cst_160 = arith.constant 1.000000e+01 : f32
    %401 = vector.broadcast %cst_160 : f32 to vector<16x1xf32>
    %402 = arith.divf %400, %401 : vector<16x1xf32>
    %403 = vector.broadcast %402 : vector<16x1xf32> to vector<16x10xf32>
    %404 = arith.subf %398, %403 : vector<16x10xf32>
    %405 = arith.mulf %404, %404 : vector<16x10xf32>
    %cst_161 = arith.constant dense<0.000000e+00> : vector<16xf32>
    %406 = vector.multi_reduction <add>, %405, %cst_161 [1] : vector<16x10xf32> to vector<16xf32>
    %407 = vector.shape_cast %406 : vector<16xf32> to vector<16x1xf32>
    %cst_162 = arith.constant 1.000000e+01 : f32
    %408 = vector.broadcast %cst_162 : f32 to vector<16x1xf32>
    %409 = arith.divf %407, %408 : vector<16x1xf32>
    %cst_163 = arith.constant 9.99999974E-6 : f32
    %410 = vector.broadcast %cst_163 : f32 to vector<16x1xf32>
    %411 = arith.addf %409, %410 : vector<16x1xf32>
    %412 = math.rsqrt %411 : vector<16x1xf32>
    %413 = vector.broadcast %412 : vector<16x1xf32> to vector<16x10xf32>
    %414 = arith.mulf %404, %413 : vector<16x10xf32>
    %415 = vector.shape_cast %330 : vector<10xf32> to vector<1x10xf32>
    %416 = vector.broadcast %415 : vector<1x10xf32> to vector<16x10xf32>
    %417 = arith.mulf %414, %416 : vector<16x10xf32>
    %418 = vector.shape_cast %332 : vector<10xf32> to vector<1x10xf32>
    %419 = vector.broadcast %418 : vector<1x10xf32> to vector<16x10xf32>
    %420 = arith.addf %417, %419 : vector<16x10xf32>
    %c2_164 = arith.constant 2 : index
    %c0_165 = arith.constant 0 : index
    %c0_166 = arith.constant 0 : index
    %421 = vector.load %arg3[%c2_164, %c0_165, %c0_166] : memref<3x10x64xf32, #tpu.memory_space<vmem>>, vector<1x10x64xf32>
    %422 = vector.shape_cast %421 : vector<1x10x64xf32> to vector<10x64xf32>
    %c2_167 = arith.constant 2 : index
    %c0_168 = arith.constant 0 : index
    %423 = vector.load %arg4[%c2_167, %c0_168] : memref<3x64xf32, #tpu.memory_space<vmem>>, vector<1x64xf32>
    %424 = vector.shape_cast %423 : vector<1x64xf32> to vector<64xf32>
    %c2_169 = arith.constant 2 : index
    %c0_170 = arith.constant 0 : index
    %c0_171 = arith.constant 0 : index
    %425 = vector.load %arg5[%c2_169, %c0_170, %c0_171] : memref<3x64x10xf32, #tpu.memory_space<vmem>>, vector<1x64x10xf32>
    %426 = vector.shape_cast %425 : vector<1x64x10xf32> to vector<64x10xf32>
    %cst_172 = arith.constant dense<0.000000e+00> : vector<16x64xf32>
    %427 = tpu.matmul %420, %422, %cst_172 {dimension_numbers = #tpu.dot_dimension_numbers<[1], [0], [0], [1], [0, 0, 1, 1], [], []>} : vector<16x10xf32>, vector<10x64xf32>, vector<16x64xf32> -> vector<16x64xf32>
    %428 = vector.shape_cast %424 : vector<64xf32> to vector<1x64xf32>
    %429 = vector.broadcast %428 : vector<1x64xf32> to vector<16x64xf32>
    %430 = arith.addf %427, %429 : vector<16x64xf32>
    %cst_173 = arith.constant 0.000000e+00 : f32
    %431 = vector.broadcast %cst_173 : f32 to vector<16x64xf32>
    %432 = arith.maximumf %430, %431 : vector<16x64xf32>
    %cst_174 = arith.constant dense<0.000000e+00> : vector<16x10xf32>
    %433 = tpu.matmul %432, %426, %cst_174 {dimension_numbers = #tpu.dot_dimension_numbers<[1], [0], [0], [1], [0, 0, 1, 1], [], []>} : vector<16x64xf32>, vector<64x10xf32>, vector<16x10xf32> -> vector<16x10xf32>
    %434 = vector.shape_cast %328 : vector<10xf32> to vector<1x10xf32>
    %435 = vector.broadcast %434 : vector<1x10xf32> to vector<16x10xf32>
    %436 = arith.addf %433, %435 : vector<16x10xf32>
    %437 = arith.addf %420, %436 : vector<16x10xf32>
    %cst_175 = arith.constant dense<0.000000e+00> : vector<16xf32>
    %438 = vector.multi_reduction <add>, %437, %cst_175 [1] : vector<16x10xf32> to vector<16xf32>
    %439 = vector.shape_cast %438 : vector<16xf32> to vector<16x1xf32>
    %cst_176 = arith.constant 1.000000e+01 : f32
    %440 = vector.broadcast %cst_176 : f32 to vector<16x1xf32>
    %441 = arith.divf %439, %440 : vector<16x1xf32>
    %442 = vector.broadcast %441 : vector<16x1xf32> to vector<16x10xf32>
    %443 = arith.subf %437, %442 : vector<16x10xf32>
    %444 = arith.mulf %443, %443 : vector<16x10xf32>
    %cst_177 = arith.constant dense<0.000000e+00> : vector<16xf32>
    %445 = vector.multi_reduction <add>, %444, %cst_177 [1] : vector<16x10xf32> to vector<16xf32>
    %446 = vector.shape_cast %445 : vector<16xf32> to vector<16x1xf32>
    %cst_178 = arith.constant 1.000000e+01 : f32
    %447 = vector.broadcast %cst_178 : f32 to vector<16x1xf32>
    %448 = arith.divf %446, %447 : vector<16x1xf32>
    %cst_179 = arith.constant 9.99999974E-6 : f32
    %449 = vector.broadcast %cst_179 : f32 to vector<16x1xf32>
    %450 = arith.addf %448, %449 : vector<16x1xf32>
    %451 = math.rsqrt %450 : vector<16x1xf32>
    %452 = vector.broadcast %451 : vector<16x1xf32> to vector<16x10xf32>
    %453 = arith.mulf %443, %452 : vector<16x10xf32>
    %454 = vector.shape_cast %334 : vector<10xf32> to vector<1x10xf32>
    %455 = vector.broadcast %454 : vector<1x10xf32> to vector<16x10xf32>
    %456 = arith.mulf %453, %455 : vector<16x10xf32>
    %457 = vector.shape_cast %336 : vector<10xf32> to vector<1x10xf32>
    %458 = vector.broadcast %457 : vector<1x10xf32> to vector<16x10xf32>
    %459 = arith.addf %456, %458 : vector<16x10xf32>
    %460 = vector.shape_cast %459 : vector<16x10xf32> to vector<2x8x10xf32>
    %cst_180 = arith.constant dense<0.000000e+00> : vector<8x10xf32>
    %461 = vector.multi_reduction <add>, %460, %cst_180 [0] : vector<2x8x10xf32> to vector<8x10xf32>
    %cst_181 = arith.constant 2.000000e+00 : f32
    %462 = vector.broadcast %cst_181 : f32 to vector<8x10xf32>
    %463 = arith.divf %461, %462 : vector<8x10xf32>
    %c0_182 = arith.constant 0 : index
    %c0_183 = arith.constant 0 : index
    %464 = vector.load %arg6[%c0_182, %c0_183] : memref<2x10xf32, #tpu.memory_space<vmem>>, vector<1x10xf32>
    %c1_184 = arith.constant 1 : index
    %c0_185 = arith.constant 0 : index
    %465 = vector.load %arg6[%c1_184, %c0_185] : memref<2x10xf32, #tpu.memory_space<vmem>>, vector<1x1xf32>
    %cst_186 = arith.constant dense<0.000000e+00> : vector<1x8xf32>
    %466 = tpu.matmul %464, %463, %cst_186 {dimension_numbers = #tpu.dot_dimension_numbers<[1], [1], [0], [0], [0, 0, 1, 0], [], []>} : vector<1x10xf32>, vector<8x10xf32>, vector<1x8xf32> -> vector<1x8xf32>
    %467 = vector.broadcast %465 : vector<1x1xf32> to vector<1x8xf32>
    %468 = arith.addf %466, %467 : vector<1x8xf32>
    %c0_187 = arith.constant 0 : index
    %c0_188 = arith.constant 0 : index
    %469 = vector.load %arg7[%c0_187, %c0_188] : memref<1x8xf32, #tpu.memory_space<vmem>>, vector<1x8xf32>
    tpu.vector_store %arg7[%c0_187, %c0_188], %468 {strides = array<i32>} : memref<1x8xf32, #tpu.memory_space<vmem>>, vector<1x8xf32>,
    return
  }
}

</mosaic_0001>

<llo_original>
// kernel: transformer_model.1
$region0: #{transformer_model.1}
  #allocation0 [shape = 'u32[]', space=smem, size = 0x4, offset = 0x4, fixed_abs, tag = 'smem constant byte address 0x4 - core index']
  #allocation1 [shape = 'u32[144,128]{1,0:T(1,128)}', space=vmem, size = 0x12000, scoped, tag = 'internal scratch']
  %s0 = inlined_call_operand.vmem [shape: f32[2,8,10], index: 0, kind: input, shape index: {}]
  %s1 = inlined_call_operand.vmem [shape: f32[12,10,10], index: 1, kind: input, shape index: {}]
  %s2 = inlined_call_operand.vmem [shape: f32[27,10], index: 2, kind: input, shape index: {}]
  %s3 = inlined_call_operand.vmem [shape: f32[3,10,64], index: 3, kind: input, shape index: {}]
  %s4 = inlined_call_operand.vmem [shape: f32[3,64], index: 4, kind: input, shape index: {}]
  %s5 = inlined_call_operand.vmem [shape: f32[3,64,10], index: 5, kind: input, shape index: {}]
  %s6 = inlined_call_operand.vmem [shape: f32[2,10], index: 6, kind: input, shape index: {}]
  %s7 = inlined_call_operand.hbm [shape: f32[1,8], index: 7, kind: output, shape index: {}]
  %s8 = sld [smem:[#allocation0]]
  $region38: #{transformer_model.1} parent=0
    _
  %s10 = ssub.s32 1, %s8
  %s11 = scalar_select 0, %s10, %s8
  $region1: #{transformer_model.1} parent=0
    #allocation2 [shape = 'u8[512]{0}', space=vmem, size = 0x400, scoped, tag = 'output window, operand 0, single buffered']
    #allocation3 [shape = 's32[1]{0}', space=sflag, size = 0x4, scoped, tag = 'scoped memory for transformer_model.1']
    %12 = vsyncpa [#allocation3], 0
    // Predicated region
    $region2: #{transformer_model.1} parent=1 // pred_check
      _
    $region3: #{transformer_model.1} parent=1 // pred_check_branch
      %14 = sbr.rel (0) target = $region5
    $region4: #{transformer_model.1} parent=1 // pred_region
      _
    $region5: #{transformer_model.1} parent=1 // pred_fallthru
      _
    // Predicated region
    $region6: #{transformer_model.1} parent=1 // pred_check
      _
    $region7: #{transformer_model.1} parent=1 // pred_check_branch
      %16 = sbr.rel (0) target = $region9
    $region8: #{transformer_model.1} parent=1 // pred_region
      _
    $region9: #{transformer_model.1} parent=1 // pred_fallthru
      _
    // Predicated region
    $region10: #{transformer_model.1} parent=1 // pred_check
      _
    $region11: #{transformer_model.1} parent=1 // pred_check_branch
      %18 = sbr.rel (0) target = $region13
    $region12: #{transformer_model.1} parent=1 // pred_region
      _
    $region13: #{transformer_model.1} parent=1 // pred_fallthru
      _
    // Predicated region
    $region14: #{transformer_model.1} parent=1 // pred_check
      _
    $region15: #{transformer_model.1} parent=1 // pred_check_branch
      %20 = sbr.rel (0) target = $region17
    $region16: #{transformer_model.1} parent=1 // pred_region
      _
    $region17: #{transformer_model.1} parent=1 // pred_fallthru
      _
    // Predicated region
    $region18: #{transformer_model.1} parent=1 // pred_check
      _
    $region19: #{transformer_model.1} parent=1 // pred_check_branch
      %22 = sbr.rel (0) target = $region21
    $region20: #{transformer_model.1} parent=1 // pred_region
      _
    $region21: #{transformer_model.1} parent=1 // pred_fallthru
      _
    // Predicated region
    $region22: #{transformer_model.1} parent=1 // pred_check
      _
    $region23: #{transformer_model.1} parent=1 // pred_check_branch
      %24 = sbr.rel (0) target = $region25
    $region24: #{transformer_model.1} parent=1 // pred_region
      _
    $region25: #{transformer_model.1} parent=1 // pred_fallthru
      _
    // Predicated region
    $region26: #{transformer_model.1} parent=1 // pred_check
      _
    $region27: #{transformer_model.1} parent=1 // pred_check_branch
      %26 = sbr.rel (0) target = $region29
    $region28: #{transformer_model.1} parent=1 // pred_region
      _
    $region29: #{transformer_model.1} parent=1 // pred_fallthru
      _
    %v27 = vld [vmem:[%s0] sm:$0xff]
    %v28 = vld [vmem:[%s0 + $0x8] sm:$0xff]
    %v29 = vlaneseq
    %v30 = vand.u32 %v29, 127
    %vm31 = vcmp.ge.s32.totalorder %v30, 0
    %vm32 = vcmp.lt.s32.totalorder %v30, 5
    %vm33 = vmand %vm31, %vm32
    %vm34 = vcmp.ge.s32.totalorder %v30, 5
    %vm35 = vcmp.lt.s32.totalorder %v30, 10
    %vm36 = vmand %vm34, %vm35
    %v37 = vld [vmem:[%s1] sm:$0xff]
    %v38 = vld [vmem:[%s1 + $0x8] sm:$0x3]
    %s39 = scalar_lea.vmem %s1, 16
    %v40 = vld [vmem:[%s39] sm:$0xff]
    %v41 = vld [vmem:[%s39 + $0x8] sm:$0x3]
    %s42 = scalar_lea.vmem %s1, 32
    %v43 = vld [vmem:[%s42] sm:$0xff]
    %v44 = vld [vmem:[%s42 + $0x8] sm:$0x3]
    %s45 = scalar_lea.vmem %s1, 48
    %v46 = vld [vmem:[%s45] sm:$0xff]
    %v47 = vld [vmem:[%s45 + $0x8] sm:$0x3]
    %v48 = vld [vmem:[%s2] sm:$0x1]
    %v49 = vld [vmem:[%s2 + $0x1] sm:$0x1]
    %v50 = vld [vmem:[%s2 + $0x2] sm:$0x1]
    %v51 = vld [vmem:[%s2 + $0x3] sm:$0x1]
    %v52 = vld [vmem:[%s2 + $0x4] sm:$0x1]
    %v53 = vld [vmem:[%s2 + $0x5] sm:$0x1]
    %v54 = vld [vmem:[%s2 + $0x6] sm:$0x1]
    %v55 = vld [vmem:[%s2 + $0x7] sm:$0x1]
    %v56 = vld [vmem:[%s2 + $0x8] sm:$0x1]
    %v57 = vlaneseq
    %v58 = vshrl.u32 %v57, 7
    %v59 = vsub.s32 0, %v58
    %v60 = vrot.slane %v48, %v59
    %vm61 = vcmask 80896
    %v63 = vsel %vm61, %v27, 0
    %v66 = vsel %vm61, %v28, 0
    %vm68 = vcmask 1041408
    %v70 = vsel %vm68, %v38, 0
    %72 = vmatprep.subr.mxu0 0.0
    %73 = vmatpush1.msra.mxu0 %v37
    %74 = vmatprep.subr.mxu0 0.0
    %75 = vmatpush1.msra.mxu0 %v70
    %76 = vmatprep.subr.mxu0 0.0
    %77 = vmatpush1.msra.mxu0 0.0
    %78 = vmatprep.subr.mxu0 0.0
    %79 = vmatpush1.msra.mxu0 0.0
    %80 = vmatprep.subr.mxu0 0.0
    %81 = vmatpush1.msra.mxu0 0.0
    %82 = vmatprep.subr.mxu0 0.0
    %83 = vmatpush1.msra.mxu0 0.0
    %84 = vmatprep.subr.mxu0 0.0
    %85 = vmatpush1.msra.mxu0 0.0
    %86 = vmatprep.subr.mxu0 0.0
    %87 = vmatpush1.msra.mxu0 0.0
    %88 = vmatprep.subr.mxu0 0.0
    %89 = vmatpush1.msra.mxu0 0.0
    %90 = vmatprep.subr.mxu0 0.0
    %91 = vmatpush1.msra.mxu0 0.0
    %92 = vmatprep.subr.mxu0 0.0
    %93 = vmatpush1.msra.mxu0 0.0
    %94 = vmatprep.subr.mxu0 0.0
    %95 = vmatpush1.msra.mxu0 0.0
    %96 = vmatprep.subr.mxu0 0.0
    %97 = vmatpush1.msra.mxu0 0.0
    %98 = vmatprep.subr.mxu0 0.0
    %99 = vmatpush1.msra.mxu0 0.0
    %100 = vmatprep.subr.mxu0 0.0
    %101 = vmatpush1.msra.mxu0 0.0
    %102 = vmatprep.subr.mxu0 0.0
    %103 = vmatpush1.msra.mxu0 0.0
    %104 = vmatprep.subr.mxu0 0.0
    %105 = vmatpush1.msra.mxu0 0.0
    %106 = vmatprep.subr.mxu0 0.0
    %107 = vmatpush1.msra.mxu0 0.0
    %108 = vmatprep.subr.mxu0 0.0
    %109 = vmatpush1.msra.mxu0 0.0
    %110 = vmatprep.subr.mxu0 0.0
    %111 = vmatpush1.msra.mxu0 0.0
    %112 = vmatprep.subr.mxu0 0.0
    %113 = vmatpush1.msra.mxu0 0.0
    %114 = vmatprep.subr.mxu0 0.0
    %115 = vmatpush1.msra.mxu0 0.0
    %116 = vmatprep.subr.mxu0 0.0
    %117 = vmatpush1.msra.mxu0 0.0
    %118 = vmatprep.subr.mxu0 0.0
    %119 = vmatpush1.msra.mxu0 0.0
    %120 = vmatprep.subr.mxu0 0.0
    %121 = vmatpush1.msra.mxu0 0.0
    %122 = vmatprep.subr.mxu0 0.0
    %123 = vmatpush1.msra.mxu0 0.0
    %124 = vmatprep.subr.mxu0 0.0
    %125 = vmatpush1.msra.mxu0 0.0
    %126 = vmatprep.subr.mxu0 0.0
    %127 = vmatpush1.msra.mxu0 0.0
    %128 = vmatprep.subr.mxu0 0.0
    %129 = vmatpush1.msra.mxu0 0.0
    %130 = vmatprep.subr.mxu0 0.0
    %131 = vmatpush1.msra.mxu0 0.0
    %132 = vmatprep.subr.mxu0 0.0
    %133 = vmatpush1.msra.mxu0 0.0
    %134 = vmatprep.subr.mxu0 0.0
    %135 = vmatpush1.msra.mxu0 0.0
    %136 = vmatprep.mubr.f32.mxu0 0.0
    %137 = vmatmul.mubr.f32.gmra.mrb[0].mxu0 %v63
    %v138 = vpop.f32.mrb[0].mxu0
    %v139 = vadd.f32 %v60, %v138
    %v140 = vpop.f32.mrb[0].mxu0
    %141 = vmatprep.mubr.f32.mxu0 0.0
    %142 = vmatmul.mubr.f32.gmra.mrb[0].mxu0 %v66
    %v143 = vpop.f32.mrb[0].mxu0
    %v144 = vadd.f32 %v60, %v143
    %v145 = vpop.f32.mrb[0].mxu0
    %146 = vdwg.mxu0
    %v147 = vlaneseq
    %v148 = vshrl.u32 %v147, 7
    %v149 = vsub.s32 0, %v148
    %v150 = vrot.slane %v49, %v149
    %v152 = vsel %vm68, %v41, 0
    %154 = vmatprep.subr.mxu0 0.0
    %155 = vmatpush1.msra.mxu0 %v40
    %156 = vmatprep.subr.mxu0 0.0
    %157 = vmatpush1.msra.mxu0 %v152
    %158 = vmatprep.subr.mxu0 0.0
    %159 = vmatpush1.msra.mxu0 0.0
    %160 = vmatprep.subr.mxu0 0.0
    %161 = vmatpush1.msra.mxu0 0.0
    %162 = vmatprep.subr.mxu0 0.0
    %163 = vmatpush1.msra.mxu0 0.0
    %164 = vmatprep.subr.mxu0 0.0
    %165 = vmatpush1.msra.mxu0 0.0
    %166 = vmatprep.subr.mxu0 0.0
    %167 = vmatpush1.msra.mxu0 0.0
    %168 = vmatprep.subr.mxu0 0.0
    %169 = vmatpush1.msra.mxu0 0.0
    %170 = vmatprep.subr.mxu0 0.0
    %171 = vmatpush1.msra.mxu0 0.0
    %172 = vmatprep.subr.mxu0 0.0
    %173 = vmatpush1.msra.mxu0 0.0
    %174 = vmatprep.subr.mxu0 0.0
    %175 = vmatpush1.msra.mxu0 0.0
    %176 = vmatprep.subr.mxu0 0.0
    %177 = vmatpush1.msra.mxu0 0.0
    %178 = vmatprep.subr.mxu0 0.0
    %179 = vmatpush1.msra.mxu0 0.0
    %180 = vmatprep.subr.mxu0 0.0
    %181 = vmatpush1.msra.mxu0 0.0
    %182 = vmatprep.subr.mxu0 0.0
    %183 = vmatpush1.msra.mxu0 0.0
    %184 = vmatprep.subr.mxu0 0.0
    %185 = vmatpush1.msra.mxu0 0.0
    %186 = vmatprep.subr.mxu0 0.0
    %187 = vmatpush1.msra.mxu0 0.0
    %188 = vmatprep.subr.mxu0 0.0
    %189 = vmatpush1.msra.mxu0 0.0
    %190 = vmatprep.subr.mxu0 0.0
    %191 = vmatpush1.msra.mxu0 0.0
    %192 = vmatprep.subr.mxu0 0.0
    %193 = vmatpush1.msra.mxu0 0.0
    %194 = vmatprep.subr.mxu0 0.0
    %195 = vmatpush1.msra.mxu0 0.0
    %196 = vmatprep.subr.mxu0 0.0
    %197 = vmatpush1.msra.mxu0 0.0
    %198 = vmatprep.subr.mxu0 0.0
    %199 = vmatpush1.msra.mxu0 0.0
    %200 = vmatprep.subr.mxu0 0.0
    %201 = vmatpush1.msra.mxu0 0.0
    %202 = vmatprep.subr.mxu0 0.0
    %203 = vmatpush1.msra.mxu0 0.0
    %204 = vmatprep.subr.mxu0 0.0
    %205 = vmatpush1.msra.mxu0 0.0
    %206 = vmatprep.subr.mxu0 0.0
    %207 = vmatpush1.msra.mxu0 0.0
    %208 = vmatprep.subr.mxu0 0.0
    %209 = vmatpush1.msra.mxu0 0.0
    %210 = vmatprep.subr.mxu0 0.0
    %211 = vmatpush1.msra.mxu0 0.0
    %212 = vmatprep.subr.mxu0 0.0
    %213 = vmatpush1.msra.mxu0 0.0
    %214 = vmatprep.subr.mxu0 0.0
    %215 = vmatpush1.msra.mxu0 0.0
    %216 = vmatprep.subr.mxu0 0.0
    %217 = vmatpush1.msra.mxu0 0.0
    %218 = vmatprep.mubr.f32.mxu0 0.0
    %219 = vmatmul.mubr.f32.gmra.mrb[0].mxu0 %v63
    %v220 = vpop.f32.mrb[0].mxu0
    %v221 = vadd.f32 %v150, %v220
    %v222 = vpop.f32.mrb[0].mxu0
    %223 = vmatprep.mubr.f32.mxu0 0.0
    %224 = vmatmul.mubr.f32.gmra.mrb[0].mxu0 %v66
    %v225 = vpop.f32.mrb[0].mxu0
    %v226 = vadd.f32 %v150, %v225
    %v227 = vpop.f32.mrb[0].mxu0
    %228 = vdwg.mxu0
    %v229 = vlaneseq
    %v230 = vshrl.u32 %v229, 7
    %v231 = vsub.s32 0, %v230
    %v232 = vrot.slane %v50, %v231
    %v234 = vsel %vm68, %v44, 0
    %236 = vmatprep.subr.mxu0 0.0
    %237 = vmatpush1.msra.mxu0 %v43
    %238 = vmatprep.subr.mxu0 0.0
    %239 = vmatpush1.msra.mxu0 %v234
    %240 = vmatprep.subr.mxu0 0.0
    %241 = vmatpush1.msra.mxu0 0.0
    %242 = vmatprep.subr.mxu0 0.0
    %243 = vmatpush1.msra.mxu0 0.0
    %244 = vmatprep.subr.mxu0 0.0
    %245 = vmatpush1.msra.mxu0 0.0
    %246 = vmatprep.subr.mxu0 0.0
    %247 = vmatpush1.msra.mxu0 0.0
    %248 = vmatprep.subr.mxu0 0.0
    %249 = vmatpush1.msra.mxu0 0.0
    %250 = vmatprep.subr.mxu0 0.0
    %251 = vmatpush1.msra.mxu0 0.0
    %252 = vmatprep.subr.mxu0 0.0
    %253 = vmatpush1.msra.mxu0 0.0
    %254 = vmatprep.subr.mxu0 0.0
    %255 = vmatpush1.msra.mxu0 0.0
    %256 = vmatprep.subr.mxu0 0.0
    %257 = vmatpush1.msra.mxu0 0.0
    %258 = vmatprep.subr.mxu0 0.0
    %259 = vmatpush1.msra.mxu0 0.0
    %260 = vmatprep.subr.mxu0 0.0
    %261 = vmatpush1.msra.mxu0 0.0
    %262 = vmatprep.subr.mxu0 0.0
    %263 = vmatpush1.msra.mxu0 0.0
    %264 = vmatprep.subr.mxu0 0.0
    %265 = vmatpush1.msra.mxu0 0.0
    %266 = vmatprep.subr.mxu0 0.0
    %267 = vmatpush1.msra.mxu0 0.0
    %268 = vmatprep.subr.mxu0 0.0
    %269 = vmatpush1.msra.mxu0 0.0
    %270 = vmatprep.subr.mxu0 0.0
    %271 = vmatpush1.msra.mxu0 0.0
    %272 = vmatprep.subr.mxu0 0.0
    %273 = vmatpush1.msra.mxu0 0.0
    %274 = vmatprep.subr.mxu0 0.0
    %275 = vmatpush1.msra.mxu0 0.0
    %276 = vmatprep.subr.mxu0 0.0
    %277 = vmatpush1.msra.mxu0 0.0
    %278 = vmatprep.subr.mxu0 0.0
    %279 = vmatpush1.msra.mxu0 0.0
    %280 = vmatprep.subr.mxu0 0.0
    %281 = vmatpush1.msra.mxu0 0.0
    %282 = vmatprep.subr.mxu0 0.0
    %283 = vmatpush1.msra.mxu0 0.0
    %284 = vmatprep.subr.mxu0 0.0
    %285 = vmatpush1.msra.mxu0 0.0
    %286 = vmatprep.subr.mxu0 0.0
    %287 = vmatpush1.msra.mxu0 0.0
    %288 = vmatprep.subr.mxu0 0.0
    %289 = vmatpush1.msra.mxu0 0.0
    %290 = vmatprep.subr.mxu0 0.0
    %291 = vmatpush1.msra.mxu0 0.0
    %292 = vmatprep.subr.mxu0 0.0
    %293 = vmatpush1.msra.mxu0 0.0
    %294 = vmatprep.subr.mxu0 0.0
    %295 = vmatpush1.msra.mxu0 0.0
    %296 = vmatprep.subr.mxu0 0.0
    %297 = vmatpush1.msra.mxu0 0.0
    %298 = vmatprep.subr.mxu0 0.0
    %299 = vmatpush1.msra.mxu0 0.0
    %300 = vmatprep.mubr.f32.mxu0 0.0
    %301 = vmatmul.mubr.f32.gmra.mrb[0].mxu0 %v63
    %v302 = vpop.f32.mrb[0].mxu0
    %v303 = vadd.f32 %v232, %v302
    %v304 = vpop.f32.mrb[0].mxu0
    %305 = vmatprep.mubr.f32.mxu0 0.0
    %306 = vmatmul.mubr.f32.gmra.mrb[0].mxu0 %v66
    %v307 = vpop.f32.mrb[0].mxu0
    %v308 = vadd.f32 %v232, %v307
    %v309 = vpop.f32.mrb[0].mxu0
    %310 = vdwg.mxu0
    %v311 = vsel %vm33, 1, 0
    %vm312 = vcmp.eq.s32.totalorder %v311, 1
    %v313 = vsel %vm312, %v139, 0.0
    %v314 = vsel %vm312, %v144, 0.0
    %v315 = vsel %vm312, %v303, 0.0
    %v316 = vsel %vm312, %v308, 0.0
    %v318 = vsel %vm61, %v313, 0
    %v321 = vsel %vm61, %v221, 0
    %323 = vmatprep.subr.mxu0 0.0
    %324 = vmatpush1.xpose.msra.mxu0 %v321
    %325 = vmatprep.subr.mxu0 0.0
    %326 = vmatpush1.xpose.msra.mxu0 0.0
    %327 = vmatprep.subr.mxu0 0.0
    %328 = vmatpush1.xpose.msra.mxu0 0.0
    %329 = vmatprep.subr.mxu0 0.0
    %330 = vmatpush1.xpose.msra.mxu0 0.0
    %331 = vmatprep.subr.mxu0 0.0
    %332 = vmatpush1.xpose.msra.mxu0 0.0
    %333 = vmatprep.subr.mxu0 0.0
    %334 = vmatpush1.xpose.msra.mxu0 0.0
    %335 = vmatprep.subr.mxu0 0.0
    %336 = vmatpush1.xpose.msra.mxu0 0.0
    %337 = vmatprep.subr.mxu0 0.0
    %338 = vmatpush1.xpose.msra.mxu0 0.0
    %339 = vmatprep.subr.mxu0 0.0
    %340 = vmatpush1.xpose.msra.mxu0 0.0
    %341 = vmatprep.subr.mxu0 0.0
    %342 = vmatpush1.xpose.msra.mxu0 0.0
    %343 = vmatprep.subr.mxu0 0.0
    %344 = vmatpush1.xpose.msra.mxu0 0.0
    %345 = vmatprep.subr.mxu0 0.0
    %346 = vmatpush1.xpose.msra.mxu0 0.0
    %347 = vmatprep.subr.mxu0 0.0
    %348 = vmatpush1.xpose.msra.mxu0 0.0
    %349 = vmatprep.subr.mxu0 0.0
    %350 = vmatpush1.xpose.msra.mxu0 0.0
    %351 = vmatprep.subr.mxu0 0.0
    %352 = vmatpush1.xpose.msra.mxu0 0.0
    %353 = vmatprep.subr.mxu0 0.0
    %354 = vmatpush1.xpose.msra.mxu0 0.0
    %355 = vmatprep.subr.mxu0 0.0
    %356 = vmatpush1.xpose.msra.mxu0 0.0
    %357 = vmatprep.subr.mxu0 0.0
    %358 = vmatpush1.xpose.msra.mxu0 0.0
    %359 = vmatprep.subr.mxu0 0.0
    %360 = vmatpush1.xpose.msra.mxu0 0.0
    %361 = vmatprep.subr.mxu0 0.0
    %362 = vmatpush1.xpose.msra.mxu0 0.0
    %363 = vmatprep.subr.mxu0 0.0
    %364 = vmatpush1.xpose.msra.mxu0 0.0
    %365 = vmatprep.subr.mxu0 0.0
    %366 = vmatpush1.xpose.msra.mxu0 0.0
    %367 = vmatprep.subr.mxu0 0.0
    %368 = vmatpush1.xpose.msra.mxu0 0.0
    %369 = vmatprep.subr.mxu0 0.0
    %370 = vmatpush1.xpose.msra.mxu0 0.0
    %371 = vmatprep.subr.mxu0 0.0
    %372 = vmatpush1.xpose.msra.mxu0 0.0
    %373 = vmatprep.subr.mxu0 0.0
    %374 = vmatpush1.xpose.msra.mxu0 0.0
    %375 = vmatprep.subr.mxu0 0.0
    %376 = vmatpush1.xpose.msra.mxu0 0.0
    %377 = vmatprep.subr.mxu0 0.0
    %378 = vmatpush1.xpose.msra.mxu0 0.0
    %379 = vmatprep.subr.mxu0 0.0
    %380 = vmatpush1.xpose.msra.mxu0 0.0
    %381 = vmatprep.subr.mxu0 0.0
    %382 = vmatpush1.xpose.msra.mxu0 0.0
    %383 = vmatprep.subr.mxu0 0.0
    %384 = vmatpush1.xpose.msra.mxu0 0.0
    %385 = vmatprep.subr.mxu0 0.0
    %386 = vmatpush1.xpose.msra.mxu0 0.0
    %387 = vmatprep.mubr.f32.mxu0 0.0
    %388 = vmatmul.mubr.f32.gmra.mrb[0].mxu0 %v318
    %v389 = vpop.f32.mrb[0].mxu0
    %v390 = vadd.f32 0.0, %v389
    %v391 = vpop.f32.mrb[0].mxu0
    %392 = vdwg.mxu0
    %v394 = vsel %vm61, %v314, 0
    %v397 = vsel %vm61, %v226, 0
    %399 = vmatprep.subr.mxu0 0.0
    %400 = vmatpush1.xpose.msra.mxu0 %v397
    %401 = vmatprep.subr.mxu0 0.0
    %402 = vmatpush1.xpose.msra.mxu0 0.0
    %403 = vmatprep.subr.mxu0 0.0
    %404 = vmatpush1.xpose.msra.mxu0 0.0
    %405 = vmatprep.subr.mxu0 0.0
    %406 = vmatpush1.xpose.msra.mxu0 0.0
    %407 = vmatprep.subr.mxu0 0.0
    %408 = vmatpush1.xpose.msra.mxu0 0.0
    %409 = vmatprep.subr.mxu0 0.0
    %410 = vmatpush1.xpose.msra.mxu0 0.0
    %411 = vmatprep.subr.mxu0 0.0
    %412 = vmatpush1.xpose.msra.mxu0 0.0
    %413 = vmatprep.subr.mxu0 0.0
    %414 = vmatpush1.xpose.msra.mxu0 0.0
    %415 = vmatprep.subr.mxu0 0.0
    %416 = vmatpush1.xpose.msra.mxu0 0.0
    %417 = vmatprep.subr.mxu0 0.0
    %418 = vmatpush1.xpose.msra.mxu0 0.0
    %419 = vmatprep.subr.mxu0 0.0
    %420 = vmatpush1.xpose.msra.mxu0 0.0
    %421 = vmatprep.subr.mxu0 0.0
    %422 = vmatpush1.xpose.msra.mxu0 0.0
    %423 = vmatprep.subr.mxu0 0.0
    %424 = vmatpush1.xpose.msra.mxu0 0.0
    %425 = vmatprep.subr.mxu0 0.0
    %426 = vmatpush1.xpose.msra.mxu0 0.0
    %427 = vmatprep.subr.mxu0 0.0
    %428 = vmatpush1.xpose.msra.mxu0 0.0
    %429 = vmatprep.subr.mxu0 0.0
    %430 = vmatpush1.xpose.msra.mxu0 0.0
    %431 = vmatprep.subr.mxu0 0.0
    %432 = vmatpush1.xpose.msra.mxu0 0.0
    %433 = vmatprep.subr.mxu0 0.0
    %434 = vmatpush1.xpose.msra.mxu0 0.0
    %435 = vmatprep.subr.mxu0 0.0
    %436 = vmatpush1.xpose.msra.mxu0 0.0
    %437 = vmatprep.subr.mxu0 0.0
    %438 = vmatpush1.xpose.msra.mxu0 0.0
    %439 = vmatprep.subr.mxu0 0.0
    %440 = vmatpush1.xpose.msra.mxu0 0.0
    %441 = vmatprep.subr.mxu0 0.0
    %442 = vmatpush1.xpose.msra.mxu0 0.0
    %443 = vmatprep.subr.mxu0 0.0
    %444 = vmatpush1.xpose.msra.mxu0 0.0
    %445 = vmatprep.subr.mxu0 0.0
    %446 = vmatpush1.xpose.msra.mxu0 0.0
    %447 = vmatprep.subr.mxu0 0.0
    %448 = vmatpush1.xpose.msra.mxu0 0.0
    %449 = vmatprep.subr.mxu0 0.0
    %450 = vmatpush1.xpose.msra.mxu0 0.0
    %451 = vmatprep.subr.mxu0 0.0
    %452 = vmatpush1.xpose.msra.mxu0 0.0
    %453 = vmatprep.subr.mxu0 0.0
    %454 = vmatpush1.xpose.msra.mxu0 0.0
    %455 = vmatprep.subr.mxu0 0.0
    %456 = vmatpush1.xpose.msra.mxu0 0.0
    %457 = vmatprep.subr.mxu0 0.0
    %458 = vmatpush1.xpose.msra.mxu0 0.0
    %459 = vmatprep.subr.mxu0 0.0
    %460 = vmatpush1.xpose.msra.mxu0 0.0
    %461 = vmatprep.subr.mxu0 0.0
    %462 = vmatpush1.xpose.msra.mxu0 0.0
    %463 = vmatprep.mubr.f32.mxu0 0.0
    %464 = vmatmul.mubr.f32.gmra.mrb[0].mxu0 %v394
    %v465 = vpop.f32.mrb[0].mxu0
    %v466 = vadd.f32 0.0, %v465
    %v467 = vpop.f32.mrb[0].mxu0
    %468 = vdwg.mxu0
    %vm469 = vcmask 64512
    %v470 = vsel %vm469, %v390, -inf
    %471 = vmax.xlane.f32.xlu0 %v470
    %v472 = vpop.xlane.xlu0 %471
    %v473 = vsel %vm469, %v466, -inf
    %474 = vmax.xlane.f32.xlu0 %v473
    %v475 = vpop.xlane.xlu0 %474
    %v476 = vsub.f32 %v390, %v472
    %v477 = vsub.f32 %v466, %v475
    %v478 = vmul.f32 %v476, 1.442695
    %v479 = vpow.pop %v478
    %v480 = vmul.f32 %v477, 1.442695
    %v481 = vpow.pop %v480
    %v482 = vsel %vm469, %v479, 0.0
    %483 = vadd.xlane.f32.xlu0 %v482
    %v484 = vpop.xlane.xlu0 %483
    %v485 = vsel %vm469, %v481, 0.0
    %486 = vadd.xlane.f32.xlu0 %v485
    %v487 = vpop.xlane.xlu0 %486
    %v488 = vrcp.pop %v484
    %v489 = vmul.f32 %v479, %v488
    %v490 = vrcp.pop %v487
    %v491 = vmul.f32 %v481, %v490
    %v492 = vsel %vm36, 1, 0
    %vm493 = vcmp.eq.s32.totalorder %v492, 1
    %v494 = vsel %vm493, %v139, 0.0
    %v495 = vsel %vm493, %v144, 0.0
    %v496 = vsel %vm493, %v303, 0.0
    %v497 = vsel %vm493, %v308, 0.0
    %v499 = vsel %vm61, %v494, 0
    %501 = vmatprep.subr.mxu0 0.0
    %502 = vmatpush1.xpose.msra.mxu0 %v321
    %503 = vmatprep.subr.mxu0 0.0
    %504 = vmatpush1.xpose.msra.mxu0 0.0
    %505 = vmatprep.subr.mxu0 0.0
    %506 = vmatpush1.xpose.msra.mxu0 0.0
    %507 = vmatprep.subr.mxu0 0.0
    %508 = vmatpush1.xpose.msra.mxu0 0.0
    %509 = vmatprep.subr.mxu0 0.0
    %510 = vmatpush1.xpose.msra.mxu0 0.0
    %511 = vmatprep.subr.mxu0 0.0
    %512 = vmatpush1.xpose.msra.mxu0 0.0
    %513 = vmatprep.subr.mxu0 0.0
    %514 = vmatpush1.xpose.msra.mxu0 0.0
    %515 = vmatprep.subr.mxu0 0.0
    %516 = vmatpush1.xpose.msra.mxu0 0.0
    %517 = vmatprep.subr.mxu0 0.0
    %518 = vmatpush1.xpose.msra.mxu0 0.0
    %519 = vmatprep.subr.mxu0 0.0
    %520 = vmatpush1.xpose.msra.mxu0 0.0
    %521 = vmatprep.subr.mxu0 0.0
    %522 = vmatpush1.xpose.msra.mxu0 0.0
    %523 = vmatprep.subr.mxu0 0.0
    %524 = vmatpush1.xpose.msra.mxu0 0.0
    %525 = vmatprep.subr.mxu0 0.0
    %526 = vmatpush1.xpose.msra.mxu0 0.0
    %527 = vmatprep.subr.mxu0 0.0
    %528 = vmatpush1.xpose.msra.mxu0 0.0
    %529 = vmatprep.subr.mxu0 0.0
    %530 = vmatpush1.xpose.msra.mxu0 0.0
    %531 = vmatprep.subr.mxu0 0.0
    %532 = vmatpush1.xpose.msra.mxu0 0.0
    %533 = vmatprep.subr.mxu0 0.0
    %534 = vmatpush1.xpose.msra.mxu0 0.0
    %535 = vmatprep.subr.mxu0 0.0
    %536 = vmatpush1.xpose.msra.mxu0 0.0
    %537 = vmatprep.subr.mxu0 0.0
    %538 = vmatpush1.xpose.msra.mxu0 0.0
    %539 = vmatprep.subr.mxu0 0.0
    %540 = vmatpush1.xpose.msra.mxu0 0.0
    %541 = vmatprep.subr.mxu0 0.0
    %542 = vmatpush1.xpose.msra.mxu0 0.0
    %543 = vmatprep.subr.mxu0 0.0
    %544 = vmatpush1.xpose.msra.mxu0 0.0
    %545 = vmatprep.subr.mxu0 0.0
    %546 = vmatpush1.xpose.msra.mxu0 0.0
    %547 = vmatprep.subr.mxu0 0.0
    %548 = vmatpush1.xpose.msra.mxu0 0.0
    %549 = vmatprep.subr.mxu0 0.0
    %550 = vmatpush1.xpose.msra.mxu0 0.0
    %551 = vmatprep.subr.mxu0 0.0
    %552 = vmatpush1.xpose.msra.mxu0 0.0
    %553 = vmatprep.subr.mxu0 0.0
    %554 = vmatpush1.xpose.msra.mxu0 0.0
    %555 = vmatprep.subr.mxu0 0.0
    %556 = vmatpush1.xpose.msra.mxu0 0.0
    %557 = vmatprep.subr.mxu0 0.0
    %558 = vmatpush1.xpose.msra.mxu0 0.0
    %559 = vmatprep.subr.mxu0 0.0
    %560 = vmatpush1.xpose.msra.mxu0 0.0
    %561 = vmatprep.subr.mxu0 0.0
    %562 = vmatpush1.xpose.msra.mxu0 0.0
    %563 = vmatprep.subr.mxu0 0.0
    %564 = vmatpush1.xpose.msra.mxu0 0.0
    %565 = vmatprep.mubr.f32.mxu0 0.0
    %566 = vmatmul.mubr.f32.gmra.mrb[0].mxu0 %v499
    %v567 = vpop.f32.mrb[0].mxu0
    %v568 = vadd.f32 0.0, %v567
    %v569 = vpop.f32.mrb[0].mxu0
    %570 = vdwg.mxu0
    %v572 = vsel %vm61, %v495, 0
    %574 = vmatprep.subr.mxu0 0.0
    %575 = vmatpush1.xpose.msra.mxu0 %v397
    %576 = vmatprep.subr.mxu0 0.0
    %577 = vmatpush1.xpose.msra.mxu0 0.0
    %578 = vmatprep.subr.mxu0 0.0
    %579 = vmatpush1.xpose.msra.mxu0 0.0
    %580 = vmatprep.subr.mxu0 0.0
    %581 = vmatpush1.xpose.msra.mxu0 0.0
    %582 = vmatprep.subr.mxu0 0.0
    %583 = vmatpush1.xpose.msra.mxu0 0.0
    %584 = vmatprep.subr.mxu0 0.0
    %585 = vmatpush1.xpose.msra.mxu0 0.0
    %586 = vmatprep.subr.mxu0 0.0
    %587 = vmatpush1.xpose.msra.mxu0 0.0
    %588 = vmatprep.subr.mxu0 0.0
    %589 = vmatpush1.xpose.msra.mxu0 0.0
    %590 = vmatprep.subr.mxu0 0.0
    %591 = vmatpush1.xpose.msra.mxu0 0.0
    %592 = vmatprep.subr.mxu0 0.0
    %593 = vmatpush1.xpose.msra.mxu0 0.0
    %594 = vmatprep.subr.mxu0 0.0
    %595 = vmatpush1.xpose.msra.mxu0 0.0
    %596 = vmatprep.subr.mxu0 0.0
    %597 = vmatpush1.xpose.msra.mxu0 0.0
    %598 = vmatprep.subr.mxu0 0.0
    %599 = vmatpush1.xpose.msra.mxu0 0.0
    %600 = vmatprep.subr.mxu0 0.0
    %601 = vmatpush1.xpose.msra.mxu0 0.0
    %602 = vmatprep.subr.mxu0 0.0
    %603 = vmatpush1.xpose.msra.mxu0 0.0
    %604 = vmatprep.subr.mxu0 0.0
    %605 = vmatpush1.xpose.msra.mxu0 0.0
    %606 = vmatprep.subr.mxu0 0.0
    %607 = vmatpush1.xpose.msra.mxu0 0.0
    %608 = vmatprep.subr.mxu0 0.0
    %609 = vmatpush1.xpose.msra.mxu0 0.0
    %610 = vmatprep.subr.mxu0 0.0
    %611 = vmatpush1.xpose.msra.mxu0 0.0
    %612 = vmatprep.subr.mxu0 0.0
    %613 = vmatpush1.xpose.msra.mxu0 0.0
    %614 = vmatprep.subr.mxu0 0.0
    %615 = vmatpush1.xpose.msra.mxu0 0.0
    %616 = vmatprep.subr.mxu0 0.0
    %617 = vmatpush1.xpose.msra.mxu0 0.0
    %618 = vmatprep.subr.mxu0 0.0
    %619 = vmatpush1.xpose.msra.mxu0 0.0
    %620 = vmatprep.subr.mxu0 0.0
    %621 = vmatpush1.xpose.msra.mxu0 0.0
    %622 = vmatprep.subr.mxu0 0.0
    %623 = vmatpush1.xpose.msra.mxu0 0.0
    %624 = vmatprep.subr.mxu0 0.0
    %625 = vmatpush1.xpose.msra.mxu0 0.0
    %626 = vmatprep.subr.mxu0 0.0
    %627 = vmatpush1.xpose.msra.mxu0 0.0
    %628 = vmatprep.subr.mxu0 0.0
    %629 = vmatpush1.xpose.msra.mxu0 0.0
    %630 = vmatprep.subr.mxu0 0.0
    %631 = vmatpush1.xpose.msra.mxu0 0.0
    %632 = vmatprep.subr.mxu0 0.0
    %633 = vmatpush1.xpose.msra.mxu0 0.0
    %634 = vmatprep.subr.mxu0 0.0
    %635 = vmatpush1.xpose.msra.mxu0 0.0
    %636 = vmatprep.subr.mxu0 0.0
    %637 = vmatpush1.xpose.msra.mxu0 0.0
    %638 = vmatprep.mubr.f32.mxu0 0.0
    %639 = vmatmul.mubr.f32.gmra.mrb[0].mxu0 %v572
    %v640 = vpop.f32.mrb[0].mxu0
    %v641 = vadd.f32 0.0, %v640
    %v642 = vpop.f32.mrb[0].mxu0
    %643 = vdwg.mxu0
    %v644 = vsel %vm469, %v568, -inf
    %645 = vmax.xlane.f32.xlu0 %v644
    %v646 = vpop.xlane.xlu0 %645
    %v647 = vsel %vm469, %v641, -inf
    %648 = vmax.xlane.f32.xlu0 %v647
    %v649 = vpop.xlane.xlu0 %648
    %v650 = vsub.f32 %v568, %v646
    %v651 = vsub.f32 %v641, %v649
    %v652 = vmul.f32 %v650, 1.442695
    %v653 = vpow.pop %v652
    %v654 = vmul.f32 %v651, 1.442695
    %v655 = vpow.pop %v654
    %v656 = vsel %vm469, %v653, 0.0
    %657 = vadd.xlane.f32.xlu0 %v656
    %v658 = vpop.xlane.xlu0 %657
    %v659 = vsel %vm469, %v655, 0.0
    %660 = vadd.xlane.f32.xlu0 %v659
    %v661 = vpop.xlane.xlu0 %660
    %v662 = vrcp.pop %v658
    %v663 = vmul.f32 %v653, %v662
    %v664 = vrcp.pop %v661
    %v665 = vmul.f32 %v655, %v664
    %v667 = vsel %vm469, %v663, 0
    %669 = vmatprep.subr.mxu0 0.0
    %670 = vmatpush1.msra.mxu0 %v496
    %671 = vmatprep.subr.mxu0 0.0
    %672 = vmatpush1.msra.mxu0 0.0
    %673 = vmatprep.subr.mxu0 0.0
    %674 = vmatpush1.msra.mxu0 0.0
    %675 = vmatprep.subr.mxu0 0.0
    %676 = vmatpush1.msra.mxu0 0.0
    %677 = vmatprep.subr.mxu0 0.0
    %678 = vmatpush1.msra.mxu0 0.0
    %679 = vmatprep.subr.mxu0 0.0
    %680 = vmatpush1.msra.mxu0 0.0
    %681 = vmatprep.subr.mxu0 0.0
    %682 = vmatpush1.msra.mxu0 0.0
    %683 = vmatprep.subr.mxu0 0.0
    %684 = vmatpush1.msra.mxu0 0.0
    %685 = vmatprep.subr.mxu0 0.0
    %686 = vmatpush1.msra.mxu0 0.0
    %687 = vmatprep.subr.mxu0 0.0
    %688 = vmatpush1.msra.mxu0 0.0
    %689 = vmatprep.subr.mxu0 0.0
    %690 = vmatpush1.msra.mxu0 0.0
    %691 = vmatprep.subr.mxu0 0.0
    %692 = vmatpush1.msra.mxu0 0.0
    %693 = vmatprep.subr.mxu0 0.0
    %694 = vmatpush1.msra.mxu0 0.0
    %695 = vmatprep.subr.mxu0 0.0
    %696 = vmatpush1.msra.mxu0 0.0
    %697 = vmatprep.subr.mxu0 0.0
    %698 = vmatpush1.msra.mxu0 0.0
    %699 = vmatprep.subr.mxu0 0.0
    %700 = vmatpush1.msra.mxu0 0.0
    %701 = vmatprep.subr.mxu0 0.0
    %702 = vmatpush1.msra.mxu0 0.0
    %703 = vmatprep.subr.mxu0 0.0
    %704 = vmatpush1.msra.mxu0 0.0
    %705 = vmatprep.subr.mxu0 0.0
    %706 = vmatpush1.msra.mxu0 0.0
    %707 = vmatprep.subr.mxu0 0.0
    %708 = vmatpush1.msra.mxu0 0.0
    %709 = vmatprep.subr.mxu0 0.0
    %710 = vmatpush1.msra.mxu0 0.0
    %711 = vmatprep.subr.mxu0 0.0
    %712 = vmatpush1.msra.mxu0 0.0
    %713 = vmatprep.subr.mxu0 0.0
    %714 = vmatpush1.msra.mxu0 0.0
    %715 = vmatprep.subr.mxu0 0.0
    %716 = vmatpush1.msra.mxu0 0.0
    %717 = vmatprep.subr.mxu0 0.0
    %718 = vmatpush1.msra.mxu0 0.0
    %719 = vmatprep.subr.mxu0 0.0
    %720 = vmatpush1.msra.mxu0 0.0
    %721 = vmatprep.subr.mxu0 0.0
    %722 = vmatpush1.msra.mxu0 0.0
    %723 = vmatprep.subr.mxu0 0.0
    %724 = vmatpush1.msra.mxu0 0.0
    %725 = vmatprep.subr.mxu0 0.0
    %726 = vmatpush1.msra.mxu0 0.0
    %727 = vmatprep.subr.mxu0 0.0
    %728 = vmatpush1.msra.mxu0 0.0
    %729 = vmatprep.subr.mxu0 0.0
    %730 = vmatpush1.msra.mxu0 0.0
    %731 = vmatprep.subr.mxu0 0.0
    %732 = vmatpush1.msra.mxu0 0.0
    %733 = vmatprep.mubr.f32.mxu0 0.0
    %734 = vmatmul.mubr.f32.gmra.mrb[0].mxu0 %v667
    %v735 = vpop.f32.mrb[0].mxu0
    %v736 = vadd.f32 0.0, %v735
    %v737 = vpop.f32.mrb[0].mxu0
    %738 = vdwg.mxu0
    %v740 = vsel %vm469, %v665, 0
    %742 = vmatprep.subr.mxu0 0.0
    %743 = vmatpush1.msra.mxu0 %v497
    %744 = vmatprep.subr.mxu0 0.0
    %745 = vmatpush1.msra.mxu0 0.0
    %746 = vmatprep.subr.mxu0 0.0
    %747 = vmatpush1.msra.mxu0 0.0
    %748 = vmatprep.subr.mxu0 0.0
    %749 = vmatpush1.msra.mxu0 0.0
    %750 = vmatprep.subr.mxu0 0.0
    %751 = vmatpush1.msra.mxu0 0.0
    %752 = vmatprep.subr.mxu0 0.0
    %753 = vmatpush1.msra.mxu0 0.0
    %754 = vmatprep.subr.mxu0 0.0
    %755 = vmatpush1.msra.mxu0 0.0
    %756 = vmatprep.subr.mxu0 0.0
    %757 = vmatpush1.msra.mxu0 0.0
    %758 = vmatprep.subr.mxu0 0.0
    %759 = vmatpush1.msra.mxu0 0.0
    %760 = vmatprep.subr.mxu0 0.0
    %761 = vmatpush1.msra.mxu0 0.0
    %762 = vmatprep.subr.mxu0 0.0
    %763 = vmatpush1.msra.mxu0 0.0
    %764 = vmatprep.subr.mxu0 0.0
    %765 = vmatpush1.msra.mxu0 0.0
    %766 = vmatprep.subr.mxu0 0.0
    %767 = vmatpush1.msra.mxu0 0.0
    %768 = vmatprep.subr.mxu0 0.0
    %769 = vmatpush1.msra.mxu0 0.0
    %770 = vmatprep.subr.mxu0 0.0
    %771 = vmatpush1.msra.mxu0 0.0
    %772 = vmatprep.subr.mxu0 0.0
    %773 = vmatpush1.msra.mxu0 0.0
    %774 = vmatprep.subr.mxu0 0.0
    %775 = vmatpush1.msra.mxu0 0.0
    %776 = vmatprep.subr.mxu0 0.0
    %777 = vmatpush1.msra.mxu0 0.0
    %778 = vmatprep.subr.mxu0 0.0
    %779 = vmatpush1.msra.mxu0 0.0
    %780 = vmatprep.subr.mxu0 0.0
    %781 = vmatpush1.msra.mxu0 0.0
    %782 = vmatprep.subr.mxu0 0.0
    %783 = vmatpush1.msra.mxu0 0.0
    %784 = vmatprep.subr.mxu0 0.0
    %785 = vmatpush1.msra.mxu0 0.0
    %786 = vmatprep.subr.mxu0 0.0
    %787 = vmatpush1.msra.mxu0 0.0
    %788 = vmatprep.subr.mxu0 0.0
    %789 = vmatpush1.msra.mxu0 0.0
    %790 = vmatprep.subr.mxu0 0.0
    %791 = vmatpush1.msra.mxu0 0.0
    %792 = vmatprep.subr.mxu0 0.0
    %793 = vmatpush1.msra.mxu0 0.0
    %794 = vmatprep.subr.mxu0 0.0
    %795 = vmatpush1.msra.mxu0 0.0
    %796 = vmatprep.subr.mxu0 0.0
    %797 = vmatpush1.msra.mxu0 0.0
    %798 = vmatprep.subr.mxu0 0.0
    %799 = vmatpush1.msra.mxu0 0.0
    %800 = vmatprep.subr.mxu0 0.0
    %801 = vmatpush1.msra.mxu0 0.0
    %802 = vmatprep.subr.mxu0 0.0
    %803 = vmatpush1.msra.mxu0 0.0
    %804 = vmatprep.subr.mxu0 0.0
    %805 = vmatpush1.msra.mxu0 0.0
    %806 = vmatprep.mubr.f32.mxu0 0.0
    %807 = vmatmul.mubr.f32.gmra.mrb[0].mxu0 %v740
    %v808 = vpop.f32.mrb[0].mxu0
    %v809 = vadd.f32 0.0, %v808
    %v810 = vpop.f32.mrb[0].mxu0
    %811 = vdwg.mxu0
    %v813 = vsel %vm469, %v489, 0
    %815 = vmatprep.subr.mxu0 0.0
    %816 = vmatpush1.msra.mxu0 %v315
    %817 = vmatprep.subr.mxu0 0.0
    %818 = vmatpush1.msra.mxu0 0.0
    %819 = vmatprep.subr.mxu0 0.0
    %820 = vmatpush1.msra.mxu0 0.0
    %821 = vmatprep.subr.mxu0 0.0
    %822 = vmatpush1.msra.mxu0 0.0
    %823 = vmatprep.subr.mxu0 0.0
    %824 = vmatpush1.msra.mxu0 0.0
    %825 = vmatprep.subr.mxu0 0.0
    %826 = vmatpush1.msra.mxu0 0.0
    %827 = vmatprep.subr.mxu0 0.0
    %828 = vmatpush1.msra.mxu0 0.0
    %829 = vmatprep.subr.mxu0 0.0
    %830 = vmatpush1.msra.mxu0 0.0
    %831 = vmatprep.subr.mxu0 0.0
    %832 = vmatpush1.msra.mxu0 0.0
    %833 = vmatprep.subr.mxu0 0.0
    %834 = vmatpush1.msra.mxu0 0.0
    %835 = vmatprep.subr.mxu0 0.0
    %836 = vmatpush1.msra.mxu0 0.0
    %837 = vmatprep.subr.mxu0 0.0
    %838 = vmatpush1.msra.mxu0 0.0
    %839 = vmatprep.subr.mxu0 0.0
    %840 = vmatpush1.msra.mxu0 0.0
    %841 = vmatprep.subr.mxu0 0.0
    %842 = vmatpush1.msra.mxu0 0.0
    %843 = vmatprep.subr.mxu0 0.0
    %844 = vmatpush1.msra.mxu0 0.0
    %845 = vmatprep.subr.mxu0 0.0
    %846 = vmatpush1.msra.mxu0 0.0
    %847 = vmatprep.subr.mxu0 0.0
    %848 = vmatpush1.msra.mxu0 0.0
    %849 = vmatprep.subr.mxu0 0.0
    %850 = vmatpush1.msra.mxu0 0.0
    %851 = vmatprep.subr.mxu0 0.0
    %852 = vmatpush1.msra.mxu0 0.0
    %853 = vmatprep.subr.mxu0 0.0
    %854 = vmatpush1.msra.mxu0 0.0
    %855 = vmatprep.subr.mxu0 0.0
    %856 = vmatpush1.msra.mxu0 0.0
    %857 = vmatprep.subr.mxu0 0.0
    %858 = vmatpush1.msra.mxu0 0.0
    %859 = vmatprep.subr.mxu0 0.0
    %860 = vmatpush1.msra.mxu0 0.0
    %861 = vmatprep.subr.mxu0 0.0
    %862 = vmatpush1.msra.mxu0 0.0
    %863 = vmatprep.subr.mxu0 0.0
    %864 = vmatpush1.msra.mxu0 0.0
    %865 = vmatprep.subr.mxu0 0.0
    %866 = vmatpush1.msra.mxu0 0.0
    %867 = vmatprep.subr.mxu0 0.0
    %868 = vmatpush1.msra.mxu0 0.0
    %869 = vmatprep.subr.mxu0 0.0
    %870 = vmatpush1.msra.mxu0 0.0
    %871 = vmatprep.subr.mxu0 0.0
    %872 = vmatpush1.msra.mxu0 0.0
    %873 = vmatprep.subr.mxu0 0.0
    %874 = vmatpush1.msra.mxu0 0.0
    %875 = vmatprep.subr.mxu0 0.0
    %876 = vmatpush1.msra.mxu0 0.0
    %877 = vmatprep.subr.mxu0 0.0
    %878 = vmatpush1.msra.mxu0 0.0
    %879 = vmatprep.mubr.f32.mxu0 0.0
    %880 = vmatmul.mubr.f32.gmra.mrb[0].mxu0 %v813
    %v881 = vpop.f32.mrb[0].mxu0
    %v882 = vadd.f32 %v736, %v881
    %v883 = vpop.f32.mrb[0].mxu0
    %884 = vdwg.mxu0
    %v886 = vsel %vm469, %v491, 0
    %888 = vmatprep.subr.mxu0 0.0
    %889 = vmatpush1.msra.mxu0 %v316
    %890 = vmatprep.subr.mxu0 0.0
    %891 = vmatpush1.msra.mxu0 0.0
    %892 = vmatprep.subr.mxu0 0.0
    %893 = vmatpush1.msra.mxu0 0.0
    %894 = vmatprep.subr.mxu0 0.0
    %895 = vmatpush1.msra.mxu0 0.0
    %896 = vmatprep.subr.mxu0 0.0
    %897 = vmatpush1.msra.mxu0 0.0
    %898 = vmatprep.subr.mxu0 0.0
    %899 = vmatpush1.msra.mxu0 0.0
    %900 = vmatprep.subr.mxu0 0.0
    %901 = vmatpush1.msra.mxu0 0.0
    %902 = vmatprep.subr.mxu0 0.0
    %903 = vmatpush1.msra.mxu0 0.0
    %904 = vmatprep.subr.mxu0 0.0
    %905 = vmatpush1.msra.mxu0 0.0
    %906 = vmatprep.subr.mxu0 0.0
    %907 = vmatpush1.msra.mxu0 0.0
    %908 = vmatprep.subr.mxu0 0.0
    %909 = vmatpush1.msra.mxu0 0.0
    %910 = vmatprep.subr.mxu0 0.0
    %911 = vmatpush1.msra.mxu0 0.0
    %912 = vmatprep.subr.mxu0 0.0
    %913 = vmatpush1.msra.mxu0 0.0
    %914 = vmatprep.subr.mxu0 0.0
    %915 = vmatpush1.msra.mxu0 0.0
    %916 = vmatprep.subr.mxu0 0.0
    %917 = vmatpush1.msra.mxu0 0.0
    %918 = vmatprep.subr.mxu0 0.0
    %919 = vmatpush1.msra.mxu0 0.0
    %920 = vmatprep.subr.mxu0 0.0
    %921 = vmatpush1.msra.mxu0 0.0
    %922 = vmatprep.subr.mxu0 0.0
    %923 = vmatpush1.msra.mxu0 0.0
    %924 = vmatprep.subr.mxu0 0.0
    %925 = vmatpush1.msra.mxu0 0.0
    %926 = vmatprep.subr.mxu0 0.0
    %927 = vmatpush1.msra.mxu0 0.0
    %928 = vmatprep.subr.mxu0 0.0
    %929 = vmatpush1.msra.mxu0 0.0
    %930 = vmatprep.subr.mxu0 0.0
    %931 = vmatpush1.msra.mxu0 0.0
    %932 = vmatprep.subr.mxu0 0.0
    %933 = vmatpush1.msra.mxu0 0.0
    %934 = vmatprep.subr.mxu0 0.0
    %935 = vmatpush1.msra.mxu0 0.0
    %936 = vmatprep.subr.mxu0 0.0
    %937 = vmatpush1.msra.mxu0 0.0
    %938 = vmatprep.subr.mxu0 0.0
    %939 = vmatpush1.msra.mxu0 0.0
    %940 = vmatprep.subr.mxu0 0.0
    %941 = vmatpush1.msra.mxu0 0.0
    %942 = vmatprep.subr.mxu0 0.0
    %943 = vmatpush1.msra.mxu0 0.0
    %944 = vmatprep.subr.mxu0 0.0
    %945 = vmatpush1.msra.mxu0 0.0
    %946 = vmatprep.subr.mxu0 0.0
    %947 = vmatpush1.msra.mxu0 0.0
    %948 = vmatprep.subr.mxu0 0.0
    %949 = vmatpush1.msra.mxu0 0.0
    %950 = vmatprep.subr.mxu0 0.0
    %951 = vmatpush1.msra.mxu0 0.0
    %952 = vmatprep.mubr.f32.mxu0 0.0
    %953 = vmatmul.mubr.f32.gmra.mrb[0].mxu0 %v886
    %v954 = vpop.f32.mrb[0].mxu0
    %v955 = vadd.f32 %v809, %v954
    %v956 = vpop.f32.mrb[0].mxu0
    %957 = vdwg.mxu0
    %v958 = vlaneseq
    %v959 = vshrl.u32 %v958, 7
    %v960 = vsub.s32 0, %v959
    %v961 = vrot.slane %v51, %v960
    %v963 = vsel %vm61, %v882, 0
    %v966 = vsel %vm61, %v955, 0
    %v969 = vsel %vm68, %v47, 0
    %971 = vmatprep.subr.mxu0 0.0
    %972 = vmatpush1.msra.mxu0 %v46
    %973 = vmatprep.subr.mxu0 0.0
    %974 = vmatpush1.msra.mxu0 %v969
    %975 = vmatprep.subr.mxu0 0.0
    %976 = vmatpush1.msra.mxu0 0.0
    %977 = vmatprep.subr.mxu0 0.0
    %978 = vmatpush1.msra.mxu0 0.0
    %979 = vmatprep.subr.mxu0 0.0
    %980 = vmatpush1.msra.mxu0 0.0
    %981 = vmatprep.subr.mxu0 0.0
    %982 = vmatpush1.msra.mxu0 0.0
    %983 = vmatprep.subr.mxu0 0.0
    %984 = vmatpush1.msra.mxu0 0.0
    %985 = vmatprep.subr.mxu0 0.0
    %986 = vmatpush1.msra.mxu0 0.0
    %987 = vmatprep.subr.mxu0 0.0
    %988 = vmatpush1.msra.mxu0 0.0
    %989 = vmatprep.subr.mxu0 0.0
    %990 = vmatpush1.msra.mxu0 0.0
    %991 = vmatprep.subr.mxu0 0.0
    %992 = vmatpush1.msra.mxu0 0.0
    %993 = vmatprep.subr.mxu0 0.0
    %994 = vmatpush1.msra.mxu0 0.0
    %995 = vmatprep.subr.mxu0 0.0
    %996 = vmatpush1.msra.mxu0 0.0
    %997 = vmatprep.subr.mxu0 0.0
    %998 = vmatpush1.msra.mxu0 0.0
    %999 = vmatprep.subr.mxu0 0.0
    %1000 = vmatpush1.msra.mxu0 0.0
    %1001 = vmatprep.subr.mxu0 0.0
    %1002 = vmatpush1.msra.mxu0 0.0
    %1003 = vmatprep.subr.mxu0 0.0
    %1004 = vmatpush1.msra.mxu0 0.0
    %1005 = vmatprep.subr.mxu0 0.0
    %1006 = vmatpush1.msra.mxu0 0.0
    %1007 = vmatprep.subr.mxu0 0.0
    %1008 = vmatpush1.msra.mxu0 0.0
    %1009 = vmatprep.subr.mxu0 0.0
    %1010 = vmatpush1.msra.mxu0 0.0
    %1011 = vmatprep.subr.mxu0 0.0
    %1012 = vmatpush1.msra.mxu0 0.0
    %1013 = vmatprep.subr.mxu0 0.0
    %1014 = vmatpush1.msra.mxu0 0.0
    %1015 = vmatprep.subr.mxu0 0.0
    %1016 = vmatpush1.msra.mxu0 0.0
    %1017 = vmatprep.subr.mxu0 0.0
    %1018 = vmatpush1.msra.mxu0 0.0
    %1019 = vmatprep.subr.mxu0 0.0
    %1020 = vmatpush1.msra.mxu0 0.0
    %1021 = vmatprep.subr.mxu0 0.0
    %1022 = vmatpush1.msra.mxu0 0.0
    %1023 = vmatprep.subr.mxu0 0.0
    %1024 = vmatpush1.msra.mxu0 0.0
    %1025 = vmatprep.subr.mxu0 0.0
    %1026 = vmatpush1.msra.mxu0 0.0
    %1027 = vmatprep.subr.mxu0 0.0
    %1028 = vmatpush1.msra.mxu0 0.0
    %1029 = vmatprep.subr.mxu0 0.0
    %1030 = vmatpush1.msra.mxu0 0.0
    %1031 = vmatprep.subr.mxu0 0.0
    %1032 = vmatpush1.msra.mxu0 0.0
    %1033 = vmatprep.subr.mxu0 0.0
    %1034 = vmatpush1.msra.mxu0 0.0
    %1035 = vmatprep.mubr.f32.mxu0 0.0
    %1036 = vmatmul.mubr.f32.gmra.mrb[0].mxu0 %v963
    %v1037 = vpop.f32.mrb[0].mxu0
    %v1038 = vadd.f32 %v961, %v1037
    %v1039 = vpop.f32.mrb[0].mxu0
    %1040 = vmatprep.mubr.f32.mxu0 0.0
    %1041 = vmatmul.mubr.f32.gmra.mrb[0].mxu0 %v966
    %v1042 = vpop.f32.mrb[0].mxu0
    %v1043 = vadd.f32 %v961, %v1042
    %v1044 = vpop.f32.mrb[0].mxu0
    %1045 = vdwg.mxu0
    %v1046 = vadd.f32 %v27, %v1038
    %v1047 = vadd.f32 %v28, %v1043
    %v1048 = vsel %vm61, %v1046, 0.0
    %1049 = vadd.xlane.f32.xlu0 %v1048
    %v1050 = vpop.xlane.xlu0 %1049
    %v1051 = vsel %vm61, %v1047, 0.0
    %1052 = vadd.xlane.f32.xlu0 %v1051
    %v1053 = vpop.xlane.xlu0 %1052
    %v1054 = vrcp.pop 10.0
    %v1055 = vmul.f32 %v1050, %v1054
    %v1056 = vmul.f32 %v1053, %v1054
    %v1057 = vsub.f32 %v1046, %v1055
    %v1058 = vsub.f32 %v1047, %v1056
    %v1059 = vmul.f32 %v1057, %v1057
    %v1060 = vmul.f32 %v1058, %v1058
    %v1061 = vsel %vm61, %v1059, 0.0
    %1062 = vadd.xlane.f32.xlu0 %v1061
    %v1063 = vpop.xlane.xlu0 %1062
    %v1064 = vsel %vm61, %v1060, 0.0
    %1065 = vadd.xlane.f32.xlu0 %v1064
    %v1066 = vpop.xlane.xlu0 %1065
    %v1067 = vmul.f32 %v1063, %v1054
    %v1068 = vmul.f32 %v1066, %v1054
    %v1069 = vadd.f32 %v1067, 1e-05
    %v1070 = vadd.f32 %v1068, 1e-05
    %v1071 = vrsqrt.pop %v1069
    %v1072 = vrsqrt.pop %v1070
    %v1073 = vmul.f32 %v1057, %v1071
    %v1074 = vmul.f32 %v1058, %v1072
    %v1075 = vlaneseq
    %v1076 = vshrl.u32 %v1075, 7
    %v1077 = vsub.s32 0, %v1076
    %v1078 = vrot.slane %v53, %v1077
    %v1079 = vmul.f32 %v1073, %v1078
    %v1080 = vmul.f32 %v1074, %v1078
    %v1081 = vlaneseq
    %v1082 = vshrl.u32 %v1081, 7
    %v1083 = vsub.s32 0, %v1082
    %v1084 = vrot.slane %v54, %v1083
    %v1085 = vadd.f32 %v1079, %v1084
    %v1086 = vadd.f32 %v1080, %v1084
    %v1087 = vld [vmem:[%s3] sm:$0xff]
    %v1088 = vld [vmem:[%s3 + $0x8] sm:$0x3]
    %v1089 = vld [vmem:[%s4] sm:$0x1]
    %v1090 = vld [vmem:[%s5] sm:$0xff]
    %v1091 = vld [vmem:[%s5 + $0x8] sm:$0xff]
    %v1092 = vld [vmem:[%s5 + $0x10] sm:$0xff]
    %v1093 = vld [vmem:[%s5 + $0x18] sm:$0xff]
    %v1094 = vld [vmem:[%s5 + $0x20] sm:$0xff]
    %v1095 = vld [vmem:[%s5 + $0x28] sm:$0xff]
    %v1096 = vld [vmem:[%s5 + $0x30] sm:$0xff]
    %v1097 = vld [vmem:[%s5 + $0x38] sm:$0xff]
    %v1098 = vlaneseq
    %v1099 = vshrl.u32 %v1098, 7
    %v1100 = vsub.s32 0, %v1099
    %v1101 = vrot.slane %v1089, %v1100
    %v1103 = vsel %vm61, %v1085, 0
    %v1106 = vsel %vm61, %v1086, 0
    %v1109 = vsel %vm68, %v1088, 0
    %1111 = vmatprep.subr.mxu0 0.0
    %1112 = vmatpush1.msra.mxu0 %v1087
    %1113 = vmatprep.subr.mxu0 0.0
    %1114 = vmatpush1.msra.mxu0 %v1109
    %1115 = vmatprep.subr.mxu0 0.0
    %1116 = vmatpush1.msra.mxu0 0.0
    %1117 = vmatprep.subr.mxu0 0.0
    %1118 = vmatpush1.msra.mxu0 0.0
    %1119 = vmatprep.subr.mxu0 0.0
    %1120 = vmatpush1.msra.mxu0 0.0
    %1121 = vmatprep.subr.mxu0 0.0
    %1122 = vmatpush1.msra.mxu0 0.0
    %1123 = vmatprep.subr.mxu0 0.0
    %1124 = vmatpush1.msra.mxu0 0.0
    %1125 = vmatprep.subr.mxu0 0.0
    %1126 = vmatpush1.msra.mxu0 0.0
    %1127 = vmatprep.subr.mxu0 0.0
    %1128 = vmatpush1.msra.mxu0 0.0
    %1129 = vmatprep.subr.mxu0 0.0
    %1130 = vmatpush1.msra.mxu0 0.0
    %1131 = vmatprep.subr.mxu0 0.0
    %1132 = vmatpush1.msra.mxu0 0.0
    %1133 = vmatprep.subr.mxu0 0.0
    %1134 = vmatpush1.msra.mxu0 0.0
    %1135 = vmatprep.subr.mxu0 0.0
    %1136 = vmatpush1.msra.mxu0 0.0
    %1137 = vmatprep.subr.mxu0 0.0
    %1138 = vmatpush1.msra.mxu0 0.0
    %1139 = vmatprep.subr.mxu0 0.0
    %1140 = vmatpush1.msra.mxu0 0.0
    %1141 = vmatprep.subr.mxu0 0.0
    %1142 = vmatpush1.msra.mxu0 0.0
    %1143 = vmatprep.subr.mxu0 0.0
    %1144 = vmatpush1.msra.mxu0 0.0
    %1145 = vmatprep.subr.mxu0 0.0
    %1146 = vmatpush1.msra.mxu0 0.0
    %1147 = vmatprep.subr.mxu0 0.0
    %1148 = vmatpush1.msra.mxu0 0.0
    %1149 = vmatprep.subr.mxu0 0.0
    %1150 = vmatpush1.msra.mxu0 0.0
    %1151 = vmatprep.subr.mxu0 0.0
    %1152 = vmatpush1.msra.mxu0 0.0
    %1153 = vmatprep.subr.mxu0 0.0
    %1154 = vmatpush1.msra.mxu0 0.0
    %1155 = vmatprep.subr.mxu0 0.0
    %1156 = vmatpush1.msra.mxu0 0.0
    %1157 = vmatprep.subr.mxu0 0.0
    %1158 = vmatpush1.msra.mxu0 0.0
    %1159 = vmatprep.subr.mxu0 0.0
    %1160 = vmatpush1.msra.mxu0 0.0
    %1161 = vmatprep.subr.mxu0 0.0
    %1162 = vmatpush1.msra.mxu0 0.0
    %1163 = vmatprep.subr.mxu0 0.0
    %1164 = vmatpush1.msra.mxu0 0.0
    %1165 = vmatprep.subr.mxu0 0.0
    %1166 = vmatpush1.msra.mxu0 0.0
    %1167 = vmatprep.subr.mxu0 0.0
    %1168 = vmatpush1.msra.mxu0 0.0
    %1169 = vmatprep.subr.mxu0 0.0
    %1170 = vmatpush1.msra.mxu0 0.0
    %1171 = vmatprep.subr.mxu0 0.0
    %1172 = vmatpush1.msra.mxu0 0.0
    %1173 = vmatprep.subr.mxu0 0.0
    %1174 = vmatpush1.msra.mxu0 0.0
    %1175 = vmatprep.mubr.f32.mxu0 0.0
    %1176 = vmatmul.mubr.f32.gmra.mrb[0].mxu0 %v1103
    %v1177 = vpop.f32.mrb[0].mxu0
    %v1178 = vadd.f32 %v1101, %v1177
    %v1179 = vpop.f32.mrb[0].mxu0
    %1180 = vmatprep.mubr.f32.mxu0 0.0
    %1181 = vmatmul.mubr.f32.gmra.mrb[0].mxu0 %v1106
    %v1182 = vpop.f32.mrb[0].mxu0
    %v1183 = vadd.f32 %v1101, %v1182
    %v1184 = vpop.f32.mrb[0].mxu0
    %1185 = vdwg.mxu0
    %v1186 = vmax.f32 %v1178, 0.0
    %v1187 = vmax.f32 %v1183, 0.0
    %v1188 = vlaneseq
    %v1189 = vshrl.u32 %v1188, 7
    %v1190 = vsub.s32 0, %v1189
    %v1191 = vrot.slane %v52, %v1190
    %vm1192 = vcmask 523264
    %v1194 = vsel %vm1192, %v1186, 0
    %v1197 = vsel %vm1192, %v1187, 0
    %1199 = vmatprep.subr.mxu0 0.0
    %1200 = vmatpush1.msra.mxu0 %v1090
    %1201 = vmatprep.subr.mxu0 0.0
    %1202 = vmatpush1.msra.mxu0 %v1091
    %1203 = vmatprep.subr.mxu0 0.0
    %1204 = vmatpush1.msra.mxu0 %v1092
    %1205 = vmatprep.subr.mxu0 0.0
    %1206 = vmatpush1.msra.mxu0 %v1093
    %1207 = vmatprep.subr.mxu0 0.0
    %1208 = vmatpush1.msra.mxu0 %v1094
    %1209 = vmatprep.subr.mxu0 0.0
    %1210 = vmatpush1.msra.mxu0 %v1095
    %1211 = vmatprep.subr.mxu0 0.0
    %1212 = vmatpush1.msra.mxu0 %v1096
    %1213 = vmatprep.subr.mxu0 0.0
    %1214 = vmatpush1.msra.mxu0 %v1097
    %1215 = vmatprep.subr.mxu0 0.0
    %1216 = vmatpush1.msra.mxu0 0.0
    %1217 = vmatprep.subr.mxu0 0.0
    %1218 = vmatpush1.msra.mxu0 0.0
    %1219 = vmatprep.subr.mxu0 0.0
    %1220 = vmatpush1.msra.mxu0 0.0
    %1221 = vmatprep.subr.mxu0 0.0
    %1222 = vmatpush1.msra.mxu0 0.0
    %1223 = vmatprep.subr.mxu0 0.0
    %1224 = vmatpush1.msra.mxu0 0.0
    %1225 = vmatprep.subr.mxu0 0.0
    %1226 = vmatpush1.msra.mxu0 0.0
    %1227 = vmatprep.subr.mxu0 0.0
    %1228 = vmatpush1.msra.mxu0 0.0
    %1229 = vmatprep.subr.mxu0 0.0
    %1230 = vmatpush1.msra.mxu0 0.0
    %1231 = vmatprep.subr.mxu0 0.0
    %1232 = vmatpush1.msra.mxu0 0.0
    %1233 = vmatprep.subr.mxu0 0.0
    %1234 = vmatpush1.msra.mxu0 0.0
    %1235 = vmatprep.subr.mxu0 0.0
    %1236 = vmatpush1.msra.mxu0 0.0
    %1237 = vmatprep.subr.mxu0 0.0
    %1238 = vmatpush1.msra.mxu0 0.0
    %1239 = vmatprep.subr.mxu0 0.0
    %1240 = vmatpush1.msra.mxu0 0.0
    %1241 = vmatprep.subr.mxu0 0.0
    %1242 = vmatpush1.msra.mxu0 0.0
    %1243 = vmatprep.subr.mxu0 0.0
    %1244 = vmatpush1.msra.mxu0 0.0
    %1245 = vmatprep.subr.mxu0 0.0
    %1246 = vmatpush1.msra.mxu0 0.0
    %1247 = vmatprep.subr.mxu0 0.0
    %1248 = vmatpush1.msra.mxu0 0.0
    %1249 = vmatprep.subr.mxu0 0.0
    %1250 = vmatpush1.msra.mxu0 0.0
    %1251 = vmatprep.subr.mxu0 0.0
    %1252 = vmatpush1.msra.mxu0 0.0
    %1253 = vmatprep.subr.mxu0 0.0
    %1254 = vmatpush1.msra.mxu0 0.0
    %1255 = vmatprep.subr.mxu0 0.0
    %1256 = vmatpush1.msra.mxu0 0.0
    %1257 = vmatprep.subr.mxu0 0.0
    %1258 = vmatpush1.msra.mxu0 0.0
    %1259 = vmatprep.subr.mxu0 0.0
    %1260 = vmatpush1.msra.mxu0 0.0
    %1261 = vmatprep.subr.mxu0 0.0
    %1262 = vmatpush1.msra.mxu0 0.0
    %1263 = vmatprep.mubr.f32.mxu0 0.0
    %1264 = vmatmul.mubr.f32.gmra.mrb[0].mxu0 %v1194
    %v1265 = vpop.f32.mrb[0].mxu0
    %v1266 = vadd.f32 %v1191, %v1265
    %v1267 = vpop.f32.mrb[0].mxu0
    %1268 = vmatprep.mubr.f32.mxu0 0.0
    %1269 = vmatmul.mubr.f32.gmra.mrb[0].mxu0 %v1197
    %v1270 = vpop.f32.mrb[0].mxu0
    %v1271 = vadd.f32 %v1191, %v1270
    %v1272 = vpop.f32.mrb[0].mxu0
    %1273 = vdwg.mxu0
    %v1274 = vadd.f32 %v1085, %v1266
    %v1275 = vadd.f32 %v1086, %v1271
    %v1276 = vsel %vm61, %v1274, 0.0
    %1277 = vadd.xlane.f32.xlu0 %v1276
    %v1278 = vpop.xlane.xlu0 %1277
    %v1279 = vsel %vm61, %v1275, 0.0
    %1280 = vadd.xlane.f32.xlu0 %v1279
    %v1281 = vpop.xlane.xlu0 %1280
    %v1282 = vmul.f32 %v1278, %v1054
    %v1283 = vmul.f32 %v1281, %v1054
    %v1284 = vsub.f32 %v1274, %v1282
    %v1285 = vsub.f32 %v1275, %v1283
    %v1286 = vmul.f32 %v1284, %v1284
    %v1287 = vmul.f32 %v1285, %v1285
    %v1288 = vsel %vm61, %v1286, 0.0
    %1289 = vadd.xlane.f32.xlu0 %v1288
    %v1290 = vpop.xlane.xlu0 %1289
    %v1291 = vsel %vm61, %v1287, 0.0
    %1292 = vadd.xlane.f32.xlu0 %v1291
    %v1293 = vpop.xlane.xlu0 %1292
    %v1294 = vmul.f32 %v1290, %v1054
    %v1295 = vmul.f32 %v1293, %v1054
    %v1296 = vadd.f32 %v1294, 1e-05
    %v1297 = vadd.f32 %v1295, 1e-05
    %v1298 = vrsqrt.pop %v1296
    %v1299 = vrsqrt.pop %v1297
    %v1300 = vmul.f32 %v1284, %v1298
    %v1301 = vmul.f32 %v1285, %v1299
    %v1302 = vlaneseq
    %v1303 = vshrl.u32 %v1302, 7
    %v1304 = vsub.s32 0, %v1303
    %v1305 = vrot.slane %v55, %v1304
    %v1306 = vmul.f32 %v1300, %v1305
    %v1307 = vmul.f32 %v1301, %v1305
    %v1308 = vlaneseq
    %v1309 = vshrl.u32 %v1308, 7
    %v1310 = vsub.s32 0, %v1309
    %v1311 = vrot.slane %v56, %v1310
    %v1312 = vadd.f32 %v1306, %v1311
    %v1313 = vadd.f32 %v1307, %v1311
    %s1314 = scalar_lea.vmem %s1, 64
    %v1315 = vld [vmem:[%s1314] sm:$0xff]
    %v1316 = vld [vmem:[%s1314 + $0x8] sm:$0x3]
    %s1317 = scalar_lea.vmem %s1, 80
    %v1318 = vld [vmem:[%s1317] sm:$0xff]
    %v1319 = vld [vmem:[%s1317 + $0x8] sm:$0x3]
    %s1320 = scalar_lea.vmem %s1, 96
    %v1321 = vld [vmem:[%s1320] sm:$0xff]
    %v1322 = vld [vmem:[%s1320 + $0x8] sm:$0x3]
    %s1323 = scalar_lea.vmem %s1, 112
    %v1324 = vld [vmem:[%s1323] sm:$0xff]
    %v1325 = vld [vmem:[%s1323 + $0x8] sm:$0x3]
    %v1326 = vld [vmem:[%s2 + $0x9] sm:$0x1]
    %v1327 = vld [vmem:[%s2 + $0xa] sm:$0x1]
    %v1328 = vld [vmem:[%s2 + $0xb] sm:$0x1]
    %v1329 = vld [vmem:[%s2 + $0xc] sm:$0x1]
    %v1330 = vld [vmem:[%s2 + $0xd] sm:$0x1]
    %v1331 = vld [vmem:[%s2 + $0xe] sm:$0x1]
    %v1332 = vld [vmem:[%s2 + $0xf] sm:$0x1]
    %v1333 = vld [vmem:[%s2 + $0x10] sm:$0x1]
    %v1334 = vld [vmem:[%s2 + $0x11] sm:$0x1]
    %v1335 = vlaneseq
    %v1336 = vshrl.u32 %v1335, 7
    %v1337 = vsub.s32 0, %v1336
    %v1338 = vrot.slane %v1326, %v1337
    %v1340 = vsel %vm61, %v1312, 0
    %v1343 = vsel %vm61, %v1313, 0
    %v1346 = vsel %vm68, %v1316, 0
    %1348 = vmatprep.subr.mxu0 0.0
    %1349 = vmatpush1.msra.mxu0 %v1315
    %1350 = vmatprep.subr.mxu0 0.0
    %1351 = vmatpush1.msra.mxu0 %v1346
    %1352 = vmatprep.subr.mxu0 0.0
    %1353 = vmatpush1.msra.mxu0 0.0
    %1354 = vmatprep.subr.mxu0 0.0
    %1355 = vmatpush1.msra.mxu0 0.0
    %1356 = vmatprep.subr.mxu0 0.0
    %1357 = vmatpush1.msra.mxu0 0.0
    %1358 = vmatprep.subr.mxu0 0.0
    %1359 = vmatpush1.msra.mxu0 0.0
    %1360 = vmatprep.subr.mxu0 0.0
    %1361 = vmatpush1.msra.mxu0 0.0
    %1362 = vmatprep.subr.mxu0 0.0
    %1363 = vmatpush1.msra.mxu0 0.0
    %1364 = vmatprep.subr.mxu0 0.0
    %1365 = vmatpush1.msra.mxu0 0.0
    %1366 = vmatprep.subr.mxu0 0.0
    %1367 = vmatpush1.msra.mxu0 0.0
    %1368 = vmatprep.subr.mxu0 0.0
    %1369 = vmatpush1.msra.mxu0 0.0
    %1370 = vmatprep.subr.mxu0 0.0
    %1371 = vmatpush1.msra.mxu0 0.0
    %1372 = vmatprep.subr.mxu0 0.0
    %1373 = vmatpush1.msra.mxu0 0.0
    %1374 = vmatprep.subr.mxu0 0.0
    %1375 = vmatpush1.msra.mxu0 0.0
    %1376 = vmatprep.subr.mxu0 0.0
    %1377 = vmatpush1.msra.mxu0 0.0
    %1378 = vmatprep.subr.mxu0 0.0
    %1379 = vmatpush1.msra.mxu0 0.0
    %1380 = vmatprep.subr.mxu0 0.0
    %1381 = vmatpush1.msra.mxu0 0.0
    %1382 = vmatprep.subr.mxu0 0.0
    %1383 = vmatpush1.msra.mxu0 0.0
    %1384 = vmatprep.subr.mxu0 0.0
    %1385 = vmatpush1.msra.mxu0 0.0
    %1386 = vmatprep.subr.mxu0 0.0
    %1387 = vmatpush1.msra.mxu0 0.0
    %1388 = vmatprep.subr.mxu0 0.0
    %1389 = vmatpush1.msra.mxu0 0.0
    %1390 = vmatprep.subr.mxu0 0.0
    %1391 = vmatpush1.msra.mxu0 0.0
    %1392 = vmatprep.subr.mxu0 0.0
    %1393 = vmatpush1.msra.mxu0 0.0
    %1394 = vmatprep.subr.mxu0 0.0
    %1395 = vmatpush1.msra.mxu0 0.0
    %1396 = vmatprep.subr.mxu0 0.0
    %1397 = vmatpush1.msra.mxu0 0.0
    %1398 = vmatprep.subr.mxu0 0.0
    %1399 = vmatpush1.msra.mxu0 0.0
    %1400 = vmatprep.subr.mxu0 0.0
    %1401 = vmatpush1.msra.mxu0 0.0
    %1402 = vmatprep.subr.mxu0 0.0
    %1403 = vmatpush1.msra.mxu0 0.0
    %1404 = vmatprep.subr.mxu0 0.0
    %1405 = vmatpush1.msra.mxu0 0.0
    %1406 = vmatprep.subr.mxu0 0.0
    %1407 = vmatpush1.msra.mxu0 0.0
    %1408 = vmatprep.subr.mxu0 0.0
    %1409 = vmatpush1.msra.mxu0 0.0
    %1410 = vmatprep.subr.mxu0 0.0
    %1411 = vmatpush1.msra.mxu0 0.0
    %1412 = vmatprep.mubr.f32.mxu0 0.0
    %1413 = vmatmul.mubr.f32.gmra.mrb[0].mxu0 %v1340
    %v1414 = vpop.f32.mrb[0].mxu0
    %v1415 = vadd.f32 %v1338, %v1414
    %v1416 = vpop.f32.mrb[0].mxu0
    %1417 = vmatprep.mubr.f32.mxu0 0.0
    %1418 = vmatmul.mubr.f32.gmra.mrb[0].mxu0 %v1343
    %v1419 = vpop.f32.mrb[0].mxu0
    %v1420 = vadd.f32 %v1338, %v1419
    %v1421 = vpop.f32.mrb[0].mxu0
    %1422 = vdwg.mxu0
    %v1423 = vlaneseq
    %v1424 = vshrl.u32 %v1423, 7
    %v1425 = vsub.s32 0, %v1424
    %v1426 = vrot.slane %v1327, %v1425
    %v1428 = vsel %vm68, %v1319, 0
    %1430 = vmatprep.subr.mxu0 0.0
    %1431 = vmatpush1.msra.mxu0 %v1318
    %1432 = vmatprep.subr.mxu0 0.0
    %1433 = vmatpush1.msra.mxu0 %v1428
    %1434 = vmatprep.subr.mxu0 0.0
    %1435 = vmatpush1.msra.mxu0 0.0
    %1436 = vmatprep.subr.mxu0 0.0
    %1437 = vmatpush1.msra.mxu0 0.0
    %1438 = vmatprep.subr.mxu0 0.0
    %1439 = vmatpush1.msra.mxu0 0.0
    %1440 = vmatprep.subr.mxu0 0.0
    %1441 = vmatpush1.msra.mxu0 0.0
    %1442 = vmatprep.subr.mxu0 0.0
    %1443 = vmatpush1.msra.mxu0 0.0
    %1444 = vmatprep.subr.mxu0 0.0
    %1445 = vmatpush1.msra.mxu0 0.0
    %1446 = vmatprep.subr.mxu0 0.0
    %1447 = vmatpush1.msra.mxu0 0.0
    %1448 = vmatprep.subr.mxu0 0.0
    %1449 = vmatpush1.msra.mxu0 0.0
    %1450 = vmatprep.subr.mxu0 0.0
    %1451 = vmatpush1.msra.mxu0 0.0
    %1452 = vmatprep.subr.mxu0 0.0
    %1453 = vmatpush1.msra.mxu0 0.0
    %1454 = vmatprep.subr.mxu0 0.0
    %1455 = vmatpush1.msra.mxu0 0.0
    %1456 = vmatprep.subr.mxu0 0.0
    %1457 = vmatpush1.msra.mxu0 0.0
    %1458 = vmatprep.subr.mxu0 0.0
    %1459 = vmatpush1.msra.mxu0 0.0
    %1460 = vmatprep.subr.mxu0 0.0
    %1461 = vmatpush1.msra.mxu0 0.0
    %1462 = vmatprep.subr.mxu0 0.0
    %1463 = vmatpush1.msra.mxu0 0.0
    %1464 = vmatprep.subr.mxu0 0.0
    %1465 = vmatpush1.msra.mxu0 0.0
    %1466 = vmatprep.subr.mxu0 0.0
    %1467 = vmatpush1.msra.mxu0 0.0
    %1468 = vmatprep.subr.mxu0 0.0
    %1469 = vmatpush1.msra.mxu0 0.0
    %1470 = vmatprep.subr.mxu0 0.0
    %1471 = vmatpush1.msra.mxu0 0.0
    %1472 = vmatprep.subr.mxu0 0.0
    %1473 = vmatpush1.msra.mxu0 0.0
    %1474 = vmatprep.subr.mxu0 0.0
    %1475 = vmatpush1.msra.mxu0 0.0
    %1476 = vmatprep.subr.mxu0 0.0
    %1477 = vmatpush1.msra.mxu0 0.0
    %1478 = vmatprep.subr.mxu0 0.0
    %1479 = vmatpush1.msra.mxu0 0.0
    %1480 = vmatprep.subr.mxu0 0.0
    %1481 = vmatpush1.msra.mxu0 0.0
    %1482 = vmatprep.subr.mxu0 0.0
    %1483 = vmatpush1.msra.mxu0 0.0
    %1484 = vmatprep.subr.mxu0 0.0
    %1485 = vmatpush1.msra.mxu0 0.0
    %1486 = vmatprep.subr.mxu0 0.0
    %1487 = vmatpush1.msra.mxu0 0.0
    %1488 = vmatprep.subr.mxu0 0.0
    %1489 = vmatpush1.msra.mxu0 0.0
    %1490 = vmatprep.subr.mxu0 0.0
    %1491 = vmatpush1.msra.mxu0 0.0
    %1492 = vmatprep.subr.mxu0 0.0
    %1493 = vmatpush1.msra.mxu0 0.0
    %1494 = vmatprep.mubr.f32.mxu0 0.0
    %1495 = vmatmul.mubr.f32.gmra.mrb[0].mxu0 %v1340
    %v1496 = vpop.f32.mrb[0].mxu0
    %v1497 = vadd.f32 %v1426, %v1496
    %v1498 = vpop.f32.mrb[0].mxu0
    %1499 = vmatprep.mubr.f32.mxu0 0.0
    %1500 = vmatmul.mubr.f32.gmra.mrb[0].mxu0 %v1343
    %v1501 = vpop.f32.mrb[0].mxu0
    %v1502 = vadd.f32 %v1426, %v1501
    %v1503 = vpop.f32.mrb[0].mxu0
    %1504 = vdwg.mxu0
    %v1505 = vlaneseq
    %v1506 = vshrl.u32 %v1505, 7
    %v1507 = vsub.s32 0, %v1506
    %v1508 = vrot.slane %v1328, %v1507
    %v1510 = vsel %vm68, %v1322, 0
    %1512 = vmatprep.subr.mxu0 0.0
    %1513 = vmatpush1.msra.mxu0 %v1321
    %1514 = vmatprep.subr.mxu0 0.0
    %1515 = vmatpush1.msra.mxu0 %v1510
    %1516 = vmatprep.subr.mxu0 0.0
    %1517 = vmatpush1.msra.mxu0 0.0
    %1518 = vmatprep.subr.mxu0 0.0
    %1519 = vmatpush1.msra.mxu0 0.0
    %1520 = vmatprep.subr.mxu0 0.0
    %1521 = vmatpush1.msra.mxu0 0.0
    %1522 = vmatprep.subr.mxu0 0.0
    %1523 = vmatpush1.msra.mxu0 0.0
    %1524 = vmatprep.subr.mxu0 0.0
    %1525 = vmatpush1.msra.mxu0 0.0
    %1526 = vmatprep.subr.mxu0 0.0
    %1527 = vmatpush1.msra.mxu0 0.0
    %1528 = vmatprep.subr.mxu0 0.0
    %1529 = vmatpush1.msra.mxu0 0.0
    %1530 = vmatprep.subr.mxu0 0.0
    %1531 = vmatpush1.msra.mxu0 0.0
    %1532 = vmatprep.subr.mxu0 0.0
    %1533 = vmatpush1.msra.mxu0 0.0
    %1534 = vmatprep.subr.mxu0 0.0
    %1535 = vmatpush1.msra.mxu0 0.0
    %1536 = vmatprep.subr.mxu0 0.0
    %1537 = vmatpush1.msra.mxu0 0.0
    %1538 = vmatprep.subr.mxu0 0.0
    %1539 = vmatpush1.msra.mxu0 0.0
    %1540 = vmatprep.subr.mxu0 0.0
    %1541 = vmatpush1.msra.mxu0 0.0
    %1542 = vmatprep.subr.mxu0 0.0
    %1543 = vmatpush1.msra.mxu0 0.0
    %1544 = vmatprep.subr.mxu0 0.0
    %1545 = vmatpush1.msra.mxu0 0.0
    %1546 = vmatprep.subr.mxu0 0.0
    %1547 = vmatpush1.msra.mxu0 0.0
    %1548 = vmatprep.subr.mxu0 0.0
    %1549 = vmatpush1.msra.mxu0 0.0
    %1550 = vmatprep.subr.mxu0 0.0
    %1551 = vmatpush1.msra.mxu0 0.0
    %1552 = vmatprep.subr.mxu0 0.0
    %1553 = vmatpush1.msra.mxu0 0.0
    %1554 = vmatprep.subr.mxu0 0.0
    %1555 = vmatpush1.msra.mxu0 0.0
    %1556 = vmatprep.subr.mxu0 0.0
    %1557 = vmatpush1.msra.mxu0 0.0
    %1558 = vmatprep.subr.mxu0 0.0
    %1559 = vmatpush1.msra.mxu0 0.0
    %1560 = vmatprep.subr.mxu0 0.0
    %1561 = vmatpush1.msra.mxu0 0.0
    %1562 = vmatprep.subr.mxu0 0.0
    %1563 = vmatpush1.msra.mxu0 0.0
    %1564 = vmatprep.subr.mxu0 0.0
    %1565 = vmatpush1.msra.mxu0 0.0
    %1566 = vmatprep.subr.mxu0 0.0
    %1567 = vmatpush1.msra.mxu0 0.0
    %1568 = vmatprep.subr.mxu0 0.0
    %1569 = vmatpush1.msra.mxu0 0.0
    %1570 = vmatprep.subr.mxu0 0.0
    %1571 = vmatpush1.msra.mxu0 0.0
    %1572 = vmatprep.subr.mxu0 0.0
    %1573 = vmatpush1.msra.mxu0 0.0
    %1574 = vmatprep.subr.mxu0 0.0
    %1575 = vmatpush1.msra.mxu0 0.0
    %1576 = vmatprep.mubr.f32.mxu0 0.0
    %1577 = vmatmul.mubr.f32.gmra.mrb[0].mxu0 %v1340
    %v1578 = vpop.f32.mrb[0].mxu0
    %v1579 = vadd.f32 %v1508, %v1578
    %v1580 = vpop.f32.mrb[0].mxu0
    %1581 = vmatprep.mubr.f32.mxu0 0.0
    %1582 = vmatmul.mubr.f32.gmra.mrb[0].mxu0 %v1343
    %v1583 = vpop.f32.mrb[0].mxu0
    %v1584 = vadd.f32 %v1508, %v1583
    %v1585 = vpop.f32.mrb[0].mxu0
    %1586 = vdwg.mxu0
    %v1587 = vsel %vm312, %v1415, 0.0
    %v1588 = vsel %vm312, %v1420, 0.0
    %v1589 = vsel %vm312, %v1579, 0.0
    %v1590 = vsel %vm312, %v1584, 0.0
    %v1592 = vsel %vm61, %v1587, 0
    %v1595 = vsel %vm61, %v1497, 0
    %1597 = vmatprep.subr.mxu0 0.0
    %1598 = vmatpush1.xpose.msra.mxu0 %v1595
    %1599 = vmatprep.subr.mxu0 0.0
    %1600 = vmatpush1.xpose.msra.mxu0 0.0
    %1601 = vmatprep.subr.mxu0 0.0
    %1602 = vmatpush1.xpose.msra.mxu0 0.0
    %1603 = vmatprep.subr.mxu0 0.0
    %1604 = vmatpush1.xpose.msra.mxu0 0.0
    %1605 = vmatprep.subr.mxu0 0.0
    %1606 = vmatpush1.xpose.msra.mxu0 0.0
    %1607 = vmatprep.subr.mxu0 0.0
    %1608 = vmatpush1.xpose.msra.mxu0 0.0
    %1609 = vmatprep.subr.mxu0 0.0
    %1610 = vmatpush1.xpose.msra.mxu0 0.0
    %1611 = vmatprep.subr.mxu0 0.0
    %1612 = vmatpush1.xpose.msra.mxu0 0.0
    %1613 = vmatprep.subr.mxu0 0.0
    %1614 = vmatpush1.xpose.msra.mxu0 0.0
    %1615 = vmatprep.subr.mxu0 0.0
    %1616 = vmatpush1.xpose.msra.mxu0 0.0
    %1617 = vmatprep.subr.mxu0 0.0
    %1618 = vmatpush1.xpose.msra.mxu0 0.0
    %1619 = vmatprep.subr.mxu0 0.0
    %1620 = vmatpush1.xpose.msra.mxu0 0.0
    %1621 = vmatprep.subr.mxu0 0.0
    %1622 = vmatpush1.xpose.msra.mxu0 0.0
    %1623 = vmatprep.subr.mxu0 0.0
    %1624 = vmatpush1.xpose.msra.mxu0 0.0
    %1625 = vmatprep.subr.mxu0 0.0
    %1626 = vmatpush1.xpose.msra.mxu0 0.0
    %1627 = vmatprep.subr.mxu0 0.0
    %1628 = vmatpush1.xpose.msra.mxu0 0.0
    %1629 = vmatprep.subr.mxu0 0.0
    %1630 = vmatpush1.xpose.msra.mxu0 0.0
    %1631 = vmatprep.subr.mxu0 0.0
    %1632 = vmatpush1.xpose.msra.mxu0 0.0
    %1633 = vmatprep.subr.mxu0 0.0
    %1634 = vmatpush1.xpose.msra.mxu0 0.0
    %1635 = vmatprep.subr.mxu0 0.0
    %1636 = vmatpush1.xpose.msra.mxu0 0.0
    %1637 = vmatprep.subr.mxu0 0.0
    %1638 = vmatpush1.xpose.msra.mxu0 0.0
    %1639 = vmatprep.subr.mxu0 0.0
    %1640 = vmatpush1.xpose.msra.mxu0 0.0
    %1641 = vmatprep.subr.mxu0 0.0
    %1642 = vmatpush1.xpose.msra.mxu0 0.0
    %1643 = vmatprep.subr.mxu0 0.0
    %1644 = vmatpush1.xpose.msra.mxu0 0.0
    %1645 = vmatprep.subr.mxu0 0.0
    %1646 = vmatpush1.xpose.msra.mxu0 0.0
    %1647 = vmatprep.subr.mxu0 0.0
    %1648 = vmatpush1.xpose.msra.mxu0 0.0
    %1649 = vmatprep.subr.mxu0 0.0
    %1650 = vmatpush1.xpose.msra.mxu0 0.0
    %1651 = vmatprep.subr.mxu0 0.0
    %1652 = vmatpush1.xpose.msra.mxu0 0.0
    %1653 = vmatprep.subr.mxu0 0.0
    %1654 = vmatpush1.xpose.msra.mxu0 0.0
    %1655 = vmatprep.subr.mxu0 0.0
    %1656 = vmatpush1.xpose.msra.mxu0 0.0
    %1657 = vmatprep.subr.mxu0 0.0
    %1658 = vmatpush1.xpose.msra.mxu0 0.0
    %1659 = vmatprep.subr.mxu0 0.0
    %1660 = vmatpush1.xpose.msra.mxu0 0.0
    %1661 = vmatprep.mubr.f32.mxu0 0.0
    %1662 = vmatmul.mubr.f32.gmra.mrb[0].mxu0 %v1592
    %v1663 = vpop.f32.mrb[0].mxu0
    %v1664 = vadd.f32 0.0, %v1663
    %v1665 = vpop.f32.mrb[0].mxu0
    %1666 = vdwg.mxu0
    %v1668 = vsel %vm61, %v1588, 0
    %v1671 = vsel %vm61, %v1502, 0
    %1673 = vmatprep.subr.mxu0 0.0
    %1674 = vmatpush1.xpose.msra.mxu0 %v1671
    %1675 = vmatprep.subr.mxu0 0.0
    %1676 = vmatpush1.xpose.msra.mxu0 0.0
    %1677 = vmatprep.subr.mxu0 0.0
    %1678 = vmatpush1.xpose.msra.mxu0 0.0
    %1679 = vmatprep.subr.mxu0 0.0
    %1680 = vmatpush1.xpose.msra.mxu0 0.0
    %1681 = vmatprep.subr.mxu0 0.0
    %1682 = vmatpush1.xpose.msra.mxu0 0.0
    %1683 = vmatprep.subr.mxu0 0.0
    %1684 = vmatpush1.xpose.msra.mxu0 0.0
    %1685 = vmatprep.subr.mxu0 0.0
    %1686 = vmatpush1.xpose.msra.mxu0 0.0
    %1687 = vmatprep.subr.mxu0 0.0
    %1688 = vmatpush1.xpose.msra.mxu0 0.0
    %1689 = vmatprep.subr.mxu0 0.0
    %1690 = vmatpush1.xpose.msra.mxu0 0.0
    %1691 = vmatprep.subr.mxu0 0.0
    %1692 = vmatpush1.xpose.msra.mxu0 0.0
    %1693 = vmatprep.subr.mxu0 0.0
    %1694 = vmatpush1.xpose.msra.mxu0 0.0
    %1695 = vmatprep.subr.mxu0 0.0
    %1696 = vmatpush1.xpose.msra.mxu0 0.0
    %1697 = vmatprep.subr.mxu0 0.0
    %1698 = vmatpush1.xpose.msra.mxu0 0.0
    %1699 = vmatprep.subr.mxu0 0.0
    %1700 = vmatpush1.xpose.msra.mxu0 0.0
    %1701 = vmatprep.subr.mxu0 0.0
    %1702 = vmatpush1.xpose.msra.mxu0 0.0
    %1703 = vmatprep.subr.mxu0 0.0
    %1704 = vmatpush1.xpose.msra.mxu0 0.0
    %1705 = vmatprep.subr.mxu0 0.0
    %1706 = vmatpush1.xpose.msra.mxu0 0.0
    %1707 = vmatprep.subr.mxu0 0.0
    %1708 = vmatpush1.xpose.msra.mxu0 0.0
    %1709 = vmatprep.subr.mxu0 0.0
    %1710 = vmatpush1.xpose.msra.mxu0 0.0
    %1711 = vmatprep.subr.mxu0 0.0
    %1712 = vmatpush1.xpose.msra.mxu0 0.0
    %1713 = vmatprep.subr.mxu0 0.0
    %1714 = vmatpush1.xpose.msra.mxu0 0.0
    %1715 = vmatprep.subr.mxu0 0.0
    %1716 = vmatpush1.xpose.msra.mxu0 0.0
    %1717 = vmatprep.subr.mxu0 0.0
    %1718 = vmatpush1.xpose.msra.mxu0 0.0
    %1719 = vmatprep.subr.mxu0 0.0
    %1720 = vmatpush1.xpose.msra.mxu0 0.0
    %1721 = vmatprep.subr.mxu0 0.0
    %1722 = vmatpush1.xpose.msra.mxu0 0.0
    %1723 = vmatprep.subr.mxu0 0.0
    %1724 = vmatpush1.xpose.msra.mxu0 0.0
    %1725 = vmatprep.subr.mxu0 0.0
    %1726 = vmatpush1.xpose.msra.mxu0 0.0
    %1727 = vmatprep.subr.mxu0 0.0
    %1728 = vmatpush1.xpose.msra.mxu0 0.0
    %1729 = vmatprep.subr.mxu0 0.0
    %1730 = vmatpush1.xpose.msra.mxu0 0.0
    %1731 = vmatprep.subr.mxu0 0.0
    %1732 = vmatpush1.xpose.msra.mxu0 0.0
    %1733 = vmatprep.subr.mxu0 0.0
    %1734 = vmatpush1.xpose.msra.mxu0 0.0
    %1735 = vmatprep.subr.mxu0 0.0
    %1736 = vmatpush1.xpose.msra.mxu0 0.0
    %1737 = vmatprep.mubr.f32.mxu0 0.0
    %1738 = vmatmul.mubr.f32.gmra.mrb[0].mxu0 %v1668
    %v1739 = vpop.f32.mrb[0].mxu0
    %v1740 = vadd.f32 0.0, %v1739
    %v1741 = vpop.f32.mrb[0].mxu0
    %1742 = vdwg.mxu0
    %v1743 = vsel %vm469, %v1664, -inf
    %1744 = vmax.xlane.f32.xlu0 %v1743
    %v1745 = vpop.xlane.xlu0 %1744
    %v1746 = vsel %vm469, %v1740, -inf
    %1747 = vmax.xlane.f32.xlu0 %v1746
    %v1748 = vpop.xlane.xlu0 %1747
    %v1749 = vsub.f32 %v1664, %v1745
    %v1750 = vsub.f32 %v1740, %v1748
    %v1751 = vmul.f32 %v1749, 1.442695
    %v1752 = vpow.pop %v1751
    %v1753 = vmul.f32 %v1750, 1.442695
    %v1754 = vpow.pop %v1753
    %v1755 = vsel %vm469, %v1752, 0.0
    %1756 = vadd.xlane.f32.xlu0 %v1755
    %v1757 = vpop.xlane.xlu0 %1756
    %v1758 = vsel %vm469, %v1754, 0.0
    %1759 = vadd.xlane.f32.xlu0 %v1758
    %v1760 = vpop.xlane.xlu0 %1759
    %v1761 = vrcp.pop %v1757
    %v1762 = vmul.f32 %v1752, %v1761
    %v1763 = vrcp.pop %v1760
    %v1764 = vmul.f32 %v1754, %v1763
    %v1765 = vsel %vm493, %v1415, 0.0
    %v1766 = vsel %vm493, %v1420, 0.0
    %v1767 = vsel %vm493, %v1579, 0.0
    %v1768 = vsel %vm493, %v1584, 0.0
    %v1770 = vsel %vm61, %v1765, 0
    %1772 = vmatprep.subr.mxu0 0.0
    %1773 = vmatpush1.xpose.msra.mxu0 %v1595
    %1774 = vmatprep.subr.mxu0 0.0
    %1775 = vmatpush1.xpose.msra.mxu0 0.0
    %1776 = vmatprep.subr.mxu0 0.0
    %1777 = vmatpush1.xpose.msra.mxu0 0.0
    %1778 = vmatprep.subr.mxu0 0.0
    %1779 = vmatpush1.xpose.msra.mxu0 0.0
    %1780 = vmatprep.subr.mxu0 0.0
    %1781 = vmatpush1.xpose.msra.mxu0 0.0
    %1782 = vmatprep.subr.mxu0 0.0
    %1783 = vmatpush1.xpose.msra.mxu0 0.0
    %1784 = vmatprep.subr.mxu0 0.0
    %1785 = vmatpush1.xpose.msra.mxu0 0.0
    %1786 = vmatprep.subr.mxu0 0.0
    %1787 = vmatpush1.xpose.msra.mxu0 0.0
    %1788 = vmatprep.subr.mxu0 0.0
    %1789 = vmatpush1.xpose.msra.mxu0 0.0
    %1790 = vmatprep.subr.mxu0 0.0
    %1791 = vmatpush1.xpose.msra.mxu0 0.0
    %1792 = vmatprep.subr.mxu0 0.0
    %1793 = vmatpush1.xpose.msra.mxu0 0.0
    %1794 = vmatprep.subr.mxu0 0.0
    %1795 = vmatpush1.xpose.msra.mxu0 0.0
    %1796 = vmatprep.subr.mxu0 0.0
    %1797 = vmatpush1.xpose.msra.mxu0 0.0
    %1798 = vmatprep.subr.mxu0 0.0
    %1799 = vmatpush1.xpose.msra.mxu0 0.0
    %1800 = vmatprep.subr.mxu0 0.0
    %1801 = vmatpush1.xpose.msra.mxu0 0.0
    %1802 = vmatprep.subr.mxu0 0.0
    %1803 = vmatpush1.xpose.msra.mxu0 0.0
    %1804 = vmatprep.subr.mxu0 0.0
    %1805 = vmatpush1.xpose.msra.mxu0 0.0
    %1806 = vmatprep.subr.mxu0 0.0
    %1807 = vmatpush1.xpose.msra.mxu0 0.0
    %1808 = vmatprep.subr.mxu0 0.0
    %1809 = vmatpush1.xpose.msra.mxu0 0.0
    %1810 = vmatprep.subr.mxu0 0.0
    %1811 = vmatpush1.xpose.msra.mxu0 0.0
    %1812 = vmatprep.subr.mxu0 0.0
    %1813 = vmatpush1.xpose.msra.mxu0 0.0
    %1814 = vmatprep.subr.mxu0 0.0
    %1815 = vmatpush1.xpose.msra.mxu0 0.0
    %1816 = vmatprep.subr.mxu0 0.0
    %1817 = vmatpush1.xpose.msra.mxu0 0.0
    %1818 = vmatprep.subr.mxu0 0.0
    %1819 = vmatpush1.xpose.msra.mxu0 0.0
    %1820 = vmatprep.subr.mxu0 0.0
    %1821 = vmatpush1.xpose.msra.mxu0 0.0
    %1822 = vmatprep.subr.mxu0 0.0
    %1823 = vmatpush1.xpose.msra.mxu0 0.0
    %1824 = vmatprep.subr.mxu0 0.0
    %1825 = vmatpush1.xpose.msra.mxu0 0.0
    %1826 = vmatprep.subr.mxu0 0.0
    %1827 = vmatpush1.xpose.msra.mxu0 0.0
    %1828 = vmatprep.subr.mxu0 0.0
    %1829 = vmatpush1.xpose.msra.mxu0 0.0
    %1830 = vmatprep.subr.mxu0 0.0
    %1831 = vmatpush1.xpose.msra.mxu0 0.0
    %1832 = vmatprep.subr.mxu0 0.0
    %1833 = vmatpush1.xpose.msra.mxu0 0.0
    %1834 = vmatprep.subr.mxu0 0.0
    %1835 = vmatpush1.xpose.msra.mxu0 0.0
    %1836 = vmatprep.mubr.f32.mxu0 0.0
    %1837 = vmatmul.mubr.f32.gmra.mrb[0].mxu0 %v1770
    %v1838 = vpop.f32.mrb[0].mxu0
    %v1839 = vadd.f32 0.0, %v1838
    %v1840 = vpop.f32.mrb[0].mxu0
    %1841 = vdwg.mxu0
    %v1843 = vsel %vm61, %v1766, 0
    %1845 = vmatprep.subr.mxu0 0.0
    %1846 = vmatpush1.xpose.msra.mxu0 %v1671
    %1847 = vmatprep.subr.mxu0 0.0
    %1848 = vmatpush1.xpose.msra.mxu0 0.0
    %1849 = vmatprep.subr.mxu0 0.0
    %1850 = vmatpush1.xpose.msra.mxu0 0.0
    %1851 = vmatprep.subr.mxu0 0.0
    %1852 = vmatpush1.xpose.msra.mxu0 0.0
    %1853 = vmatprep.subr.mxu0 0.0
    %1854 = vmatpush1.xpose.msra.mxu0 0.0
    %1855 = vmatprep.subr.mxu0 0.0
    %1856 = vmatpush1.xpose.msra.mxu0 0.0
    %1857 = vmatprep.subr.mxu0 0.0
    %1858 = vmatpush1.xpose.msra.mxu0 0.0
    %1859 = vmatprep.subr.mxu0 0.0
    %1860 = vmatpush1.xpose.msra.mxu0 0.0
    %1861 = vmatprep.subr.mxu0 0.0
    %1862 = vmatpush1.xpose.msra.mxu0 0.0
    %1863 = vmatprep.subr.mxu0 0.0
    %1864 = vmatpush1.xpose.msra.mxu0 0.0
    %1865 = vmatprep.subr.mxu0 0.0
    %1866 = vmatpush1.xpose.msra.mxu0 0.0
    %1867 = vmatprep.subr.mxu0 0.0
    %1868 = vmatpush1.xpose.msra.mxu0 0.0
    %1869 = vmatprep.subr.mxu0 0.0
    %1870 = vmatpush1.xpose.msra.mxu0 0.0
    %1871 = vmatprep.subr.mxu0 0.0
    %1872 = vmatpush1.xpose.msra.mxu0 0.0
    %1873 = vmatprep.subr.mxu0 0.0
    %1874 = vmatpush1.xpose.msra.mxu0 0.0
    %1875 = vmatprep.subr.mxu0 0.0
    %1876 = vmatpush1.xpose.msra.mxu0 0.0
    %1877 = vmatprep.subr.mxu0 0.0
    %1878 = vmatpush1.xpose.msra.mxu0 0.0
    %1879 = vmatprep.subr.mxu0 0.0
    %1880 = vmatpush1.xpose.msra.mxu0 0.0
    %1881 = vmatprep.subr.mxu0 0.0
    %1882 = vmatpush1.xpose.msra.mxu0 0.0
    %1883 = vmatprep.subr.mxu0 0.0
    %1884 = vmatpush1.xpose.msra.mxu0 0.0
    %1885 = vmatprep.subr.mxu0 0.0
    %1886 = vmatpush1.xpose.msra.mxu0 0.0
    %1887 = vmatprep.subr.mxu0 0.0
    %1888 = vmatpush1.xpose.msra.mxu0 0.0
    %1889 = vmatprep.subr.mxu0 0.0
    %1890 = vmatpush1.xpose.msra.mxu0 0.0
    %1891 = vmatprep.subr.mxu0 0.0
    %1892 = vmatpush1.xpose.msra.mxu0 0.0
    %1893 = vmatprep.subr.mxu0 0.0
    %1894 = vmatpush1.xpose.msra.mxu0 0.0
    %1895 = vmatprep.subr.mxu0 0.0
    %1896 = vmatpush1.xpose.msra.mxu0 0.0
    %1897 = vmatprep.subr.mxu0 0.0
    %1898 = vmatpush1.xpose.msra.mxu0 0.0
    %1899 = vmatprep.subr.mxu0 0.0
    %1900 = vmatpush1.xpose.msra.mxu0 0.0
    %1901 = vmatprep.subr.mxu0 0.0
    %1902 = vmatpush1.xpose.msra.mxu0 0.0
    %1903 = vmatprep.subr.mxu0 0.0
    %1904 = vmatpush1.xpose.msra.mxu0 0.0
    %1905 = vmatprep.subr.mxu0 0.0
    %1906 = vmatpush1.xpose.msra.mxu0 0.0
    %1907 = vmatprep.subr.mxu0 0.0
    %1908 = vmatpush1.xpose.msra.mxu0 0.0
    %1909 = vmatprep.mubr.f32.mxu0 0.0
    %1910 = vmatmul.mubr.f32.gmra.mrb[0].mxu0 %v1843
    %v1911 = vpop.f32.mrb[0].mxu0
    %v1912 = vadd.f32 0.0, %v1911
    %v1913 = vpop.f32.mrb[0].mxu0
    %1914 = vdwg.mxu0
    %v1915 = vsel %vm469, %v1839, -inf
    %1916 = vmax.xlane.f32.xlu0 %v1915
    %v1917 = vpop.xlane.xlu0 %1916
    %v1918 = vsel %vm469, %v1912, -inf
    %1919 = vmax.xlane.f32.xlu0 %v1918
    %v1920 = vpop.xlane.xlu0 %1919
    %v1921 = vsub.f32 %v1839, %v1917
    %v1922 = vsub.f32 %v1912, %v1920
    %v1923 = vmul.f32 %v1921, 1.442695
    %v1924 = vpow.pop %v1923
    %v1925 = vmul.f32 %v1922, 1.442695
    %v1926 = vpow.pop %v1925
    %v1927 = vsel %vm469, %v1924, 0.0
    %1928 = vadd.xlane.f32.xlu0 %v1927
    %v1929 = vpop.xlane.xlu0 %1928
    %v1930 = vsel %vm469, %v1926, 0.0
    %1931 = vadd.xlane.f32.xlu0 %v1930
    %v1932 = vpop.xlane.xlu0 %1931
    %v1933 = vrcp.pop %v1929
    %v1934 = vmul.f32 %v1924, %v1933
    %v1935 = vrcp.pop %v1932
    %v1936 = vmul.f32 %v1926, %v1935
    %v1938 = vsel %vm469, %v1934, 0
    %1940 = vmatprep.subr.mxu0 0.0
    %1941 = vmatpush1.msra.mxu0 %v1767
    %1942 = vmatprep.subr.mxu0 0.0
    %1943 = vmatpush1.msra.mxu0 0.0
    %1944 = vmatprep.subr.mxu0 0.0
    %1945 = vmatpush1.msra.mxu0 0.0
    %1946 = vmatprep.subr.mxu0 0.0
    %1947 = vmatpush1.msra.mxu0 0.0
    %1948 = vmatprep.subr.mxu0 0.0
    %1949 = vmatpush1.msra.mxu0 0.0
    %1950 = vmatprep.subr.mxu0 0.0
    %1951 = vmatpush1.msra.mxu0 0.0
    %1952 = vmatprep.subr.mxu0 0.0
    %1953 = vmatpush1.msra.mxu0 0.0
    %1954 = vmatprep.subr.mxu0 0.0
    %1955 = vmatpush1.msra.mxu0 0.0
    %1956 = vmatprep.subr.mxu0 0.0
    %1957 = vmatpush1.msra.mxu0 0.0
    %1958 = vmatprep.subr.mxu0 0.0
    %1959 = vmatpush1.msra.mxu0 0.0
    %1960 = vmatprep.subr.mxu0 0.0
    %1961 = vmatpush1.msra.mxu0 0.0
    %1962 = vmatprep.subr.mxu0 0.0
    %1963 = vmatpush1.msra.mxu0 0.0
    %1964 = vmatprep.subr.mxu0 0.0
    %1965 = vmatpush1.msra.mxu0 0.0
    %1966 = vmatprep.subr.mxu0 0.0
    %1967 = vmatpush1.msra.mxu0 0.0
    %1968 = vmatprep.subr.mxu0 0.0
    %1969 = vmatpush1.msra.mxu0 0.0
    %1970 = vmatprep.subr.mxu0 0.0
    %1971 = vmatpush1.msra.mxu0 0.0
    %1972 = vmatprep.subr.mxu0 0.0
    %1973 = vmatpush1.msra.mxu0 0.0
    %1974 = vmatprep.subr.mxu0 0.0
    %1975 = vmatpush1.msra.mxu0 0.0
    %1976 = vmatprep.subr.mxu0 0.0
    %1977 = vmatpush1.msra.mxu0 0.0
    %1978 = vmatprep.subr.mxu0 0.0
    %1979 = vmatpush1.msra.mxu0 0.0
    %1980 = vmatprep.subr.mxu0 0.0
    %1981 = vmatpush1.msra.mxu0 0.0
    %1982 = vmatprep.subr.mxu0 0.0
    %1983 = vmatpush1.msra.mxu0 0.0
    %1984 = vmatprep.subr.mxu0 0.0
    %1985 = vmatpush1.msra.mxu0 0.0
    %1986 = vmatprep.subr.mxu0 0.0
    %1987 = vmatpush1.msra.mxu0 0.0
    %1988 = vmatprep.subr.mxu0 0.0
    %1989 = vmatpush1.msra.mxu0 0.0
    %1990 = vmatprep.subr.mxu0 0.0
    %1991 = vmatpush1.msra.mxu0 0.0
    %1992 = vmatprep.subr.mxu0 0.0
    %1993 = vmatpush1.msra.mxu0 0.0
    %1994 = vmatprep.subr.mxu0 0.0
    %1995 = vmatpush1.msra.mxu0 0.0
    %1996 = vmatprep.subr.mxu0 0.0
    %1997 = vmatpush1.msra.mxu0 0.0
    %1998 = vmatprep.subr.mxu0 0.0
    %1999 = vmatpush1.msra.mxu0 0.0
    %2000 = vmatprep.subr.mxu0 0.0
    %2001 = vmatpush1.msra.mxu0 0.0
    %2002 = vmatprep.subr.mxu0 0.0
    %2003 = vmatpush1.msra.mxu0 0.0
    %2004 = vmatprep.mubr.f32.mxu0 0.0
    %2005 = vmatmul.mubr.f32.gmra.mrb[0].mxu0 %v1938
    %v2006 = vpop.f32.mrb[0].mxu0
    %v2007 = vadd.f32 0.0, %v2006
    %v2008 = vpop.f32.mrb[0].mxu0
    %2009 = vdwg.mxu0
    %v2011 = vsel %vm469, %v1936, 0
    %2013 = vmatprep.subr.mxu0 0.0
    %2014 = vmatpush1.msra.mxu0 %v1768
    %2015 = vmatprep.subr.mxu0 0.0
    %2016 = vmatpush1.msra.mxu0 0.0
    %2017 = vmatprep.subr.mxu0 0.0
    %2018 = vmatpush1.msra.mxu0 0.0
    %2019 = vmatprep.subr.mxu0 0.0
    %2020 = vmatpush1.msra.mxu0 0.0
    %2021 = vmatprep.subr.mxu0 0.0
    %2022 = vmatpush1.msra.mxu0 0.0
    %2023 = vmatprep.subr.mxu0 0.0
    %2024 = vmatpush1.msra.mxu0 0.0
    %2025 = vmatprep.subr.mxu0 0.0
    %2026 = vmatpush1.msra.mxu0 0.0
    %2027 = vmatprep.subr.mxu0 0.0
    %2028 = vmatpush1.msra.mxu0 0.0
    %2029 = vmatprep.subr.mxu0 0.0
    %2030 = vmatpush1.msra.mxu0 0.0
    %2031 = vmatprep.subr.mxu0 0.0
    %2032 = vmatpush1.msra.mxu0 0.0
    %2033 = vmatprep.subr.mxu0 0.0
    %2034 = vmatpush1.msra.mxu0 0.0
    %2035 = vmatprep.subr.mxu0 0.0
    %2036 = vmatpush1.msra.mxu0 0.0
    %2037 = vmatprep.subr.mxu0 0.0
    %2038 = vmatpush1.msra.mxu0 0.0
    %2039 = vmatprep.subr.mxu0 0.0
    %2040 = vmatpush1.msra.mxu0 0.0
    %2041 = vmatprep.subr.mxu0 0.0
    %2042 = vmatpush1.msra.mxu0 0.0
    %2043 = vmatprep.subr.mxu0 0.0
    %2044 = vmatpush1.msra.mxu0 0.0
    %2045 = vmatprep.subr.mxu0 0.0
    %2046 = vmatpush1.msra.mxu0 0.0
    %2047 = vmatprep.subr.mxu0 0.0
    %2048 = vmatpush1.msra.mxu0 0.0
    %2049 = vmatprep.subr.mxu0 0.0
    %2050 = vmatpush1.msra.mxu0 0.0
    %2051 = vmatprep.subr.mxu0 0.0
    %2052 = vmatpush1.msra.mxu0 0.0
    %2053 = vmatprep.subr.mxu0 0.0
    %2054 = vmatpush1.msra.mxu0 0.0
    %2055 = vmatprep.subr.mxu0 0.0
    %2056 = vmatpush1.msra.mxu0 0.0
    %2057 = vmatprep.subr.mxu0 0.0
    %2058 = vmatpush1.msra.mxu0 0.0
    %2059 = vmatprep.subr.mxu0 0.0
    %2060 = vmatpush1.msra.mxu0 0.0
    %2061 = vmatprep.subr.mxu0 0.0
    %2062 = vmatpush1.msra.mxu0 0.0
    %2063 = vmatprep.subr.mxu0 0.0
    %2064 = vmatpush1.msra.mxu0 0.0
    %2065 = vmatprep.subr.mxu0 0.0
    %2066 = vmatpush1.msra.mxu0 0.0
    %2067 = vmatprep.subr.mxu0 0.0
    %2068 = vmatpush1.msra.mxu0 0.0
    %2069 = vmatprep.subr.mxu0 0.0
    %2070 = vmatpush1.msra.mxu0 0.0
    %2071 = vmatprep.subr.mxu0 0.0
    %2072 = vmatpush1.msra.mxu0 0.0
    %2073 = vmatprep.subr.mxu0 0.0
    %2074 = vmatpush1.msra.mxu0 0.0
    %2075 = vmatprep.subr.mxu0 0.0
    %2076 = vmatpush1.msra.mxu0 0.0
    %2077 = vmatprep.mubr.f32.mxu0 0.0
    %2078 = vmatmul.mubr.f32.gmra.mrb[0].mxu0 %v2011
    %v2079 = vpop.f32.mrb[0].mxu0
    %v2080 = vadd.f32 0.0, %v2079
    %v2081 = vpop.f32.mrb[0].mxu0
    %2082 = vdwg.mxu0
    %v2084 = vsel %vm469, %v1762, 0
    %2086 = vmatprep.subr.mxu0 0.0
    %2087 = vmatpush1.msra.mxu0 %v1589
    %2088 = vmatprep.subr.mxu0 0.0
    %2089 = vmatpush1.msra.mxu0 0.0
    %2090 = vmatprep.subr.mxu0 0.0
    %2091 = vmatpush1.msra.mxu0 0.0
    %2092 = vmatprep.subr.mxu0 0.0
    %2093 = vmatpush1.msra.mxu0 0.0
    %2094 = vmatprep.subr.mxu0 0.0
    %2095 = vmatpush1.msra.mxu0 0.0
    %2096 = vmatprep.subr.mxu0 0.0
    %2097 = vmatpush1.msra.mxu0 0.0
    %2098 = vmatprep.subr.mxu0 0.0
    %2099 = vmatpush1.msra.mxu0 0.0
    %2100 = vmatprep.subr.mxu0 0.0
    %2101 = vmatpush1.msra.mxu0 0.0
    %2102 = vmatprep.subr.mxu0 0.0
    %2103 = vmatpush1.msra.mxu0 0.0
    %2104 = vmatprep.subr.mxu0 0.0
    %2105 = vmatpush1.msra.mxu0 0.0
    %2106 = vmatprep.subr.mxu0 0.0
    %2107 = vmatpush1.msra.mxu0 0.0
    %2108 = vmatprep.subr.mxu0 0.0
    %2109 = vmatpush1.msra.mxu0 0.0
    %2110 = vmatprep.subr.mxu0 0.0
    %2111 = vmatpush1.msra.mxu0 0.0
    %2112 = vmatprep.subr.mxu0 0.0
    %2113 = vmatpush1.msra.mxu0 0.0
    %2114 = vmatprep.subr.mxu0 0.0
    %2115 = vmatpush1.msra.mxu0 0.0
    %2116 = vmatprep.subr.mxu0 0.0
    %2117 = vmatpush1.msra.mxu0 0.0
    %2118 = vmatprep.subr.mxu0 0.0
    %2119 = vmatpush1.msra.mxu0 0.0
    %2120 = vmatprep.subr.mxu0 0.0
    %2121 = vmatpush1.msra.mxu0 0.0
    %2122 = vmatprep.subr.mxu0 0.0
    %2123 = vmatpush1.msra.mxu0 0.0
    %2124 = vmatprep.subr.mxu0 0.0
    %2125 = vmatpush1.msra.mxu0 0.0
    %2126 = vmatprep.subr.mxu0 0.0
    %2127 = vmatpush1.msra.mxu0 0.0
    %2128 = vmatprep.subr.mxu0 0.0
    %2129 = vmatpush1.msra.mxu0 0.0
    %2130 = vmatprep.subr.mxu0 0.0
    %2131 = vmatpush1.msra.mxu0 0.0
    %2132 = vmatprep.subr.mxu0 0.0
    %2133 = vmatpush1.msra.mxu0 0.0
    %2134 = vmatprep.subr.mxu0 0.0
    %2135 = vmatpush1.msra.mxu0 0.0
    %2136 = vmatprep.subr.mxu0 0.0
    %2137 = vmatpush1.msra.mxu0 0.0
    %2138 = vmatprep.subr.mxu0 0.0
    %2139 = vmatpush1.msra.mxu0 0.0
    %2140 = vmatprep.subr.mxu0 0.0
    %2141 = vmatpush1.msra.mxu0 0.0
    %2142 = vmatprep.subr.mxu0 0.0
    %2143 = vmatpush1.msra.mxu0 0.0
    %2144 = vmatprep.subr.mxu0 0.0
    %2145 = vmatpush1.msra.mxu0 0.0
    %2146 = vmatprep.subr.mxu0 0.0
    %2147 = vmatpush1.msra.mxu0 0.0
    %2148 = vmatprep.subr.mxu0 0.0
    %2149 = vmatpush1.msra.mxu0 0.0
    %2150 = vmatprep.mubr.f32.mxu0 0.0
    %2151 = vmatmul.mubr.f32.gmra.mrb[0].mxu0 %v2084
    %v2152 = vpop.f32.mrb[0].mxu0
    %v2153 = vadd.f32 %v2007, %v2152
    %v2154 = vpop.f32.mrb[0].mxu0
    %2155 = vdwg.mxu0
    %v2157 = vsel %vm469, %v1764, 0
    %2159 = vmatprep.subr.mxu0 0.0
    %2160 = vmatpush1.msra.mxu0 %v1590
    %2161 = vmatprep.subr.mxu0 0.0
    %2162 = vmatpush1.msra.mxu0 0.0
    %2163 = vmatprep.subr.mxu0 0.0
    %2164 = vmatpush1.msra.mxu0 0.0
    %2165 = vmatprep.subr.mxu0 0.0
    %2166 = vmatpush1.msra.mxu0 0.0
    %2167 = vmatprep.subr.mxu0 0.0
    %2168 = vmatpush1.msra.mxu0 0.0
    %2169 = vmatprep.subr.mxu0 0.0
    %2170 = vmatpush1.msra.mxu0 0.0
    %2171 = vmatprep.subr.mxu0 0.0
    %2172 = vmatpush1.msra.mxu0 0.0
    %2173 = vmatprep.subr.mxu0 0.0
    %2174 = vmatpush1.msra.mxu0 0.0
    %2175 = vmatprep.subr.mxu0 0.0
    %2176 = vmatpush1.msra.mxu0 0.0
    %2177 = vmatprep.subr.mxu0 0.0
    %2178 = vmatpush1.msra.mxu0 0.0
    %2179 = vmatprep.subr.mxu0 0.0
    %2180 = vmatpush1.msra.mxu0 0.0
    %2181 = vmatprep.subr.mxu0 0.0
    %2182 = vmatpush1.msra.mxu0 0.0
    %2183 = vmatprep.subr.mxu0 0.0
    %2184 = vmatpush1.msra.mxu0 0.0
    %2185 = vmatprep.subr.mxu0 0.0
    %2186 = vmatpush1.msra.mxu0 0.0
    %2187 = vmatprep.subr.mxu0 0.0
    %2188 = vmatpush1.msra.mxu0 0.0
    %2189 = vmatprep.subr.mxu0 0.0
    %2190 = vmatpush1.msra.mxu0 0.0
    %2191 = vmatprep.subr.mxu0 0.0
    %2192 = vmatpush1.msra.mxu0 0.0
    %2193 = vmatprep.subr.mxu0 0.0
    %2194 = vmatpush1.msra.mxu0 0.0
    %2195 = vmatprep.subr.mxu0 0.0
    %2196 = vmatpush1.msra.mxu0 0.0
    %2197 = vmatprep.subr.mxu0 0.0
    %2198 = vmatpush1.msra.mxu0 0.0
    %2199 = vmatprep.subr.mxu0 0.0
    %2200 = vmatpush1.msra.mxu0 0.0
    %2201 = vmatprep.subr.mxu0 0.0
    %2202 = vmatpush1.msra.mxu0 0.0
    %2203 = vmatprep.subr.mxu0 0.0
    %2204 = vmatpush1.msra.mxu0 0.0
    %2205 = vmatprep.subr.mxu0 0.0
    %2206 = vmatpush1.msra.mxu0 0.0
    %2207 = vmatprep.subr.mxu0 0.0
    %2208 = vmatpush1.msra.mxu0 0.0
    %2209 = vmatprep.subr.mxu0 0.0
    %2210 = vmatpush1.msra.mxu0 0.0
    %2211 = vmatprep.subr.mxu0 0.0
    %2212 = vmatpush1.msra.mxu0 0.0
    %2213 = vmatprep.subr.mxu0 0.0
    %2214 = vmatpush1.msra.mxu0 0.0
    %2215 = vmatprep.subr.mxu0 0.0
    %2216 = vmatpush1.msra.mxu0 0.0
    %2217 = vmatprep.subr.mxu0 0.0
    %2218 = vmatpush1.msra.mxu0 0.0
    %2219 = vmatprep.subr.mxu0 0.0
    %2220 = vmatpush1.msra.mxu0 0.0
    %2221 = vmatprep.subr.mxu0 0.0
    %2222 = vmatpush1.msra.mxu0 0.0
    %2223 = vmatprep.mubr.f32.mxu0 0.0
    %2224 = vmatmul.mubr.f32.gmra.mrb[0].mxu0 %v2157
    %v2225 = vpop.f32.mrb[0].mxu0
    %v2226 = vadd.f32 %v2080, %v2225
    %v2227 = vpop.f32.mrb[0].mxu0
    %2228 = vdwg.mxu0
    %v2229 = vlaneseq
    %v2230 = vshrl.u32 %v2229, 7
    %v2231 = vsub.s32 0, %v2230
    %v2232 = vrot.slane %v1329, %v2231
    %v2234 = vsel %vm61, %v2153, 0
    %v2237 = vsel %vm61, %v2226, 0
    %v2240 = vsel %vm68, %v1325, 0
    %2242 = vmatprep.subr.mxu0 0.0
    %2243 = vmatpush1.msra.mxu0 %v1324
    %2244 = vmatprep.subr.mxu0 0.0
    %2245 = vmatpush1.msra.mxu0 %v2240
    %2246 = vmatprep.subr.mxu0 0.0
    %2247 = vmatpush1.msra.mxu0 0.0
    %2248 = vmatprep.subr.mxu0 0.0
    %2249 = vmatpush1.msra.mxu0 0.0
    %2250 = vmatprep.subr.mxu0 0.0
    %2251 = vmatpush1.msra.mxu0 0.0
    %2252 = vmatprep.subr.mxu0 0.0
    %2253 = vmatpush1.msra.mxu0 0.0
    %2254 = vmatprep.subr.mxu0 0.0
    %2255 = vmatpush1.msra.mxu0 0.0
    %2256 = vmatprep.subr.mxu0 0.0
    %2257 = vmatpush1.msra.mxu0 0.0
    %2258 = vmatprep.subr.mxu0 0.0
    %2259 = vmatpush1.msra.mxu0 0.0
    %2260 = vmatprep.subr.mxu0 0.0
    %2261 = vmatpush1.msra.mxu0 0.0
    %2262 = vmatprep.subr.mxu0 0.0
    %2263 = vmatpush1.msra.mxu0 0.0
    %2264 = vmatprep.subr.mxu0 0.0
    %2265 = vmatpush1.msra.mxu0 0.0
    %2266 = vmatprep.subr.mxu0 0.0
    %2267 = vmatpush1.msra.mxu0 0.0
    %2268 = vmatprep.subr.mxu0 0.0
    %2269 = vmatpush1.msra.mxu0 0.0
    %2270 = vmatprep.subr.mxu0 0.0
    %2271 = vmatpush1.msra.mxu0 0.0
    %2272 = vmatprep.subr.mxu0 0.0
    %2273 = vmatpush1.msra.mxu0 0.0
    %2274 = vmatprep.subr.mxu0 0.0
    %2275 = vmatpush1.msra.mxu0 0.0
    %2276 = vmatprep.subr.mxu0 0.0
    %2277 = vmatpush1.msra.mxu0 0.0
    %2278 = vmatprep.subr.mxu0 0.0
    %2279 = vmatpush1.msra.mxu0 0.0
    %2280 = vmatprep.subr.mxu0 0.0
    %2281 = vmatpush1.msra.mxu0 0.0
    %2282 = vmatprep.subr.mxu0 0.0
    %2283 = vmatpush1.msra.mxu0 0.0
    %2284 = vmatprep.subr.mxu0 0.0
    %2285 = vmatpush1.msra.mxu0 0.0
    %2286 = vmatprep.subr.mxu0 0.0
    %2287 = vmatpush1.msra.mxu0 0.0
    %2288 = vmatprep.subr.mxu0 0.0
    %2289 = vmatpush1.msra.mxu0 0.0
    %2290 = vmatprep.subr.mxu0 0.0
    %2291 = vmatpush1.msra.mxu0 0.0
    %2292 = vmatprep.subr.mxu0 0.0
    %2293 = vmatpush1.msra.mxu0 0.0
    %2294 = vmatprep.subr.mxu0 0.0
    %2295 = vmatpush1.msra.mxu0 0.0
    %2296 = vmatprep.subr.mxu0 0.0
    %2297 = vmatpush1.msra.mxu0 0.0
    %2298 = vmatprep.subr.mxu0 0.0
    %2299 = vmatpush1.msra.mxu0 0.0
    %2300 = vmatprep.subr.mxu0 0.0
    %2301 = vmatpush1.msra.mxu0 0.0
    %2302 = vmatprep.subr.mxu0 0.0
    %2303 = vmatpush1.msra.mxu0 0.0
    %2304 = vmatprep.subr.mxu0 0.0
    %2305 = vmatpush1.msra.mxu0 0.0
    %2306 = vmatprep.mubr.f32.mxu0 0.0
    %2307 = vmatmul.mubr.f32.gmra.mrb[0].mxu0 %v2234
    %v2308 = vpop.f32.mrb[0].mxu0
    %v2309 = vadd.f32 %v2232, %v2308
    %v2310 = vpop.f32.mrb[0].mxu0
    %2311 = vmatprep.mubr.f32.mxu0 0.0
    %2312 = vmatmul.mubr.f32.gmra.mrb[0].mxu0 %v2237
    %v2313 = vpop.f32.mrb[0].mxu0
    %v2314 = vadd.f32 %v2232, %v2313
    %v2315 = vpop.f32.mrb[0].mxu0
    %2316 = vdwg.mxu0
    %v2317 = vadd.f32 %v1312, %v2309
    %v2318 = vadd.f32 %v1313, %v2314
    %v2319 = vsel %vm61, %v2317, 0.0
    %2320 = vadd.xlane.f32.xlu0 %v2319
    %v2321 = vpop.xlane.xlu0 %2320
    %v2322 = vsel %vm61, %v2318, 0.0
    %2323 = vadd.xlane.f32.xlu0 %v2322
    %v2324 = vpop.xlane.xlu0 %2323
    %v2325 = vmul.f32 %v2321, %v1054
    %v2326 = vmul.f32 %v2324, %v1054
    %v2327 = vsub.f32 %v2317, %v2325
    %v2328 = vsub.f32 %v2318, %v2326
    %v2329 = vmul.f32 %v2327, %v2327
    %v2330 = vmul.f32 %v2328, %v2328
    %v2331 = vsel %vm61, %v2329, 0.0
    %2332 = vadd.xlane.f32.xlu0 %v2331
    %v2333 = vpop.xlane.xlu0 %2332
    %v2334 = vsel %vm61, %v2330, 0.0
    %2335 = vadd.xlane.f32.xlu0 %v2334
    %v2336 = vpop.xlane.xlu0 %2335
    %v2337 = vmul.f32 %v2333, %v1054
    %v2338 = vmul.f32 %v2336, %v1054
    %v2339 = vadd.f32 %v2337, 1e-05
    %v2340 = vadd.f32 %v2338, 1e-05
    %v2341 = vrsqrt.pop %v2339
    %v2342 = vrsqrt.pop %v2340
    %v2343 = vmul.f32 %v2327, %v2341
    %v2344 = vmul.f32 %v2328, %v2342
    %v2345 = vlaneseq
    %v2346 = vshrl.u32 %v2345, 7
    %v2347 = vsub.s32 0, %v2346
    %v2348 = vrot.slane %v1331, %v2347
    %v2349 = vmul.f32 %v2343, %v2348
    %v2350 = vmul.f32 %v2344, %v2348
    %v2351 = vlaneseq
    %v2352 = vshrl.u32 %v2351, 7
    %v2353 = vsub.s32 0, %v2352
    %v2354 = vrot.slane %v1332, %v2353
    %v2355 = vadd.f32 %v2349, %v2354
    %v2356 = vadd.f32 %v2350, %v2354
    %s2357 = scalar_lea.vmem %s3, 16
    %v2358 = vld [vmem:[%s2357] sm:$0xff]
    %v2359 = vld [vmem:[%s2357 + $0x8] sm:$0x3]
    %v2360 = vld [vmem:[%s4 + $0x1] sm:$0x1]
    %s2361 = scalar_lea.vmem %s5, 64
    %v2362 = vld [vmem:[%s2361] sm:$0xff]
    %v2363 = vld [vmem:[%s2361 + $0x8] sm:$0xff]
    %v2364 = vld [vmem:[%s2361 + $0x10] sm:$0xff]
    %v2365 = vld [vmem:[%s2361 + $0x18] sm:$0xff]
    %v2366 = vld [vmem:[%s2361 + $0x20] sm:$0xff]
    %v2367 = vld [vmem:[%s2361 + $0x28] sm:$0xff]
    %v2368 = vld [vmem:[%s2361 + $0x30] sm:$0xff]
    %v2369 = vld [vmem:[%s2361 + $0x38] sm:$0xff]
    %v2370 = vlaneseq
    %v2371 = vshrl.u32 %v2370, 7
    %v2372 = vsub.s32 0, %v2371
    %v2373 = vrot.slane %v2360, %v2372
    %v2375 = vsel %vm61, %v2355, 0
    %v2378 = vsel %vm61, %v2356, 0
    %v2381 = vsel %vm68, %v2359, 0
    %2383 = vmatprep.subr.mxu0 0.0
    %2384 = vmatpush1.msra.mxu0 %v2358
    %2385 = vmatprep.subr.mxu0 0.0
    %2386 = vmatpush1.msra.mxu0 %v2381
    %2387 = vmatprep.subr.mxu0 0.0
    %2388 = vmatpush1.msra.mxu0 0.0
    %2389 = vmatprep.subr.mxu0 0.0
    %2390 = vmatpush1.msra.mxu0 0.0
    %2391 = vmatprep.subr.mxu0 0.0
    %2392 = vmatpush1.msra.mxu0 0.0
    %2393 = vmatprep.subr.mxu0 0.0
    %2394 = vmatpush1.msra.mxu0 0.0
    %2395 = vmatprep.subr.mxu0 0.0
    %2396 = vmatpush1.msra.mxu0 0.0
    %2397 = vmatprep.subr.mxu0 0.0
    %2398 = vmatpush1.msra.mxu0 0.0
    %2399 = vmatprep.subr.mxu0 0.0
    %2400 = vmatpush1.msra.mxu0 0.0
    %2401 = vmatprep.subr.mxu0 0.0
    %2402 = vmatpush1.msra.mxu0 0.0
    %2403 = vmatprep.subr.mxu0 0.0
    %2404 = vmatpush1.msra.mxu0 0.0
    %2405 = vmatprep.subr.mxu0 0.0
    %2406 = vmatpush1.msra.mxu0 0.0
    %2407 = vmatprep.subr.mxu0 0.0
    %2408 = vmatpush1.msra.mxu0 0.0
    %2409 = vmatprep.subr.mxu0 0.0
    %2410 = vmatpush1.msra.mxu0 0.0
    %2411 = vmatprep.subr.mxu0 0.0
    %2412 = vmatpush1.msra.mxu0 0.0
    %2413 = vmatprep.subr.mxu0 0.0
    %2414 = vmatpush1.msra.mxu0 0.0
    %2415 = vmatprep.subr.mxu0 0.0
    %2416 = vmatpush1.msra.mxu0 0.0
    %2417 = vmatprep.subr.mxu0 0.0
    %2418 = vmatpush1.msra.mxu0 0.0
    %2419 = vmatprep.subr.mxu0 0.0
    %2420 = vmatpush1.msra.mxu0 0.0
    %2421 = vmatprep.subr.mxu0 0.0
    %2422 = vmatpush1.msra.mxu0 0.0
    %2423 = vmatprep.subr.mxu0 0.0
    %2424 = vmatpush1.msra.mxu0 0.0
    %2425 = vmatprep.subr.mxu0 0.0
    %2426 = vmatpush1.msra.mxu0 0.0
    %2427 = vmatprep.subr.mxu0 0.0
    %2428 = vmatpush1.msra.mxu0 0.0
    %2429 = vmatprep.subr.mxu0 0.0
    %2430 = vmatpush1.msra.mxu0 0.0
    %2431 = vmatprep.subr.mxu0 0.0
    %2432 = vmatpush1.msra.mxu0 0.0
    %2433 = vmatprep.subr.mxu0 0.0
    %2434 = vmatpush1.msra.mxu0 0.0
    %2435 = vmatprep.subr.mxu0 0.0
    %2436 = vmatpush1.msra.mxu0 0.0
    %2437 = vmatprep.subr.mxu0 0.0
    %2438 = vmatpush1.msra.mxu0 0.0
    %2439 = vmatprep.subr.mxu0 0.0
    %2440 = vmatpush1.msra.mxu0 0.0
    %2441 = vmatprep.subr.mxu0 0.0
    %2442 = vmatpush1.msra.mxu0 0.0
    %2443 = vmatprep.subr.mxu0 0.0
    %2444 = vmatpush1.msra.mxu0 0.0
    %2445 = vmatprep.subr.mxu0 0.0
    %2446 = vmatpush1.msra.mxu0 0.0
    %2447 = vmatprep.mubr.f32.mxu0 0.0
    %2448 = vmatmul.mubr.f32.gmra.mrb[0].mxu0 %v2375
    %v2449 = vpop.f32.mrb[0].mxu0
    %v2450 = vadd.f32 %v2373, %v2449
    %v2451 = vpop.f32.mrb[0].mxu0
    %2452 = vmatprep.mubr.f32.mxu0 0.0
    %2453 = vmatmul.mubr.f32.gmra.mrb[0].mxu0 %v2378
    %v2454 = vpop.f32.mrb[0].mxu0
    %v2455 = vadd.f32 %v2373, %v2454
    %v2456 = vpop.f32.mrb[0].mxu0
    %2457 = vdwg.mxu0
    %v2458 = vmax.f32 %v2450, 0.0
    %v2459 = vmax.f32 %v2455, 0.0
    %v2460 = vlaneseq
    %v2461 = vshrl.u32 %v2460, 7
    %v2462 = vsub.s32 0, %v2461
    %v2463 = vrot.slane %v1330, %v2462
    %v2465 = vsel %vm1192, %v2458, 0
    %v2468 = vsel %vm1192, %v2459, 0
    %2470 = vmatprep.subr.mxu0 0.0
    %2471 = vmatpush1.msra.mxu0 %v2362
    %2472 = vmatprep.subr.mxu0 0.0
    %2473 = vmatpush1.msra.mxu0 %v2363
    %2474 = vmatprep.subr.mxu0 0.0
    %2475 = vmatpush1.msra.mxu0 %v2364
    %2476 = vmatprep.subr.mxu0 0.0
    %2477 = vmatpush1.msra.mxu0 %v2365
    %2478 = vmatprep.subr.mxu0 0.0
    %2479 = vmatpush1.msra.mxu0 %v2366
    %2480 = vmatprep.subr.mxu0 0.0
    %2481 = vmatpush1.msra.mxu0 %v2367
    %2482 = vmatprep.subr.mxu0 0.0
    %2483 = vmatpush1.msra.mxu0 %v2368
    %2484 = vmatprep.subr.mxu0 0.0
    %2485 = vmatpush1.msra.mxu0 %v2369
    %2486 = vmatprep.subr.mxu0 0.0
    %2487 = vmatpush1.msra.mxu0 0.0
    %2488 = vmatprep.subr.mxu0 0.0
    %2489 = vmatpush1.msra.mxu0 0.0
    %2490 = vmatprep.subr.mxu0 0.0
    %2491 = vmatpush1.msra.mxu0 0.0
    %2492 = vmatprep.subr.mxu0 0.0
    %2493 = vmatpush1.msra.mxu0 0.0
    %2494 = vmatprep.subr.mxu0 0.0
    %2495 = vmatpush1.msra.mxu0 0.0
    %2496 = vmatprep.subr.mxu0 0.0
    %2497 = vmatpush1.msra.mxu0 0.0
    %2498 = vmatprep.subr.mxu0 0.0
    %2499 = vmatpush1.msra.mxu0 0.0
    %2500 = vmatprep.subr.mxu0 0.0
    %2501 = vmatpush1.msra.mxu0 0.0
    %2502 = vmatprep.subr.mxu0 0.0
    %2503 = vmatpush1.msra.mxu0 0.0
    %2504 = vmatprep.subr.mxu0 0.0
    %2505 = vmatpush1.msra.mxu0 0.0
    %2506 = vmatprep.subr.mxu0 0.0
    %2507 = vmatpush1.msra.mxu0 0.0
    %2508 = vmatprep.subr.mxu0 0.0
    %2509 = vmatpush1.msra.mxu0 0.0
    %2510 = vmatprep.subr.mxu0 0.0
    %2511 = vmatpush1.msra.mxu0 0.0
    %2512 = vmatprep.subr.mxu0 0.0
    %2513 = vmatpush1.msra.mxu0 0.0
    %2514 = vmatprep.subr.mxu0 0.0
    %2515 = vmatpush1.msra.mxu0 0.0
    %2516 = vmatprep.subr.mxu0 0.0
    %2517 = vmatpush1.msra.mxu0 0.0
    %2518 = vmatprep.subr.mxu0 0.0
    %2519 = vmatpush1.msra.mxu0 0.0
    %2520 = vmatprep.subr.mxu0 0.0
    %2521 = vmatpush1.msra.mxu0 0.0
    %2522 = vmatprep.subr.mxu0 0.0
    %2523 = vmatpush1.msra.mxu0 0.0
    %2524 = vmatprep.subr.mxu0 0.0
    %2525 = vmatpush1.msra.mxu0 0.0
    %2526 = vmatprep.subr.mxu0 0.0
    %2527 = vmatpush1.msra.mxu0 0.0
    %2528 = vmatprep.subr.mxu0 0.0
    %2529 = vmatpush1.msra.mxu0 0.0
    %2530 = vmatprep.subr.mxu0 0.0
    %2531 = vmatpush1.msra.mxu0 0.0
    %2532 = vmatprep.subr.mxu0 0.0
    %2533 = vmatpush1.msra.mxu0 0.0
    %2534 = vmatprep.mubr.f32.mxu0 0.0
    %2535 = vmatmul.mubr.f32.gmra.mrb[0].mxu0 %v2465
    %v2536 = vpop.f32.mrb[0].mxu0
    %v2537 = vadd.f32 %v2463, %v2536
    %v2538 = vpop.f32.mrb[0].mxu0
    %2539 = vmatprep.mubr.f32.mxu0 0.0
    %2540 = vmatmul.mubr.f32.gmra.mrb[0].mxu0 %v2468
    %v2541 = vpop.f32.mrb[0].mxu0
    %v2542 = vadd.f32 %v2463, %v2541
    %v2543 = vpop.f32.mrb[0].mxu0
    %2544 = vdwg.mxu0
    %v2545 = vadd.f32 %v2355, %v2537
    %v2546 = vadd.f32 %v2356, %v2542
    %v2547 = vsel %vm61, %v2545, 0.0
    %2548 = vadd.xlane.f32.xlu0 %v2547
    %v2549 = vpop.xlane.xlu0 %2548
    %v2550 = vsel %vm61, %v2546, 0.0
    %2551 = vadd.xlane.f32.xlu0 %v2550
    %v2552 = vpop.xlane.xlu0 %2551
    %v2553 = vmul.f32 %v2549, %v1054
    %v2554 = vmul.f32 %v2552, %v1054
    %v2555 = vsub.f32 %v2545, %v2553
    %v2556 = vsub.f32 %v2546, %v2554
    %v2557 = vmul.f32 %v2555, %v2555
    %v2558 = vmul.f32 %v2556, %v2556
    %v2559 = vsel %vm61, %v2557, 0.0
    %2560 = vadd.xlane.f32.xlu0 %v2559
    %v2561 = vpop.xlane.xlu0 %2560
    %v2562 = vsel %vm61, %v2558, 0.0
    %2563 = vadd.xlane.f32.xlu0 %v2562
    %v2564 = vpop.xlane.xlu0 %2563
    %v2565 = vmul.f32 %v2561, %v1054
    %v2566 = vmul.f32 %v2564, %v1054
    %v2567 = vadd.f32 %v2565, 1e-05
    %v2568 = vadd.f32 %v2566, 1e-05
    %v2569 = vrsqrt.pop %v2567
    %v2570 = vrsqrt.pop %v2568
    %v2571 = vmul.f32 %v2555, %v2569
    %v2572 = vmul.f32 %v2556, %v2570
    %v2573 = vlaneseq
    %v2574 = vshrl.u32 %v2573, 7
    %v2575 = vsub.s32 0, %v2574
    %v2576 = vrot.slane %v1333, %v2575
    %v2577 = vmul.f32 %v2571, %v2576
    %v2578 = vmul.f32 %v2572, %v2576
    %v2579 = vlaneseq
    %v2580 = vshrl.u32 %v2579, 7
    %v2581 = vsub.s32 0, %v2580
    %v2582 = vrot.slane %v1334, %v2581
    %v2583 = vadd.f32 %v2577, %v2582
    %v2584 = vadd.f32 %v2578, %v2582
    %s2585 = scalar_lea.vmem %s1, 128
    %v2586 = vld [vmem:[%s2585] sm:$0xff]
    %v2587 = vld [vmem:[%s2585 + $0x8] sm:$0x3]
    %s2588 = scalar_lea.vmem %s1, 144
    %v2589 = vld [vmem:[%s2588] sm:$0xff]
    %v2590 = vld [vmem:[%s2588 + $0x8] sm:$0x3]
    %s2591 = scalar_lea.vmem %s1, 160
    %v2592 = vld [vmem:[%s2591] sm:$0xff]
    %v2593 = vld [vmem:[%s2591 + $0x8] sm:$0x3]
    %s2594 = scalar_lea.vmem %s1, 176
    %v2595 = vld [vmem:[%s2594] sm:$0xff]
    %v2596 = vld [vmem:[%s2594 + $0x8] sm:$0x3]
    %v2597 = vld [vmem:[%s2 + $0x12] sm:$0x1]
    %v2598 = vld [vmem:[%s2 + $0x13] sm:$0x1]
    %v2599 = vld [vmem:[%s2 + $0x14] sm:$0x1]
    %v2600 = vld [vmem:[%s2 + $0x15] sm:$0x1]
    %v2601 = vld [vmem:[%s2 + $0x16] sm:$0x1]
    %v2602 = vld [vmem:[%s2 + $0x17] sm:$0x1]
    %v2603 = vld [vmem:[%s2 + $0x18] sm:$0x1]
    %v2604 = vld [vmem:[%s2 + $0x19] sm:$0x1]
    %v2605 = vld [vmem:[%s2 + $0x1a] sm:$0x1]
    %v2606 = vlaneseq
    %v2607 = vshrl.u32 %v2606, 7
    %v2608 = vsub.s32 0, %v2607
    %v2609 = vrot.slane %v2597, %v2608
    %v2611 = vsel %vm61, %v2583, 0
    %v2614 = vsel %vm61, %v2584, 0
    %v2617 = vsel %vm68, %v2587, 0
    %2619 = vmatprep.subr.mxu0 0.0
    %2620 = vmatpush1.msra.mxu0 %v2586
    %2621 = vmatprep.subr.mxu0 0.0
    %2622 = vmatpush1.msra.mxu0 %v2617
    %2623 = vmatprep.subr.mxu0 0.0
    %2624 = vmatpush1.msra.mxu0 0.0
    %2625 = vmatprep.subr.mxu0 0.0
    %2626 = vmatpush1.msra.mxu0 0.0
    %2627 = vmatprep.subr.mxu0 0.0
    %2628 = vmatpush1.msra.mxu0 0.0
    %2629 = vmatprep.subr.mxu0 0.0
    %2630 = vmatpush1.msra.mxu0 0.0
    %2631 = vmatprep.subr.mxu0 0.0
    %2632 = vmatpush1.msra.mxu0 0.0
    %2633 = vmatprep.subr.mxu0 0.0
    %2634 = vmatpush1.msra.mxu0 0.0
    %2635 = vmatprep.subr.mxu0 0.0
    %2636 = vmatpush1.msra.mxu0 0.0
    %2637 = vmatprep.subr.mxu0 0.0
    %2638 = vmatpush1.msra.mxu0 0.0
    %2639 = vmatprep.subr.mxu0 0.0
    %2640 = vmatpush1.msra.mxu0 0.0
    %2641 = vmatprep.subr.mxu0 0.0
    %2642 = vmatpush1.msra.mxu0 0.0
    %2643 = vmatprep.subr.mxu0 0.0
    %2644 = vmatpush1.msra.mxu0 0.0
    %2645 = vmatprep.subr.mxu0 0.0
    %2646 = vmatpush1.msra.mxu0 0.0
    %2647 = vmatprep.subr.mxu0 0.0
    %2648 = vmatpush1.msra.mxu0 0.0
    %2649 = vmatprep.subr.mxu0 0.0
    %2650 = vmatpush1.msra.mxu0 0.0
    %2651 = vmatprep.subr.mxu0 0.0
    %2652 = vmatpush1.msra.mxu0 0.0
    %2653 = vmatprep.subr.mxu0 0.0
    %2654 = vmatpush1.msra.mxu0 0.0
    %2655 = vmatprep.subr.mxu0 0.0
    %2656 = vmatpush1.msra.mxu0 0.0
    %2657 = vmatprep.subr.mxu0 0.0
    %2658 = vmatpush1.msra.mxu0 0.0
    %2659 = vmatprep.subr.mxu0 0.0
    %2660 = vmatpush1.msra.mxu0 0.0
    %2661 = vmatprep.subr.mxu0 0.0
    %2662 = vmatpush1.msra.mxu0 0.0
    %2663 = vmatprep.subr.mxu0 0.0
    %2664 = vmatpush1.msra.mxu0 0.0
    %2665 = vmatprep.subr.mxu0 0.0
    %2666 = vmatpush1.msra.mxu0 0.0
    %2667 = vmatprep.subr.mxu0 0.0
    %2668 = vmatpush1.msra.mxu0 0.0
    %2669 = vmatprep.subr.mxu0 0.0
    %2670 = vmatpush1.msra.mxu0 0.0
    %2671 = vmatprep.subr.mxu0 0.0
    %2672 = vmatpush1.msra.mxu0 0.0
    %2673 = vmatprep.subr.mxu0 0.0
    %2674 = vmatpush1.msra.mxu0 0.0
    %2675 = vmatprep.subr.mxu0 0.0
    %2676 = vmatpush1.msra.mxu0 0.0
    %2677 = vmatprep.subr.mxu0 0.0
    %2678 = vmatpush1.msra.mxu0 0.0
    %2679 = vmatprep.subr.mxu0 0.0
    %2680 = vmatpush1.msra.mxu0 0.0
    %2681 = vmatprep.subr.mxu0 0.0
    %2682 = vmatpush1.msra.mxu0 0.0
    %2683 = vmatprep.mubr.f32.mxu0 0.0
    %2684 = vmatmul.mubr.f32.gmra.mrb[0].mxu0 %v2611
    %v2685 = vpop.f32.mrb[0].mxu0
    %v2686 = vadd.f32 %v2609, %v2685
    %v2687 = vpop.f32.mrb[0].mxu0
    %2688 = vmatprep.mubr.f32.mxu0 0.0
    %2689 = vmatmul.mubr.f32.gmra.mrb[0].mxu0 %v2614
    %v2690 = vpop.f32.mrb[0].mxu0
    %v2691 = vadd.f32 %v2609, %v2690
    %v2692 = vpop.f32.mrb[0].mxu0
    %2693 = vdwg.mxu0
    %v2694 = vlaneseq
    %v2695 = vshrl.u32 %v2694, 7
    %v2696 = vsub.s32 0, %v2695
    %v2697 = vrot.slane %v2598, %v2696
    %v2699 = vsel %vm68, %v2590, 0
    %2701 = vmatprep.subr.mxu0 0.0
    %2702 = vmatpush1.msra.mxu0 %v2589
    %2703 = vmatprep.subr.mxu0 0.0
    %2704 = vmatpush1.msra.mxu0 %v2699
    %2705 = vmatprep.subr.mxu0 0.0
    %2706 = vmatpush1.msra.mxu0 0.0
    %2707 = vmatprep.subr.mxu0 0.0
    %2708 = vmatpush1.msra.mxu0 0.0
    %2709 = vmatprep.subr.mxu0 0.0
    %2710 = vmatpush1.msra.mxu0 0.0
    %2711 = vmatprep.subr.mxu0 0.0
    %2712 = vmatpush1.msra.mxu0 0.0
    %2713 = vmatprep.subr.mxu0 0.0
    %2714 = vmatpush1.msra.mxu0 0.0
    %2715 = vmatprep.subr.mxu0 0.0
    %2716 = vmatpush1.msra.mxu0 0.0
    %2717 = vmatprep.subr.mxu0 0.0
    %2718 = vmatpush1.msra.mxu0 0.0
    %2719 = vmatprep.subr.mxu0 0.0
    %2720 = vmatpush1.msra.mxu0 0.0
    %2721 = vmatprep.subr.mxu0 0.0
    %2722 = vmatpush1.msra.mxu0 0.0
    %2723 = vmatprep.subr.mxu0 0.0
    %2724 = vmatpush1.msra.mxu0 0.0
    %2725 = vmatprep.subr.mxu0 0.0
    %2726 = vmatpush1.msra.mxu0 0.0
    %2727 = vmatprep.subr.mxu0 0.0
    %2728 = vmatpush1.msra.mxu0 0.0
    %2729 = vmatprep.subr.mxu0 0.0
    %2730 = vmatpush1.msra.mxu0 0.0
    %2731 = vmatprep.subr.mxu0 0.0
    %2732 = vmatpush1.msra.mxu0 0.0
    %2733 = vmatprep.subr.mxu0 0.0
    %2734 = vmatpush1.msra.mxu0 0.0
    %2735 = vmatprep.subr.mxu0 0.0
    %2736 = vmatpush1.msra.mxu0 0.0
    %2737 = vmatprep.subr.mxu0 0.0
    %2738 = vmatpush1.msra.mxu0 0.0
    %2739 = vmatprep.subr.mxu0 0.0
    %2740 = vmatpush1.msra.mxu0 0.0
    %2741 = vmatprep.subr.mxu0 0.0
    %2742 = vmatpush1.msra.mxu0 0.0
    %2743 = vmatprep.subr.mxu0 0.0
    %2744 = vmatpush1.msra.mxu0 0.0
    %2745 = vmatprep.subr.mxu0 0.0
    %2746 = vmatpush1.msra.mxu0 0.0
    %2747 = vmatprep.subr.mxu0 0.0
    %2748 = vmatpush1.msra.mxu0 0.0
    %2749 = vmatprep.subr.mxu0 0.0
    %2750 = vmatpush1.msra.mxu0 0.0
    %2751 = vmatprep.subr.mxu0 0.0
    %2752 = vmatpush1.msra.mxu0 0.0
    %2753 = vmatprep.subr.mxu0 0.0
    %2754 = vmatpush1.msra.mxu0 0.0
    %2755 = vmatprep.subr.mxu0 0.0
    %2756 = vmatpush1.msra.mxu0 0.0
    %2757 = vmatprep.subr.mxu0 0.0
    %2758 = vmatpush1.msra.mxu0 0.0
    %2759 = vmatprep.subr.mxu0 0.0
    %2760 = vmatpush1.msra.mxu0 0.0
    %2761 = vmatprep.subr.mxu0 0.0
    %2762 = vmatpush1.msra.mxu0 0.0
    %2763 = vmatprep.subr.mxu0 0.0
    %2764 = vmatpush1.msra.mxu0 0.0
    %2765 = vmatprep.mubr.f32.mxu0 0.0
    %2766 = vmatmul.mubr.f32.gmra.mrb[0].mxu0 %v2611
    %v2767 = vpop.f32.mrb[0].mxu0
    %v2768 = vadd.f32 %v2697, %v2767
    %v2769 = vpop.f32.mrb[0].mxu0
    %2770 = vmatprep.mubr.f32.mxu0 0.0
    %2771 = vmatmul.mubr.f32.gmra.mrb[0].mxu0 %v2614
    %v2772 = vpop.f32.mrb[0].mxu0
    %v2773 = vadd.f32 %v2697, %v2772
    %v2774 = vpop.f32.mrb[0].mxu0
    %2775 = vdwg.mxu0
    %v2776 = vlaneseq
    %v2777 = vshrl.u32 %v2776, 7
    %v2778 = vsub.s32 0, %v2777
    %v2779 = vrot.slane %v2599, %v2778
    %v2781 = vsel %vm68, %v2593, 0
    %2783 = vmatprep.subr.mxu0 0.0
    %2784 = vmatpush1.msra.mxu0 %v2592
    %2785 = vmatprep.subr.mxu0 0.0
    %2786 = vmatpush1.msra.mxu0 %v2781
    %2787 = vmatprep.subr.mxu0 0.0
    %2788 = vmatpush1.msra.mxu0 0.0
    %2789 = vmatprep.subr.mxu0 0.0
    %2790 = vmatpush1.msra.mxu0 0.0
    %2791 = vmatprep.subr.mxu0 0.0
    %2792 = vmatpush1.msra.mxu0 0.0
    %2793 = vmatprep.subr.mxu0 0.0
    %2794 = vmatpush1.msra.mxu0 0.0
    %2795 = vmatprep.subr.mxu0 0.0
    %2796 = vmatpush1.msra.mxu0 0.0
    %2797 = vmatprep.subr.mxu0 0.0
    %2798 = vmatpush1.msra.mxu0 0.0
    %2799 = vmatprep.subr.mxu0 0.0
    %2800 = vmatpush1.msra.mxu0 0.0
    %2801 = vmatprep.subr.mxu0 0.0
    %2802 = vmatpush1.msra.mxu0 0.0
    %2803 = vmatprep.subr.mxu0 0.0
    %2804 = vmatpush1.msra.mxu0 0.0
    %2805 = vmatprep.subr.mxu0 0.0
    %2806 = vmatpush1.msra.mxu0 0.0
    %2807 = vmatprep.subr.mxu0 0.0
    %2808 = vmatpush1.msra.mxu0 0.0
    %2809 = vmatprep.subr.mxu0 0.0
    %2810 = vmatpush1.msra.mxu0 0.0
    %2811 = vmatprep.subr.mxu0 0.0
    %2812 = vmatpush1.msra.mxu0 0.0
    %2813 = vmatprep.subr.mxu0 0.0
    %2814 = vmatpush1.msra.mxu0 0.0
    %2815 = vmatprep.subr.mxu0 0.0
    %2816 = vmatpush1.msra.mxu0 0.0
    %2817 = vmatprep.subr.mxu0 0.0
    %2818 = vmatpush1.msra.mxu0 0.0
    %2819 = vmatprep.subr.mxu0 0.0
    %2820 = vmatpush1.msra.mxu0 0.0
    %2821 = vmatprep.subr.mxu0 0.0
    %2822 = vmatpush1.msra.mxu0 0.0
    %2823 = vmatprep.subr.mxu0 0.0
    %2824 = vmatpush1.msra.mxu0 0.0
    %2825 = vmatprep.subr.mxu0 0.0
    %2826 = vmatpush1.msra.mxu0 0.0
    %2827 = vmatprep.subr.mxu0 0.0
    %2828 = vmatpush1.msra.mxu0 0.0
    %2829 = vmatprep.subr.mxu0 0.0
    %2830 = vmatpush1.msra.mxu0 0.0
    %2831 = vmatprep.subr.mxu0 0.0
    %2832 = vmatpush1.msra.mxu0 0.0
    %2833 = vmatprep.subr.mxu0 0.0
    %2834 = vmatpush1.msra.mxu0 0.0
    %2835 = vmatprep.subr.mxu0 0.0
    %2836 = vmatpush1.msra.mxu0 0.0
    %2837 = vmatprep.subr.mxu0 0.0
    %2838 = vmatpush1.msra.mxu0 0.0
    %2839 = vmatprep.subr.mxu0 0.0
    %2840 = vmatpush1.msra.mxu0 0.0
    %2841 = vmatprep.subr.mxu0 0.0
    %2842 = vmatpush1.msra.mxu0 0.0
    %2843 = vmatprep.subr.mxu0 0.0
    %2844 = vmatpush1.msra.mxu0 0.0
    %2845 = vmatprep.subr.mxu0 0.0
    %2846 = vmatpush1.msra.mxu0 0.0
    %2847 = vmatprep.mubr.f32.mxu0 0.0
    %2848 = vmatmul.mubr.f32.gmra.mrb[0].mxu0 %v2611
    %v2849 = vpop.f32.mrb[0].mxu0
    %v2850 = vadd.f32 %v2779, %v2849
    %v2851 = vpop.f32.mrb[0].mxu0
    %2852 = vmatprep.mubr.f32.mxu0 0.0
    %2853 = vmatmul.mubr.f32.gmra.mrb[0].mxu0 %v2614
    %v2854 = vpop.f32.mrb[0].mxu0
    %v2855 = vadd.f32 %v2779, %v2854
    %v2856 = vpop.f32.mrb[0].mxu0
    %2857 = vdwg.mxu0
    %v2858 = vsel %vm312, %v2686, 0.0
    %v2859 = vsel %vm312, %v2691, 0.0
    %v2860 = vsel %vm312, %v2850, 0.0
    %v2861 = vsel %vm312, %v2855, 0.0
    %v2863 = vsel %vm61, %v2858, 0
    %v2866 = vsel %vm61, %v2768, 0
    %2868 = vmatprep.subr.mxu0 0.0
    %2869 = vmatpush1.xpose.msra.mxu0 %v2866
    %2870 = vmatprep.subr.mxu0 0.0
    %2871 = vmatpush1.xpose.msra.mxu0 0.0
    %2872 = vmatprep.subr.mxu0 0.0
    %2873 = vmatpush1.xpose.msra.mxu0 0.0
    %2874 = vmatprep.subr.mxu0 0.0
    %2875 = vmatpush1.xpose.msra.mxu0 0.0
    %2876 = vmatprep.subr.mxu0 0.0
    %2877 = vmatpush1.xpose.msra.mxu0 0.0
    %2878 = vmatprep.subr.mxu0 0.0
    %2879 = vmatpush1.xpose.msra.mxu0 0.0
    %2880 = vmatprep.subr.mxu0 0.0
    %2881 = vmatpush1.xpose.msra.mxu0 0.0
    %2882 = vmatprep.subr.mxu0 0.0
    %2883 = vmatpush1.xpose.msra.mxu0 0.0
    %2884 = vmatprep.subr.mxu0 0.0
    %2885 = vmatpush1.xpose.msra.mxu0 0.0
    %2886 = vmatprep.subr.mxu0 0.0
    %2887 = vmatpush1.xpose.msra.mxu0 0.0
    %2888 = vmatprep.subr.mxu0 0.0
    %2889 = vmatpush1.xpose.msra.mxu0 0.0
    %2890 = vmatprep.subr.mxu0 0.0
    %2891 = vmatpush1.xpose.msra.mxu0 0.0
    %2892 = vmatprep.subr.mxu0 0.0
    %2893 = vmatpush1.xpose.msra.mxu0 0.0
    %2894 = vmatprep.subr.mxu0 0.0
    %2895 = vmatpush1.xpose.msra.mxu0 0.0
    %2896 = vmatprep.subr.mxu0 0.0
    %2897 = vmatpush1.xpose.msra.mxu0 0.0
    %2898 = vmatprep.subr.mxu0 0.0
    %2899 = vmatpush1.xpose.msra.mxu0 0.0
    %2900 = vmatprep.subr.mxu0 0.0
    %2901 = vmatpush1.xpose.msra.mxu0 0.0
    %2902 = vmatprep.subr.mxu0 0.0
    %2903 = vmatpush1.xpose.msra.mxu0 0.0
    %2904 = vmatprep.subr.mxu0 0.0
    %2905 = vmatpush1.xpose.msra.mxu0 0.0
    %2906 = vmatprep.subr.mxu0 0.0
    %2907 = vmatpush1.xpose.msra.mxu0 0.0
    %2908 = vmatprep.subr.mxu0 0.0
    %2909 = vmatpush1.xpose.msra.mxu0 0.0
    %2910 = vmatprep.subr.mxu0 0.0
    %2911 = vmatpush1.xpose.msra.mxu0 0.0
    %2912 = vmatprep.subr.mxu0 0.0
    %2913 = vmatpush1.xpose.msra.mxu0 0.0
    %2914 = vmatprep.subr.mxu0 0.0
    %2915 = vmatpush1.xpose.msra.mxu0 0.0
    %2916 = vmatprep.subr.mxu0 0.0
    %2917 = vmatpush1.xpose.msra.mxu0 0.0
    %2918 = vmatprep.subr.mxu0 0.0
    %2919 = vmatpush1.xpose.msra.mxu0 0.0
    %2920 = vmatprep.subr.mxu0 0.0
    %2921 = vmatpush1.xpose.msra.mxu0 0.0
    %2922 = vmatprep.subr.mxu0 0.0
    %2923 = vmatpush1.xpose.msra.mxu0 0.0
    %2924 = vmatprep.subr.mxu0 0.0
    %2925 = vmatpush1.xpose.msra.mxu0 0.0
    %2926 = vmatprep.subr.mxu0 0.0
    %2927 = vmatpush1.xpose.msra.mxu0 0.0
    %2928 = vmatprep.subr.mxu0 0.0
    %2929 = vmatpush1.xpose.msra.mxu0 0.0
    %2930 = vmatprep.subr.mxu0 0.0
    %2931 = vmatpush1.xpose.msra.mxu0 0.0
    %2932 = vmatprep.mubr.f32.mxu0 0.0
    %2933 = vmatmul.mubr.f32.gmra.mrb[0].mxu0 %v2863
    %v2934 = vpop.f32.mrb[0].mxu0
    %v2935 = vadd.f32 0.0, %v2934
    %v2936 = vpop.f32.mrb[0].mxu0
    %2937 = vdwg.mxu0
    %v2939 = vsel %vm61, %v2859, 0
    %v2942 = vsel %vm61, %v2773, 0
    %2944 = vmatprep.subr.mxu0 0.0
    %2945 = vmatpush1.xpose.msra.mxu0 %v2942
    %2946 = vmatprep.subr.mxu0 0.0
    %2947 = vmatpush1.xpose.msra.mxu0 0.0
    %2948 = vmatprep.subr.mxu0 0.0
    %2949 = vmatpush1.xpose.msra.mxu0 0.0
    %2950 = vmatprep.subr.mxu0 0.0
    %2951 = vmatpush1.xpose.msra.mxu0 0.0
    %2952 = vmatprep.subr.mxu0 0.0
    %2953 = vmatpush1.xpose.msra.mxu0 0.0
    %2954 = vmatprep.subr.mxu0 0.0
    %2955 = vmatpush1.xpose.msra.mxu0 0.0
    %2956 = vmatprep.subr.mxu0 0.0
    %2957 = vmatpush1.xpose.msra.mxu0 0.0
    %2958 = vmatprep.subr.mxu0 0.0
    %2959 = vmatpush1.xpose.msra.mxu0 0.0
    %2960 = vmatprep.subr.mxu0 0.0
    %2961 = vmatpush1.xpose.msra.mxu0 0.0
    %2962 = vmatprep.subr.mxu0 0.0
    %2963 = vmatpush1.xpose.msra.mxu0 0.0
    %2964 = vmatprep.subr.mxu0 0.0
    %2965 = vmatpush1.xpose.msra.mxu0 0.0
    %2966 = vmatprep.subr.mxu0 0.0
    %2967 = vmatpush1.xpose.msra.mxu0 0.0
    %2968 = vmatprep.subr.mxu0 0.0
    %2969 = vmatpush1.xpose.msra.mxu0 0.0
    %2970 = vmatprep.subr.mxu0 0.0
    %2971 = vmatpush1.xpose.msra.mxu0 0.0
    %2972 = vmatprep.subr.mxu0 0.0
    %2973 = vmatpush1.xpose.msra.mxu0 0.0
    %2974 = vmatprep.subr.mxu0 0.0
    %2975 = vmatpush1.xpose.msra.mxu0 0.0
    %2976 = vmatprep.subr.mxu0 0.0
    %2977 = vmatpush1.xpose.msra.mxu0 0.0
    %2978 = vmatprep.subr.mxu0 0.0
    %2979 = vmatpush1.xpose.msra.mxu0 0.0
    %2980 = vmatprep.subr.mxu0 0.0
    %2981 = vmatpush1.xpose.msra.mxu0 0.0
    %2982 = vmatprep.subr.mxu0 0.0
    %2983 = vmatpush1.xpose.msra.mxu0 0.0
    %2984 = vmatprep.subr.mxu0 0.0
    %2985 = vmatpush1.xpose.msra.mxu0 0.0
    %2986 = vmatprep.subr.mxu0 0.0
    %2987 = vmatpush1.xpose.msra.mxu0 0.0
    %2988 = vmatprep.subr.mxu0 0.0
    %2989 = vmatpush1.xpose.msra.mxu0 0.0
    %2990 = vmatprep.subr.mxu0 0.0
    %2991 = vmatpush1.xpose.msra.mxu0 0.0
    %2992 = vmatprep.subr.mxu0 0.0
    %2993 = vmatpush1.xpose.msra.mxu0 0.0
    %2994 = vmatprep.subr.mxu0 0.0
    %2995 = vmatpush1.xpose.msra.mxu0 0.0
    %2996 = vmatprep.subr.mxu0 0.0
    %2997 = vmatpush1.xpose.msra.mxu0 0.0
    %2998 = vmatprep.subr.mxu0 0.0
    %2999 = vmatpush1.xpose.msra.mxu0 0.0
    %3000 = vmatprep.subr.mxu0 0.0
    %3001 = vmatpush1.xpose.msra.mxu0 0.0
    %3002 = vmatprep.subr.mxu0 0.0
    %3003 = vmatpush1.xpose.msra.mxu0 0.0
    %3004 = vmatprep.subr.mxu0 0.0
    %3005 = vmatpush1.xpose.msra.mxu0 0.0
    %3006 = vmatprep.subr.mxu0 0.0
    %3007 = vmatpush1.xpose.msra.mxu0 0.0
    %3008 = vmatprep.mubr.f32.mxu0 0.0
    %3009 = vmatmul.mubr.f32.gmra.mrb[0].mxu0 %v2939
    %v3010 = vpop.f32.mrb[0].mxu0
    %v3011 = vadd.f32 0.0, %v3010
    %v3012 = vpop.f32.mrb[0].mxu0
    %3013 = vdwg.mxu0
    %v3014 = vsel %vm469, %v2935, -inf
    %3015 = vmax.xlane.f32.xlu0 %v3014
    %v3016 = vpop.xlane.xlu0 %3015
    %v3017 = vsel %vm469, %v3011, -inf
    %3018 = vmax.xlane.f32.xlu0 %v3017
    %v3019 = vpop.xlane.xlu0 %3018
    %v3020 = vsub.f32 %v2935, %v3016
    %v3021 = vsub.f32 %v3011, %v3019
    %v3022 = vmul.f32 %v3020, 1.442695
    %v3023 = vpow.pop %v3022
    %v3024 = vmul.f32 %v3021, 1.442695
    %v3025 = vpow.pop %v3024
    %v3026 = vsel %vm469, %v3023, 0.0
    %3027 = vadd.xlane.f32.xlu0 %v3026
    %v3028 = vpop.xlane.xlu0 %3027
    %v3029 = vsel %vm469, %v3025, 0.0
    %3030 = vadd.xlane.f32.xlu0 %v3029
    %v3031 = vpop.xlane.xlu0 %3030
    %v3032 = vrcp.pop %v3028
    %v3033 = vmul.f32 %v3023, %v3032
    %v3034 = vrcp.pop %v3031
    %v3035 = vmul.f32 %v3025, %v3034
    %v3036 = vsel %vm493, %v2686, 0.0
    %v3037 = vsel %vm493, %v2691, 0.0
    %v3038 = vsel %vm493, %v2850, 0.0
    %v3039 = vsel %vm493, %v2855, 0.0
    %v3041 = vsel %vm61, %v3036, 0
    %3043 = vmatprep.subr.mxu0 0.0
    %3044 = vmatpush1.xpose.msra.mxu0 %v2866
    %3045 = vmatprep.subr.mxu0 0.0
    %3046 = vmatpush1.xpose.msra.mxu0 0.0
    %3047 = vmatprep.subr.mxu0 0.0
    %3048 = vmatpush1.xpose.msra.mxu0 0.0
    %3049 = vmatprep.subr.mxu0 0.0
    %3050 = vmatpush1.xpose.msra.mxu0 0.0
    %3051 = vmatprep.subr.mxu0 0.0
    %3052 = vmatpush1.xpose.msra.mxu0 0.0
    %3053 = vmatprep.subr.mxu0 0.0
    %3054 = vmatpush1.xpose.msra.mxu0 0.0
    %3055 = vmatprep.subr.mxu0 0.0
    %3056 = vmatpush1.xpose.msra.mxu0 0.0
    %3057 = vmatprep.subr.mxu0 0.0
    %3058 = vmatpush1.xpose.msra.mxu0 0.0
    %3059 = vmatprep.subr.mxu0 0.0
    %3060 = vmatpush1.xpose.msra.mxu0 0.0
    %3061 = vmatprep.subr.mxu0 0.0
    %3062 = vmatpush1.xpose.msra.mxu0 0.0
    %3063 = vmatprep.subr.mxu0 0.0
    %3064 = vmatpush1.xpose.msra.mxu0 0.0
    %3065 = vmatprep.subr.mxu0 0.0
    %3066 = vmatpush1.xpose.msra.mxu0 0.0
    %3067 = vmatprep.subr.mxu0 0.0
    %3068 = vmatpush1.xpose.msra.mxu0 0.0
    %3069 = vmatprep.subr.mxu0 0.0
    %3070 = vmatpush1.xpose.msra.mxu0 0.0
    %3071 = vmatprep.subr.mxu0 0.0
    %3072 = vmatpush1.xpose.msra.mxu0 0.0
    %3073 = vmatprep.subr.mxu0 0.0
    %3074 = vmatpush1.xpose.msra.mxu0 0.0
    %3075 = vmatprep.subr.mxu0 0.0
    %3076 = vmatpush1.xpose.msra.mxu0 0.0
    %3077 = vmatprep.subr.mxu0 0.0
    %3078 = vmatpush1.xpose.msra.mxu0 0.0
    %3079 = vmatprep.subr.mxu0 0.0
    %3080 = vmatpush1.xpose.msra.mxu0 0.0
    %3081 = vmatprep.subr.mxu0 0.0
    %3082 = vmatpush1.xpose.msra.mxu0 0.0
    %3083 = vmatprep.subr.mxu0 0.0
    %3084 = vmatpush1.xpose.msra.mxu0 0.0
    %3085 = vmatprep.subr.mxu0 0.0
    %3086 = vmatpush1.xpose.msra.mxu0 0.0
    %3087 = vmatprep.subr.mxu0 0.0
    %3088 = vmatpush1.xpose.msra.mxu0 0.0
    %3089 = vmatprep.subr.mxu0 0.0
    %3090 = vmatpush1.xpose.msra.mxu0 0.0
    %3091 = vmatprep.subr.mxu0 0.0
    %3092 = vmatpush1.xpose.msra.mxu0 0.0
    %3093 = vmatprep.subr.mxu0 0.0
    %3094 = vmatpush1.xpose.msra.mxu0 0.0
    %3095 = vmatprep.subr.mxu0 0.0
    %3096 = vmatpush1.xpose.msra.mxu0 0.0
    %3097 = vmatprep.subr.mxu0 0.0
    %3098 = vmatpush1.xpose.msra.mxu0 0.0
    %3099 = vmatprep.subr.mxu0 0.0
    %3100 = vmatpush1.xpose.msra.mxu0 0.0
    %3101 = vmatprep.subr.mxu0 0.0
    %3102 = vmatpush1.xpose.msra.mxu0 0.0
    %3103 = vmatprep.subr.mxu0 0.0
    %3104 = vmatpush1.xpose.msra.mxu0 0.0
    %3105 = vmatprep.subr.mxu0 0.0
    %3106 = vmatpush1.xpose.msra.mxu0 0.0
    %3107 = vmatprep.mubr.f32.mxu0 0.0
    %3108 = vmatmul.mubr.f32.gmra.mrb[0].mxu0 %v3041
    %v3109 = vpop.f32.mrb[0].mxu0
    %v3110 = vadd.f32 0.0, %v3109
    %v3111 = vpop.f32.mrb[0].mxu0
    %3112 = vdwg.mxu0
    %v3114 = vsel %vm61, %v3037, 0
    %3116 = vmatprep.subr.mxu0 0.0
    %3117 = vmatpush1.xpose.msra.mxu0 %v2942
    %3118 = vmatprep.subr.mxu0 0.0
    %3119 = vmatpush1.xpose.msra.mxu0 0.0
    %3120 = vmatprep.subr.mxu0 0.0
    %3121 = vmatpush1.xpose.msra.mxu0 0.0
    %3122 = vmatprep.subr.mxu0 0.0
    %3123 = vmatpush1.xpose.msra.mxu0 0.0
    %3124 = vmatprep.subr.mxu0 0.0
    %3125 = vmatpush1.xpose.msra.mxu0 0.0
    %3126 = vmatprep.subr.mxu0 0.0
    %3127 = vmatpush1.xpose.msra.mxu0 0.0
    %3128 = vmatprep.subr.mxu0 0.0
    %3129 = vmatpush1.xpose.msra.mxu0 0.0
    %3130 = vmatprep.subr.mxu0 0.0
    %3131 = vmatpush1.xpose.msra.mxu0 0.0
    %3132 = vmatprep.subr.mxu0 0.0
    %3133 = vmatpush1.xpose.msra.mxu0 0.0
    %3134 = vmatprep.subr.mxu0 0.0
    %3135 = vmatpush1.xpose.msra.mxu0 0.0
    %3136 = vmatprep.subr.mxu0 0.0
    %3137 = vmatpush1.xpose.msra.mxu0 0.0
    %3138 = vmatprep.subr.mxu0 0.0
    %3139 = vmatpush1.xpose.msra.mxu0 0.0
    %3140 = vmatprep.subr.mxu0 0.0
    %3141 = vmatpush1.xpose.msra.mxu0 0.0
    %3142 = vmatprep.subr.mxu0 0.0
    %3143 = vmatpush1.xpose.msra.mxu0 0.0
    %3144 = vmatprep.subr.mxu0 0.0
    %3145 = vmatpush1.xpose.msra.mxu0 0.0
    %3146 = vmatprep.subr.mxu0 0.0
    %3147 = vmatpush1.xpose.msra.mxu0 0.0
    %3148 = vmatprep.subr.mxu0 0.0
    %3149 = vmatpush1.xpose.msra.mxu0 0.0
    %3150 = vmatprep.subr.mxu0 0.0
    %3151 = vmatpush1.xpose.msra.mxu0 0.0
    %3152 = vmatprep.subr.mxu0 0.0
    %3153 = vmatpush1.xpose.msra.mxu0 0.0
    %3154 = vmatprep.subr.mxu0 0.0
    %3155 = vmatpush1.xpose.msra.mxu0 0.0
    %3156 = vmatprep.subr.mxu0 0.0
    %3157 = vmatpush1.xpose.msra.mxu0 0.0
    %3158 = vmatprep.subr.mxu0 0.0
    %3159 = vmatpush1.xpose.msra.mxu0 0.0
    %3160 = vmatprep.subr.mxu0 0.0
    %3161 = vmatpush1.xpose.msra.mxu0 0.0
    %3162 = vmatprep.subr.mxu0 0.0
    %3163 = vmatpush1.xpose.msra.mxu0 0.0
    %3164 = vmatprep.subr.mxu0 0.0
    %3165 = vmatpush1.xpose.msra.mxu0 0.0
    %3166 = vmatprep.subr.mxu0 0.0
    %3167 = vmatpush1.xpose.msra.mxu0 0.0
    %3168 = vmatprep.subr.mxu0 0.0
    %3169 = vmatpush1.xpose.msra.mxu0 0.0
    %3170 = vmatprep.subr.mxu0 0.0
    %3171 = vmatpush1.xpose.msra.mxu0 0.0
    %3172 = vmatprep.subr.mxu0 0.0
    %3173 = vmatpush1.xpose.msra.mxu0 0.0
    %3174 = vmatprep.subr.mxu0 0.0
    %3175 = vmatpush1.xpose.msra.mxu0 0.0
    %3176 = vmatprep.subr.mxu0 0.0
    %3177 = vmatpush1.xpose.msra.mxu0 0.0
    %3178 = vmatprep.subr.mxu0 0.0
    %3179 = vmatpush1.xpose.msra.mxu0 0.0
    %3180 = vmatprep.mubr.f32.mxu0 0.0
    %3181 = vmatmul.mubr.f32.gmra.mrb[0].mxu0 %v3114
    %v3182 = vpop.f32.mrb[0].mxu0
    %v3183 = vadd.f32 0.0, %v3182
    %v3184 = vpop.f32.mrb[0].mxu0
    %3185 = vdwg.mxu0
    %v3186 = vsel %vm469, %v3110, -inf
    %3187 = vmax.xlane.f32.xlu0 %v3186
    %v3188 = vpop.xlane.xlu0 %3187
    %v3189 = vsel %vm469, %v3183, -inf
    %3190 = vmax.xlane.f32.xlu0 %v3189
    %v3191 = vpop.xlane.xlu0 %3190
    %v3192 = vsub.f32 %v3110, %v3188
    %v3193 = vsub.f32 %v3183, %v3191
    %v3194 = vmul.f32 %v3192, 1.442695
    %v3195 = vpow.pop %v3194
    %v3196 = vmul.f32 %v3193, 1.442695
    %v3197 = vpow.pop %v3196
    %v3198 = vsel %vm469, %v3195, 0.0
    %3199 = vadd.xlane.f32.xlu0 %v3198
    %v3200 = vpop.xlane.xlu0 %3199
    %v3201 = vsel %vm469, %v3197, 0.0
    %3202 = vadd.xlane.f32.xlu0 %v3201
    %v3203 = vpop.xlane.xlu0 %3202
    %v3204 = vrcp.pop %v3200
    %v3205 = vmul.f32 %v3195, %v3204
    %v3206 = vrcp.pop %v3203
    %v3207 = vmul.f32 %v3197, %v3206
    %v3209 = vsel %vm469, %v3205, 0
    %3211 = vmatprep.subr.mxu0 0.0
    %3212 = vmatpush1.msra.mxu0 %v3038
    %3213 = vmatprep.subr.mxu0 0.0
    %3214 = vmatpush1.msra.mxu0 0.0
    %3215 = vmatprep.subr.mxu0 0.0
    %3216 = vmatpush1.msra.mxu0 0.0
    %3217 = vmatprep.subr.mxu0 0.0
    %3218 = vmatpush1.msra.mxu0 0.0
    %3219 = vmatprep.subr.mxu0 0.0
    %3220 = vmatpush1.msra.mxu0 0.0
    %3221 = vmatprep.subr.mxu0 0.0
    %3222 = vmatpush1.msra.mxu0 0.0
    %3223 = vmatprep.subr.mxu0 0.0
    %3224 = vmatpush1.msra.mxu0 0.0
    %3225 = vmatprep.subr.mxu0 0.0
    %3226 = vmatpush1.msra.mxu0 0.0
    %3227 = vmatprep.subr.mxu0 0.0
    %3228 = vmatpush1.msra.mxu0 0.0
    %3229 = vmatprep.subr.mxu0 0.0
    %3230 = vmatpush1.msra.mxu0 0.0
    %3231 = vmatprep.subr.mxu0 0.0
    %3232 = vmatpush1.msra.mxu0 0.0
    %3233 = vmatprep.subr.mxu0 0.0
    %3234 = vmatpush1.msra.mxu0 0.0
    %3235 = vmatprep.subr.mxu0 0.0
    %3236 = vmatpush1.msra.mxu0 0.0
    %3237 = vmatprep.subr.mxu0 0.0
    %3238 = vmatpush1.msra.mxu0 0.0
    %3239 = vmatprep.subr.mxu0 0.0
    %3240 = vmatpush1.msra.mxu0 0.0
    %3241 = vmatprep.subr.mxu0 0.0
    %3242 = vmatpush1.msra.mxu0 0.0
    %3243 = vmatprep.subr.mxu0 0.0
    %3244 = vmatpush1.msra.mxu0 0.0
    %3245 = vmatprep.subr.mxu0 0.0
    %3246 = vmatpush1.msra.mxu0 0.0
    %3247 = vmatprep.subr.mxu0 0.0
    %3248 = vmatpush1.msra.mxu0 0.0
    %3249 = vmatprep.subr.mxu0 0.0
    %3250 = vmatpush1.msra.mxu0 0.0
    %3251 = vmatprep.subr.mxu0 0.0
    %3252 = vmatpush1.msra.mxu0 0.0
    %3253 = vmatprep.subr.mxu0 0.0
    %3254 = vmatpush1.msra.mxu0 0.0
    %3255 = vmatprep.subr.mxu0 0.0
    %3256 = vmatpush1.msra.mxu0 0.0
    %3257 = vmatprep.subr.mxu0 0.0
    %3258 = vmatpush1.msra.mxu0 0.0
    %3259 = vmatprep.subr.mxu0 0.0
    %3260 = vmatpush1.msra.mxu0 0.0
    %3261 = vmatprep.subr.mxu0 0.0
    %3262 = vmatpush1.msra.mxu0 0.0
    %3263 = vmatprep.subr.mxu0 0.0
    %3264 = vmatpush1.msra.mxu0 0.0
    %3265 = vmatprep.subr.mxu0 0.0
    %3266 = vmatpush1.msra.mxu0 0.0
    %3267 = vmatprep.subr.mxu0 0.0
    %3268 = vmatpush1.msra.mxu0 0.0
    %3269 = vmatprep.subr.mxu0 0.0
    %3270 = vmatpush1.msra.mxu0 0.0
    %3271 = vmatprep.subr.mxu0 0.0
    %3272 = vmatpush1.msra.mxu0 0.0
    %3273 = vmatprep.subr.mxu0 0.0
    %3274 = vmatpush1.msra.mxu0 0.0
    %3275 = vmatprep.mubr.f32.mxu0 0.0
    %3276 = vmatmul.mubr.f32.gmra.mrb[0].mxu0 %v3209
    %v3277 = vpop.f32.mrb[0].mxu0
    %v3278 = vadd.f32 0.0, %v3277
    %v3279 = vpop.f32.mrb[0].mxu0
    %3280 = vdwg.mxu0
    %v3282 = vsel %vm469, %v3207, 0
    %3284 = vmatprep.subr.mxu0 0.0
    %3285 = vmatpush1.msra.mxu0 %v3039
    %3286 = vmatprep.subr.mxu0 0.0
    %3287 = vmatpush1.msra.mxu0 0.0
    %3288 = vmatprep.subr.mxu0 0.0
    %3289 = vmatpush1.msra.mxu0 0.0
    %3290 = vmatprep.subr.mxu0 0.0
    %3291 = vmatpush1.msra.mxu0 0.0
    %3292 = vmatprep.subr.mxu0 0.0
    %3293 = vmatpush1.msra.mxu0 0.0
    %3294 = vmatprep.subr.mxu0 0.0
    %3295 = vmatpush1.msra.mxu0 0.0
    %3296 = vmatprep.subr.mxu0 0.0
    %3297 = vmatpush1.msra.mxu0 0.0
    %3298 = vmatprep.subr.mxu0 0.0
    %3299 = vmatpush1.msra.mxu0 0.0
    %3300 = vmatprep.subr.mxu0 0.0
    %3301 = vmatpush1.msra.mxu0 0.0
    %3302 = vmatprep.subr.mxu0 0.0
    %3303 = vmatpush1.msra.mxu0 0.0
    %3304 = vmatprep.subr.mxu0 0.0
    %3305 = vmatpush1.msra.mxu0 0.0
    %3306 = vmatprep.subr.mxu0 0.0
    %3307 = vmatpush1.msra.mxu0 0.0
    %3308 = vmatprep.subr.mxu0 0.0
    %3309 = vmatpush1.msra.mxu0 0.0
    %3310 = vmatprep.subr.mxu0 0.0
    %3311 = vmatpush1.msra.mxu0 0.0
    %3312 = vmatprep.subr.mxu0 0.0
    %3313 = vmatpush1.msra.mxu0 0.0
    %3314 = vmatprep.subr.mxu0 0.0
    %3315 = vmatpush1.msra.mxu0 0.0
    %3316 = vmatprep.subr.mxu0 0.0
    %3317 = vmatpush1.msra.mxu0 0.0
    %3318 = vmatprep.subr.mxu0 0.0
    %3319 = vmatpush1.msra.mxu0 0.0
    %3320 = vmatprep.subr.mxu0 0.0
    %3321 = vmatpush1.msra.mxu0 0.0
    %3322 = vmatprep.subr.mxu0 0.0
    %3323 = vmatpush1.msra.mxu0 0.0
    %3324 = vmatprep.subr.mxu0 0.0
    %3325 = vmatpush1.msra.mxu0 0.0
    %3326 = vmatprep.subr.mxu0 0.0
    %3327 = vmatpush1.msra.mxu0 0.0
    %3328 = vmatprep.subr.mxu0 0.0
    %3329 = vmatpush1.msra.mxu0 0.0
    %3330 = vmatprep.subr.mxu0 0.0
    %3331 = vmatpush1.msra.mxu0 0.0
    %3332 = vmatprep.subr.mxu0 0.0
    %3333 = vmatpush1.msra.mxu0 0.0
    %3334 = vmatprep.subr.mxu0 0.0
    %3335 = vmatpush1.msra.mxu0 0.0
    %3336 = vmatprep.subr.mxu0 0.0
    %3337 = vmatpush1.msra.mxu0 0.0
    %3338 = vmatprep.subr.mxu0 0.0
    %3339 = vmatpush1.msra.mxu0 0.0
    %3340 = vmatprep.subr.mxu0 0.0
    %3341 = vmatpush1.msra.mxu0 0.0
    %3342 = vmatprep.subr.mxu0 0.0
    %3343 = vmatpush1.msra.mxu0 0.0
    %3344 = vmatprep.subr.mxu0 0.0
    %3345 = vmatpush1.msra.mxu0 0.0
    %3346 = vmatprep.subr.mxu0 0.0
    %3347 = vmatpush1.msra.mxu0 0.0
    %3348 = vmatprep.mubr.f32.mxu0 0.0
    %3349 = vmatmul.mubr.f32.gmra.mrb[0].mxu0 %v3282
    %v3350 = vpop.f32.mrb[0].mxu0
    %v3351 = vadd.f32 0.0, %v3350
    %v3352 = vpop.f32.mrb[0].mxu0
    %3353 = vdwg.mxu0
    %v3355 = vsel %vm469, %v3033, 0
    %3357 = vmatprep.subr.mxu0 0.0
    %3358 = vmatpush1.msra.mxu0 %v2860
    %3359 = vmatprep.subr.mxu0 0.0
    %3360 = vmatpush1.msra.mxu0 0.0
    %3361 = vmatprep.subr.mxu0 0.0
    %3362 = vmatpush1.msra.mxu0 0.0
    %3363 = vmatprep.subr.mxu0 0.0
    %3364 = vmatpush1.msra.mxu0 0.0
    %3365 = vmatprep.subr.mxu0 0.0
    %3366 = vmatpush1.msra.mxu0 0.0
    %3367 = vmatprep.subr.mxu0 0.0
    %3368 = vmatpush1.msra.mxu0 0.0
    %3369 = vmatprep.subr.mxu0 0.0
    %3370 = vmatpush1.msra.mxu0 0.0
    %3371 = vmatprep.subr.mxu0 0.0
    %3372 = vmatpush1.msra.mxu0 0.0
    %3373 = vmatprep.subr.mxu0 0.0
    %3374 = vmatpush1.msra.mxu0 0.0
    %3375 = vmatprep.subr.mxu0 0.0
    %3376 = vmatpush1.msra.mxu0 0.0
    %3377 = vmatprep.subr.mxu0 0.0
    %3378 = vmatpush1.msra.mxu0 0.0
    %3379 = vmatprep.subr.mxu0 0.0
    %3380 = vmatpush1.msra.mxu0 0.0
    %3381 = vmatprep.subr.mxu0 0.0
    %3382 = vmatpush1.msra.mxu0 0.0
    %3383 = vmatprep.subr.mxu0 0.0
    %3384 = vmatpush1.msra.mxu0 0.0
    %3385 = vmatprep.subr.mxu0 0.0
    %3386 = vmatpush1.msra.mxu0 0.0
    %3387 = vmatprep.subr.mxu0 0.0
    %3388 = vmatpush1.msra.mxu0 0.0
    %3389 = vmatprep.subr.mxu0 0.0
    %3390 = vmatpush1.msra.mxu0 0.0
    %3391 = vmatprep.subr.mxu0 0.0
    %3392 = vmatpush1.msra.mxu0 0.0
    %3393 = vmatprep.subr.mxu0 0.0
    %3394 = vmatpush1.msra.mxu0 0.0
    %3395 = vmatprep.subr.mxu0 0.0
    %3396 = vmatpush1.msra.mxu0 0.0
    %3397 = vmatprep.subr.mxu0 0.0
    %3398 = vmatpush1.msra.mxu0 0.0
    %3399 = vmatprep.subr.mxu0 0.0
    %3400 = vmatpush1.msra.mxu0 0.0
    %3401 = vmatprep.subr.mxu0 0.0
    %3402 = vmatpush1.msra.mxu0 0.0
    %3403 = vmatprep.subr.mxu0 0.0
    %3404 = vmatpush1.msra.mxu0 0.0
    %3405 = vmatprep.subr.mxu0 0.0
    %3406 = vmatpush1.msra.mxu0 0.0
    %3407 = vmatprep.subr.mxu0 0.0
    %3408 = vmatpush1.msra.mxu0 0.0
    %3409 = vmatprep.subr.mxu0 0.0
    %3410 = vmatpush1.msra.mxu0 0.0
    %3411 = vmatprep.subr.mxu0 0.0
    %3412 = vmatpush1.msra.mxu0 0.0
    %3413 = vmatprep.subr.mxu0 0.0
    %3414 = vmatpush1.msra.mxu0 0.0
    %3415 = vmatprep.subr.mxu0 0.0
    %3416 = vmatpush1.msra.mxu0 0.0
    %3417 = vmatprep.subr.mxu0 0.0
    %3418 = vmatpush1.msra.mxu0 0.0
    %3419 = vmatprep.subr.mxu0 0.0
    %3420 = vmatpush1.msra.mxu0 0.0
    %3421 = vmatprep.mubr.f32.mxu0 0.0
    %3422 = vmatmul.mubr.f32.gmra.mrb[0].mxu0 %v3355
    %v3423 = vpop.f32.mrb[0].mxu0
    %v3424 = vadd.f32 %v3278, %v3423
    %v3425 = vpop.f32.mrb[0].mxu0
    %3426 = vdwg.mxu0
    %v3428 = vsel %vm469, %v3035, 0
    %3430 = vmatprep.subr.mxu0 0.0
    %3431 = vmatpush1.msra.mxu0 %v2861
    %3432 = vmatprep.subr.mxu0 0.0
    %3433 = vmatpush1.msra.mxu0 0.0
    %3434 = vmatprep.subr.mxu0 0.0
    %3435 = vmatpush1.msra.mxu0 0.0
    %3436 = vmatprep.subr.mxu0 0.0
    %3437 = vmatpush1.msra.mxu0 0.0
    %3438 = vmatprep.subr.mxu0 0.0
    %3439 = vmatpush1.msra.mxu0 0.0
    %3440 = vmatprep.subr.mxu0 0.0
    %3441 = vmatpush1.msra.mxu0 0.0
    %3442 = vmatprep.subr.mxu0 0.0
    %3443 = vmatpush1.msra.mxu0 0.0
    %3444 = vmatprep.subr.mxu0 0.0
    %3445 = vmatpush1.msra.mxu0 0.0
    %3446 = vmatprep.subr.mxu0 0.0
    %3447 = vmatpush1.msra.mxu0 0.0
    %3448 = vmatprep.subr.mxu0 0.0
    %3449 = vmatpush1.msra.mxu0 0.0
    %3450 = vmatprep.subr.mxu0 0.0
    %3451 = vmatpush1.msra.mxu0 0.0
    %3452 = vmatprep.subr.mxu0 0.0
    %3453 = vmatpush1.msra.mxu0 0.0
    %3454 = vmatprep.subr.mxu0 0.0
    %3455 = vmatpush1.msra.mxu0 0.0
    %3456 = vmatprep.subr.mxu0 0.0
    %3457 = vmatpush1.msra.mxu0 0.0
    %3458 = vmatprep.subr.mxu0 0.0
    %3459 = vmatpush1.msra.mxu0 0.0
    %3460 = vmatprep.subr.mxu0 0.0
    %3461 = vmatpush1.msra.mxu0 0.0
    %3462 = vmatprep.subr.mxu0 0.0
    %3463 = vmatpush1.msra.mxu0 0.0
    %3464 = vmatprep.subr.mxu0 0.0
    %3465 = vmatpush1.msra.mxu0 0.0
    %3466 = vmatprep.subr.mxu0 0.0
    %3467 = vmatpush1.msra.mxu0 0.0
    %3468 = vmatprep.subr.mxu0 0.0
    %3469 = vmatpush1.msra.mxu0 0.0
    %3470 = vmatprep.subr.mxu0 0.0
    %3471 = vmatpush1.msra.mxu0 0.0
    %3472 = vmatprep.subr.mxu0 0.0
    %3473 = vmatpush1.msra.mxu0 0.0
    %3474 = vmatprep.subr.mxu0 0.0
    %3475 = vmatpush1.msra.mxu0 0.0
    %3476 = vmatprep.subr.mxu0 0.0
    %3477 = vmatpush1.msra.mxu0 0.0
    %3478 = vmatprep.subr.mxu0 0.0
    %3479 = vmatpush1.msra.mxu0 0.0
    %3480 = vmatprep.subr.mxu0 0.0
    %3481 = vmatpush1.msra.mxu0 0.0
    %3482 = vmatprep.subr.mxu0 0.0
    %3483 = vmatpush1.msra.mxu0 0.0
    %3484 = vmatprep.subr.mxu0 0.0
    %3485 = vmatpush1.msra.mxu0 0.0
    %3486 = vmatprep.subr.mxu0 0.0
    %3487 = vmatpush1.msra.mxu0 0.0
    %3488 = vmatprep.subr.mxu0 0.0
    %3489 = vmatpush1.msra.mxu0 0.0
    %3490 = vmatprep.subr.mxu0 0.0
    %3491 = vmatpush1.msra.mxu0 0.0
    %3492 = vmatprep.subr.mxu0 0.0
    %3493 = vmatpush1.msra.mxu0 0.0
    %3494 = vmatprep.mubr.f32.mxu0 0.0
    %3495 = vmatmul.mubr.f32.gmra.mrb[0].mxu0 %v3428
    %v3496 = vpop.f32.mrb[0].mxu0
    %v3497 = vadd.f32 %v3351, %v3496
    %v3498 = vpop.f32.mrb[0].mxu0
    %3499 = vdwg.mxu0
    %v3500 = vlaneseq
    %v3501 = vshrl.u32 %v3500, 7
    %v3502 = vsub.s32 0, %v3501
    %v3503 = vrot.slane %v2600, %v3502
    %v3505 = vsel %vm61, %v3424, 0
    %v3508 = vsel %vm61, %v3497, 0
    %v3511 = vsel %vm68, %v2596, 0
    %3513 = vmatprep.subr.mxu0 0.0
    %3514 = vmatpush1.msra.mxu0 %v2595
    %3515 = vmatprep.subr.mxu0 0.0
    %3516 = vmatpush1.msra.mxu0 %v3511
    %3517 = vmatprep.subr.mxu0 0.0
    %3518 = vmatpush1.msra.mxu0 0.0
    %3519 = vmatprep.subr.mxu0 0.0
    %3520 = vmatpush1.msra.mxu0 0.0
    %3521 = vmatprep.subr.mxu0 0.0
    %3522 = vmatpush1.msra.mxu0 0.0
    %3523 = vmatprep.subr.mxu0 0.0
    %3524 = vmatpush1.msra.mxu0 0.0
    %3525 = vmatprep.subr.mxu0 0.0
    %3526 = vmatpush1.msra.mxu0 0.0
    %3527 = vmatprep.subr.mxu0 0.0
    %3528 = vmatpush1.msra.mxu0 0.0
    %3529 = vmatprep.subr.mxu0 0.0
    %3530 = vmatpush1.msra.mxu0 0.0
    %3531 = vmatprep.subr.mxu0 0.0
    %3532 = vmatpush1.msra.mxu0 0.0
    %3533 = vmatprep.subr.mxu0 0.0
    %3534 = vmatpush1.msra.mxu0 0.0
    %3535 = vmatprep.subr.mxu0 0.0
    %3536 = vmatpush1.msra.mxu0 0.0
    %3537 = vmatprep.subr.mxu0 0.0
    %3538 = vmatpush1.msra.mxu0 0.0
    %3539 = vmatprep.subr.mxu0 0.0
    %3540 = vmatpush1.msra.mxu0 0.0
    %3541 = vmatprep.subr.mxu0 0.0
    %3542 = vmatpush1.msra.mxu0 0.0
    %3543 = vmatprep.subr.mxu0 0.0
    %3544 = vmatpush1.msra.mxu0 0.0
    %3545 = vmatprep.subr.mxu0 0.0
    %3546 = vmatpush1.msra.mxu0 0.0
    %3547 = vmatprep.subr.mxu0 0.0
    %3548 = vmatpush1.msra.mxu0 0.0
    %3549 = vmatprep.subr.mxu0 0.0
    %3550 = vmatpush1.msra.mxu0 0.0
    %3551 = vmatprep.subr.mxu0 0.0
    %3552 = vmatpush1.msra.mxu0 0.0
    %3553 = vmatprep.subr.mxu0 0.0
    %3554 = vmatpush1.msra.mxu0 0.0
    %3555 = vmatprep.subr.mxu0 0.0
    %3556 = vmatpush1.msra.mxu0 0.0
    %3557 = vmatprep.subr.mxu0 0.0
    %3558 = vmatpush1.msra.mxu0 0.0
    %3559 = vmatprep.subr.mxu0 0.0
    %3560 = vmatpush1.msra.mxu0 0.0
    %3561 = vmatprep.subr.mxu0 0.0
    %3562 = vmatpush1.msra.mxu0 0.0
    %3563 = vmatprep.subr.mxu0 0.0
    %3564 = vmatpush1.msra.mxu0 0.0
    %3565 = vmatprep.subr.mxu0 0.0
    %3566 = vmatpush1.msra.mxu0 0.0
    %3567 = vmatprep.subr.mxu0 0.0
    %3568 = vmatpush1.msra.mxu0 0.0
    %3569 = vmatprep.subr.mxu0 0.0
    %3570 = vmatpush1.msra.mxu0 0.0
    %3571 = vmatprep.subr.mxu0 0.0
    %3572 = vmatpush1.msra.mxu0 0.0
    %3573 = vmatprep.subr.mxu0 0.0
    %3574 = vmatpush1.msra.mxu0 0.0
    %3575 = vmatprep.subr.mxu0 0.0
    %3576 = vmatpush1.msra.mxu0 0.0
    %3577 = vmatprep.mubr.f32.mxu0 0.0
    %3578 = vmatmul.mubr.f32.gmra.mrb[0].mxu0 %v3505
    %v3579 = vpop.f32.mrb[0].mxu0
    %v3580 = vadd.f32 %v3503, %v3579
    %v3581 = vpop.f32.mrb[0].mxu0
    %3582 = vmatprep.mubr.f32.mxu0 0.0
    %3583 = vmatmul.mubr.f32.gmra.mrb[0].mxu0 %v3508
    %v3584 = vpop.f32.mrb[0].mxu0
    %v3585 = vadd.f32 %v3503, %v3584
    %v3586 = vpop.f32.mrb[0].mxu0
    %3587 = vdwg.mxu0
    %v3588 = vadd.f32 %v2583, %v3580
    %v3589 = vadd.f32 %v2584, %v3585
    %v3590 = vsel %vm61, %v3588, 0.0
    %3591 = vadd.xlane.f32.xlu0 %v3590
    %v3592 = vpop.xlane.xlu0 %3591
    %v3593 = vsel %vm61, %v3589, 0.0
    %3594 = vadd.xlane.f32.xlu0 %v3593
    %v3595 = vpop.xlane.xlu0 %3594
    %v3596 = vmul.f32 %v3592, %v1054
    %v3597 = vmul.f32 %v3595, %v1054
    %v3598 = vsub.f32 %v3588, %v3596
    %v3599 = vsub.f32 %v3589, %v3597
    %v3600 = vmul.f32 %v3598, %v3598
    %v3601 = vmul.f32 %v3599, %v3599
    %v3602 = vsel %vm61, %v3600, 0.0
    %3603 = vadd.xlane.f32.xlu0 %v3602
    %v3604 = vpop.xlane.xlu0 %3603
    %v3605 = vsel %vm61, %v3601, 0.0
    %3606 = vadd.xlane.f32.xlu0 %v3605
    %v3607 = vpop.xlane.xlu0 %3606
    %v3608 = vmul.f32 %v3604, %v1054
    %v3609 = vmul.f32 %v3607, %v1054
    %v3610 = vadd.f32 %v3608, 1e-05
    %v3611 = vadd.f32 %v3609, 1e-05
    %v3612 = vrsqrt.pop %v3610
    %v3613 = vrsqrt.pop %v3611
    %v3614 = vmul.f32 %v3598, %v3612
    %v3615 = vmul.f32 %v3599, %v3613
    %v3616 = vlaneseq
    %v3617 = vshrl.u32 %v3616, 7
    %v3618 = vsub.s32 0, %v3617
    %v3619 = vrot.slane %v2602, %v3618
    %v3620 = vmul.f32 %v3614, %v3619
    %v3621 = vmul.f32 %v3615, %v3619
    %v3622 = vlaneseq
    %v3623 = vshrl.u32 %v3622, 7
    %v3624 = vsub.s32 0, %v3623
    %v3625 = vrot.slane %v2603, %v3624
    %v3626 = vadd.f32 %v3620, %v3625
    %v3627 = vadd.f32 %v3621, %v3625
    %s3628 = scalar_lea.vmem %s3, 32
    %v3629 = vld [vmem:[%s3628] sm:$0xff]
    %v3630 = vld [vmem:[%s3628 + $0x8] sm:$0x3]
    %v3631 = vld [vmem:[%s4 + $0x2] sm:$0x1]
    %s3632 = scalar_lea.vmem %s5, 128
    %v3633 = vld [vmem:[%s3632] sm:$0xff]
    %v3634 = vld [vmem:[%s3632 + $0x8] sm:$0xff]
    %v3635 = vld [vmem:[%s3632 + $0x10] sm:$0xff]
    %v3636 = vld [vmem:[%s3632 + $0x18] sm:$0xff]
    %v3637 = vld [vmem:[%s3632 + $0x20] sm:$0xff]
    %v3638 = vld [vmem:[%s3632 + $0x28] sm:$0xff]
    %v3639 = vld [vmem:[%s3632 + $0x30] sm:$0xff]
    %v3640 = vld [vmem:[%s3632 + $0x38] sm:$0xff]
    %v3641 = vlaneseq
    %v3642 = vshrl.u32 %v3641, 7
    %v3643 = vsub.s32 0, %v3642
    %v3644 = vrot.slane %v3631, %v3643
    %v3646 = vsel %vm61, %v3626, 0
    %v3649 = vsel %vm61, %v3627, 0
    %v3652 = vsel %vm68, %v3630, 0
    %3654 = vmatprep.subr.mxu0 0.0
    %3655 = vmatpush1.msra.mxu0 %v3629
    %3656 = vmatprep.subr.mxu0 0.0
    %3657 = vmatpush1.msra.mxu0 %v3652
    %3658 = vmatprep.subr.mxu0 0.0
    %3659 = vmatpush1.msra.mxu0 0.0
    %3660 = vmatprep.subr.mxu0 0.0
    %3661 = vmatpush1.msra.mxu0 0.0
    %3662 = vmatprep.subr.mxu0 0.0
    %3663 = vmatpush1.msra.mxu0 0.0
    %3664 = vmatprep.subr.mxu0 0.0
    %3665 = vmatpush1.msra.mxu0 0.0
    %3666 = vmatprep.subr.mxu0 0.0
    %3667 = vmatpush1.msra.mxu0 0.0
    %3668 = vmatprep.subr.mxu0 0.0
    %3669 = vmatpush1.msra.mxu0 0.0
    %3670 = vmatprep.subr.mxu0 0.0
    %3671 = vmatpush1.msra.mxu0 0.0
    %3672 = vmatprep.subr.mxu0 0.0
    %3673 = vmatpush1.msra.mxu0 0.0
    %3674 = vmatprep.subr.mxu0 0.0
    %3675 = vmatpush1.msra.mxu0 0.0
    %3676 = vmatprep.subr.mxu0 0.0
    %3677 = vmatpush1.msra.mxu0 0.0
    %3678 = vmatprep.subr.mxu0 0.0
    %3679 = vmatpush1.msra.mxu0 0.0
    %3680 = vmatprep.subr.mxu0 0.0
    %3681 = vmatpush1.msra.mxu0 0.0
    %3682 = vmatprep.subr.mxu0 0.0
    %3683 = vmatpush1.msra.mxu0 0.0
    %3684 = vmatprep.subr.mxu0 0.0
    %3685 = vmatpush1.msra.mxu0 0.0
    %3686 = vmatprep.subr.mxu0 0.0
    %3687 = vmatpush1.msra.mxu0 0.0
    %3688 = vmatprep.subr.mxu0 0.0
    %3689 = vmatpush1.msra.mxu0 0.0
    %3690 = vmatprep.subr.mxu0 0.0
    %3691 = vmatpush1.msra.mxu0 0.0
    %3692 = vmatprep.subr.mxu0 0.0
    %3693 = vmatpush1.msra.mxu0 0.0
    %3694 = vmatprep.subr.mxu0 0.0
    %3695 = vmatpush1.msra.mxu0 0.0
    %3696 = vmatprep.subr.mxu0 0.0
    %3697 = vmatpush1.msra.mxu0 0.0
    %3698 = vmatprep.subr.mxu0 0.0
    %3699 = vmatpush1.msra.mxu0 0.0
    %3700 = vmatprep.subr.mxu0 0.0
    %3701 = vmatpush1.msra.mxu0 0.0
    %3702 = vmatprep.subr.mxu0 0.0
    %3703 = vmatpush1.msra.mxu0 0.0
    %3704 = vmatprep.subr.mxu0 0.0
    %3705 = vmatpush1.msra.mxu0 0.0
    %3706 = vmatprep.subr.mxu0 0.0
    %3707 = vmatpush1.msra.mxu0 0.0
    %3708 = vmatprep.subr.mxu0 0.0
    %3709 = vmatpush1.msra.mxu0 0.0
    %3710 = vmatprep.subr.mxu0 0.0
    %3711 = vmatpush1.msra.mxu0 0.0
    %3712 = vmatprep.subr.mxu0 0.0
    %3713 = vmatpush1.msra.mxu0 0.0
    %3714 = vmatprep.subr.mxu0 0.0
    %3715 = vmatpush1.msra.mxu0 0.0
    %3716 = vmatprep.subr.mxu0 0.0
    %3717 = vmatpush1.msra.mxu0 0.0
    %3718 = vmatprep.mubr.f32.mxu0 0.0
    %3719 = vmatmul.mubr.f32.gmra.mrb[0].mxu0 %v3646
    %v3720 = vpop.f32.mrb[0].mxu0
    %v3721 = vadd.f32 %v3644, %v3720
    %v3722 = vpop.f32.mrb[0].mxu0
    %3723 = vmatprep.mubr.f32.mxu0 0.0
    %3724 = vmatmul.mubr.f32.gmra.mrb[0].mxu0 %v3649
    %v3725 = vpop.f32.mrb[0].mxu0
    %v3726 = vadd.f32 %v3644, %v3725
    %v3727 = vpop.f32.mrb[0].mxu0
    %3728 = vdwg.mxu0
    %v3729 = vmax.f32 %v3721, 0.0
    %v3730 = vmax.f32 %v3726, 0.0
    %v3731 = vlaneseq
    %v3732 = vshrl.u32 %v3731, 7
    %v3733 = vsub.s32 0, %v3732
    %v3734 = vrot.slane %v2601, %v3733
    %v3736 = vsel %vm1192, %v3729, 0
    %v3739 = vsel %vm1192, %v3730, 0
    %3741 = vmatprep.subr.mxu0 0.0
    %3742 = vmatpush1.msra.mxu0 %v3633
    %3743 = vmatprep.subr.mxu0 0.0
    %3744 = vmatpush1.msra.mxu0 %v3634
    %3745 = vmatprep.subr.mxu0 0.0
    %3746 = vmatpush1.msra.mxu0 %v3635
    %3747 = vmatprep.subr.mxu0 0.0
    %3748 = vmatpush1.msra.mxu0 %v3636
    %3749 = vmatprep.subr.mxu0 0.0
    %3750 = vmatpush1.msra.mxu0 %v3637
    %3751 = vmatprep.subr.mxu0 0.0
    %3752 = vmatpush1.msra.mxu0 %v3638
    %3753 = vmatprep.subr.mxu0 0.0
    %3754 = vmatpush1.msra.mxu0 %v3639
    %3755 = vmatprep.subr.mxu0 0.0
    %3756 = vmatpush1.msra.mxu0 %v3640
    %3757 = vmatprep.subr.mxu0 0.0
    %3758 = vmatpush1.msra.mxu0 0.0
    %3759 = vmatprep.subr.mxu0 0.0
    %3760 = vmatpush1.msra.mxu0 0.0
    %3761 = vmatprep.subr.mxu0 0.0
    %3762 = vmatpush1.msra.mxu0 0.0
    %3763 = vmatprep.subr.mxu0 0.0
    %3764 = vmatpush1.msra.mxu0 0.0
    %3765 = vmatprep.subr.mxu0 0.0
    %3766 = vmatpush1.msra.mxu0 0.0
    %3767 = vmatprep.subr.mxu0 0.0
    %3768 = vmatpush1.msra.mxu0 0.0
    %3769 = vmatprep.subr.mxu0 0.0
    %3770 = vmatpush1.msra.mxu0 0.0
    %3771 = vmatprep.subr.mxu0 0.0
    %3772 = vmatpush1.msra.mxu0 0.0
    %3773 = vmatprep.subr.mxu0 0.0
    %3774 = vmatpush1.msra.mxu0 0.0
    %3775 = vmatprep.subr.mxu0 0.0
    %3776 = vmatpush1.msra.mxu0 0.0
    %3777 = vmatprep.subr.mxu0 0.0
    %3778 = vmatpush1.msra.mxu0 0.0
    %3779 = vmatprep.subr.mxu0 0.0
    %3780 = vmatpush1.msra.mxu0 0.0
    %3781 = vmatprep.subr.mxu0 0.0
    %3782 = vmatpush1.msra.mxu0 0.0
    %3783 = vmatprep.subr.mxu0 0.0
    %3784 = vmatpush1.msra.mxu0 0.0
    %3785 = vmatprep.subr.mxu0 0.0
    %3786 = vmatpush1.msra.mxu0 0.0
    %3787 = vmatprep.subr.mxu0 0.0
    %3788 = vmatpush1.msra.mxu0 0.0
    %3789 = vmatprep.subr.mxu0 0.0
    %3790 = vmatpush1.msra.mxu0 0.0
    %3791 = vmatprep.subr.mxu0 0.0
    %3792 = vmatpush1.msra.mxu0 0.0
    %3793 = vmatprep.subr.mxu0 0.0
    %3794 = vmatpush1.msra.mxu0 0.0
    %3795 = vmatprep.subr.mxu0 0.0
    %3796 = vmatpush1.msra.mxu0 0.0
    %3797 = vmatprep.subr.mxu0 0.0
    %3798 = vmatpush1.msra.mxu0 0.0
    %3799 = vmatprep.subr.mxu0 0.0
    %3800 = vmatpush1.msra.mxu0 0.0
    %3801 = vmatprep.subr.mxu0 0.0
    %3802 = vmatpush1.msra.mxu0 0.0
    %3803 = vmatprep.subr.mxu0 0.0
    %3804 = vmatpush1.msra.mxu0 0.0
    %3805 = vmatprep.mubr.f32.mxu0 0.0
    %3806 = vmatmul.mubr.f32.gmra.mrb[0].mxu0 %v3736
    %v3807 = vpop.f32.mrb[0].mxu0
    %v3808 = vadd.f32 %v3734, %v3807
    %v3809 = vpop.f32.mrb[0].mxu0
    %3810 = vmatprep.mubr.f32.mxu0 0.0
    %3811 = vmatmul.mubr.f32.gmra.mrb[0].mxu0 %v3739
    %v3812 = vpop.f32.mrb[0].mxu0
    %v3813 = vadd.f32 %v3734, %v3812
    %v3814 = vpop.f32.mrb[0].mxu0
    %3815 = vdwg.mxu0
    %v3816 = vadd.f32 %v3626, %v3808
    %v3817 = vadd.f32 %v3627, %v3813
    %v3818 = vsel %vm61, %v3816, 0.0
    %3819 = vadd.xlane.f32.xlu0 %v3818
    %v3820 = vpop.xlane.xlu0 %3819
    %v3821 = vsel %vm61, %v3817, 0.0
    %3822 = vadd.xlane.f32.xlu0 %v3821
    %v3823 = vpop.xlane.xlu0 %3822
    %v3824 = vmul.f32 %v3820, %v1054
    %v3825 = vmul.f32 %v3823, %v1054
    %v3826 = vsub.f32 %v3816, %v3824
    %v3827 = vsub.f32 %v3817, %v3825
    %v3828 = vmul.f32 %v3826, %v3826
    %v3829 = vmul.f32 %v3827, %v3827
    %v3830 = vsel %vm61, %v3828, 0.0
    %3831 = vadd.xlane.f32.xlu0 %v3830
    %v3832 = vpop.xlane.xlu0 %3831
    %v3833 = vsel %vm61, %v3829, 0.0
    %3834 = vadd.xlane.f32.xlu0 %v3833
    %v3835 = vpop.xlane.xlu0 %3834
    %v3836 = vmul.f32 %v3832, %v1054
    %v3837 = vmul.f32 %v3835, %v1054
    %v3838 = vadd.f32 %v3836, 1e-05
    %v3839 = vadd.f32 %v3837, 1e-05
    %v3840 = vrsqrt.pop %v3838
    %v3841 = vrsqrt.pop %v3839
    %v3842 = vmul.f32 %v3826, %v3840
    %v3843 = vmul.f32 %v3827, %v3841
    %v3844 = vlaneseq
    %v3845 = vshrl.u32 %v3844, 7
    %v3846 = vsub.s32 0, %v3845
    %v3847 = vrot.slane %v2604, %v3846
    %v3848 = vmul.f32 %v3842, %v3847
    %v3849 = vmul.f32 %v3843, %v3847
    %v3850 = vlaneseq
    %v3851 = vshrl.u32 %v3850, 7
    %v3852 = vsub.s32 0, %v3851
    %v3853 = vrot.slane %v2605, %v3852
    %v3854 = vadd.f32 %v3848, %v3853
    %v3855 = vadd.f32 %v3849, %v3853
    %v3856 = vsel %vm61, %v3854, 0.0
    %v3857 = vsel %vm61, %v3855, 0.0
    %v3858 = vadd.f32 %v3856, %v3857
    %v3859 = vrcp.pop 2.0
    %v3860 = vmul.f32 %v3858, %v3859
    %v3861 = vld [vmem:[%s6] sm:$0x1]
    %v3862 = vld [vmem:[%s6 + $0x1] sm:$0x1]
    %3864 = vset.pattern.permute.xlu0 0
    %3865 = vperm.xlu0 %3864, %v3862
    %v3866 = vpop.permute.xlu0 %3865
    %v3869 = vsel %vm61, %v3861, 0
    %v3872 = vsel %vm61, %v3860, 0
    %3874 = vmatprep.subr.mxu0 0.0
    %3875 = vmatpush1.xpose.msra.mxu0 %v3872
    %3876 = vmatprep.subr.mxu0 0.0
    %3877 = vmatpush1.xpose.msra.mxu0 0.0
    %3878 = vmatprep.subr.mxu0 0.0
    %3879 = vmatpush1.xpose.msra.mxu0 0.0
    %3880 = vmatprep.subr.mxu0 0.0
    %3881 = vmatpush1.xpose.msra.mxu0 0.0
    %3882 = vmatprep.subr.mxu0 0.0
    %3883 = vmatpush1.xpose.msra.mxu0 0.0
    %3884 = vmatprep.subr.mxu0 0.0
    %3885 = vmatpush1.xpose.msra.mxu0 0.0
    %3886 = vmatprep.subr.mxu0 0.0
    %3887 = vmatpush1.xpose.msra.mxu0 0.0
    %3888 = vmatprep.subr.mxu0 0.0
    %3889 = vmatpush1.xpose.msra.mxu0 0.0
    %3890 = vmatprep.subr.mxu0 0.0
    %3891 = vmatpush1.xpose.msra.mxu0 0.0
    %3892 = vmatprep.subr.mxu0 0.0
    %3893 = vmatpush1.xpose.msra.mxu0 0.0
    %3894 = vmatprep.subr.mxu0 0.0
    %3895 = vmatpush1.xpose.msra.mxu0 0.0
    %3896 = vmatprep.subr.mxu0 0.0
    %3897 = vmatpush1.xpose.msra.mxu0 0.0
    %3898 = vmatprep.subr.mxu0 0.0
    %3899 = vmatpush1.xpose.msra.mxu0 0.0
    %3900 = vmatprep.subr.mxu0 0.0
    %3901 = vmatpush1.xpose.msra.mxu0 0.0
    %3902 = vmatprep.subr.mxu0 0.0
    %3903 = vmatpush1.xpose.msra.mxu0 0.0
    %3904 = vmatprep.subr.mxu0 0.0
    %3905 = vmatpush1.xpose.msra.mxu0 0.0
    %3906 = vmatprep.subr.mxu0 0.0
    %3907 = vmatpush1.xpose.msra.mxu0 0.0
    %3908 = vmatprep.subr.mxu0 0.0
    %3909 = vmatpush1.xpose.msra.mxu0 0.0
    %3910 = vmatprep.subr.mxu0 0.0
    %3911 = vmatpush1.xpose.msra.mxu0 0.0
    %3912 = vmatprep.subr.mxu0 0.0
    %3913 = vmatpush1.xpose.msra.mxu0 0.0
    %3914 = vmatprep.subr.mxu0 0.0
    %3915 = vmatpush1.xpose.msra.mxu0 0.0
    %3916 = vmatprep.subr.mxu0 0.0
    %3917 = vmatpush1.xpose.msra.mxu0 0.0
    %3918 = vmatprep.subr.mxu0 0.0
    %3919 = vmatpush1.xpose.msra.mxu0 0.0
    %3920 = vmatprep.subr.mxu0 0.0
    %3921 = vmatpush1.xpose.msra.mxu0 0.0
    %3922 = vmatprep.subr.mxu0 0.0
    %3923 = vmatpush1.xpose.msra.mxu0 0.0
    %3924 = vmatprep.subr.mxu0 0.0
    %3925 = vmatpush1.xpose.msra.mxu0 0.0
    %3926 = vmatprep.subr.mxu0 0.0
    %3927 = vmatpush1.xpose.msra.mxu0 0.0
    %3928 = vmatprep.subr.mxu0 0.0
    %3929 = vmatpush1.xpose.msra.mxu0 0.0
    %3930 = vmatprep.subr.mxu0 0.0
    %3931 = vmatpush1.xpose.msra.mxu0 0.0
    %3932 = vmatprep.subr.mxu0 0.0
    %3933 = vmatpush1.xpose.msra.mxu0 0.0
    %3934 = vmatprep.subr.mxu0 0.0
    %3935 = vmatpush1.xpose.msra.mxu0 0.0
    %3936 = vmatprep.subr.mxu0 0.0
    %3937 = vmatpush1.xpose.msra.mxu0 0.0
    %3938 = vmatprep.mubr.f32.mxu0 0.0
    %3939 = vmatmul.mubr.f32.gmra.mrb[0].mxu0 %v3869
    %v3940 = vpop.f32.mrb[0].mxu0
    %v3941 = vadd.f32 %v3866, %v3940
    %v3942 = vpop.f32.mrb[0].mxu0
    %3943 = vdwg.mxu0
    %vm3944 = vcmask 57344
    %3945 = vst.msk [vmem:[#allocation2] sm:$0x1] %vm3944, %v3941
    // Predicated region
    $region30: #{transformer_model.1} parent=1 // pred_check
      _
    $region31: #{transformer_model.1} parent=1 // pred_check_branch
      %3947 = sbr.rel (0) target = $region33
    $region32: #{transformer_model.1} parent=1 // pred_region
      %s3949 = ssub.s32 16, 16
      %3950 = vsyncadd [#allocation3], %s3949
      %s3952 = sshll.u32 [#allocation2], 4
      %s3953 = int_to_ptr.vmem [resolvable:$true] %s3952
      %3955 = dma.vmem_to_hbm [thread:$0]  %s3953, 16, %s7, [#allocation3]
    $region33: #{transformer_model.1} parent=1 // pred_fallthru
      _
    // Predicated region
    $region34: #{transformer_model.1} parent=1 // pred_check
      _
    $region35: #{transformer_model.1} parent=1 // pred_check_branch
      %3957 = sbr.rel (0) target = $region37
    $region36: #{transformer_model.1} parent=1 // pred_region
      %3958 = dma.done [#allocation3], 16
    $region37: #{transformer_model.1} parent=1 // pred_fallthru
      _
    %3959 = vsyncpa [#allocation3], 1

</llo_original>
